<compile_context>
chip_gen: v7x
topology: tpu7x:2x2x1
jax: 0.10.0
libtpu: 0.0.40
codegen_flags: <defaults>
</compile_context>

<pallas_src>
import functools

import jax
import jax.numpy as jnp
from jax import lax
from jax.experimental import pallas as pl
from jax.experimental.pallas import tpu as pltpu

LN_EPS = 1e-5
LANE = 128


def _round_up(x, m):
    return (x + m - 1) // m * m


def _layer_norm(x, gamma, beta):
    # x: [B, D] f32, gamma/beta: [1, D]
    mean = jnp.mean(x, axis=-1, keepdims=True)
    centered = x - mean
    var = jnp.mean(centered * centered, axis=-1, keepdims=True)
    return centered * lax.rsqrt(var + LN_EPS) * gamma + beta


def _l2_normalize(x):
    # rsqrt goes to the EUP slot; multiply replaces the per-element divide.
    # (No epsilon, matching torch x / x.norm(dim=1, keepdim=True).)
    return x * lax.rsqrt(jnp.sum(x * x, axis=-1, keepdims=True))


def _mm(a, w, dot_dtype):
    # MXU matmul; operands optionally bf16, accumulation always f32.
    return jnp.dot(a.astype(dot_dtype), w.astype(dot_dtype),
                   preferred_element_type=jnp.float32)


# ----------------------------------------------------------------------------
# One fused kernel:
#   img_feat = LayerNorm(l2norm(img_emb));  img_logits = img_feat @ Wi + bi   (lane-padded)
#   txt_feat = LayerNorm(l2norm(txt_emb));  txt_logits = txt_feat @ Wt + bt   (lane-padded)
#   cat = [img_feat, txt_feat]
#   h1  = ReLU(LayerNorm(cat @ W1 + b1))      (Dropout(0.3) identity in eval)
#   h2  = ReLU(LayerNorm(h1 @ W2 + b2))       (Dropout(0.2) identity in eval)
#   fused_features = h2;  fused_logits = h2 @ Wc + bc                         (lane-padded)
# ----------------------------------------------------------------------------
def fused_clip_head_kernel(
    xi_ref, xt_ref,
    gi_ref, bi_ref, wi_ref, bwi_ref,
    gt_ref, bt_ref, wt_ref, bwt_ref,
    w1_ref, b1_ref, g1_ref, be1_ref,
    w2_ref, b2_ref, g2_ref, be2_ref,
    wc_ref, bc_ref,
    img_feat_ref, txt_feat_ref, fused_feat_ref,
    img_logit_ref, txt_logit_ref, fused_logit_ref,
    *, dot_dtype,
):
    xi = xi_ref[...].astype(jnp.float32)
    xt = xt_ref[...].astype(jnp.float32)

    fi = _layer_norm(_l2_normalize(xi), gi_ref[...], bi_ref[...])
    ft = _layer_norm(_l2_normalize(xt), gt_ref[...], bt_ref[...])
    img_feat_ref[...] = fi
    txt_feat_ref[...] = ft

    # Dropout(0.2) identity in eval; classifier weights are zero-padded to 128 lanes
    # so these stores are full-width (no vst.msk).
    img_logit_ref[...] = _mm(fi, wi_ref[...], dot_dtype) + bwi_ref[...]
    txt_logit_ref[...] = _mm(ft, wt_ref[...], dot_dtype) + bwt_ref[...]

    # Fusion MLP: concat along lanes -> single K=2E MXU pass.
    cat = jnp.concatenate([fi, ft], axis=-1)
    h1 = _mm(cat, w1_ref[...], dot_dtype) + b1_ref[...]
    h1 = jnp.maximum(_layer_norm(h1, g1_ref[...], be1_ref[...]), 0.0)

    h2 = _mm(h1, w2_ref[...], dot_dtype) + b2_ref[...]
    h2 = jnp.maximum(_layer_norm(h2, g2_ref[...], be2_ref[...]), 0.0)

    fused_feat_ref[...] = h2
    fused_logit_ref[...] = _mm(h2, wc_ref[...], dot_dtype) + bc_ref[...]


def _pad_cols(x, target):
    pad = target - x.shape[1]
    return jnp.pad(x, ((0, 0), (0, pad))) if pad > 0 else x


@functools.partial(jax.jit, static_argnames=("use_bf16_matmul",))
def clip_finetuner_forward(image_embeddings, text_embeddings, params,
                           use_bf16_matmul=False):
    """Reproduces CLIPFineTuner.forward given precomputed (frozen) CLIP embeddings."""
    B, E = image_embeddings.shape
    C = params["img_cls_w"].shape[1]
    H1 = params["fusion_w1"].shape[1]
    H2 = params["fusion_w2"].shape[1]
    CP = _round_up(C, LANE)                     # lane-dense logits width

    mat_dtype = jnp.bfloat16 if use_bf16_matmul else jnp.float32

    # Zero-pad classifier weights/biases to lane-dense output width; cast matmul
    # weights to bf16 (halves weight DMA bytes) when requested.
    wi = _pad_cols(params["img_cls_w"], CP).astype(mat_dtype)
    bwi = _pad_cols(params["img_cls_b"], CP)
    wt = _pad_cols(params["txt_cls_w"], CP).astype(mat_dtype)
    bwt = _pad_cols(params["txt_cls_b"], CP)
    w1 = params["fusion_w1"].astype(mat_dtype)
    w2 = params["fusion_w2"].astype(mat_dtype)
    wc = _pad_cols(params["cls_w"], CP).astype(mat_dtype)
    bc = _pad_cols(params["cls_b"], CP)

    # Batch tiling: small batches -> single tile (rounded to sublane multiple);
    # large batches -> 128-row tiles, pipelined + megacore-parallel on v7x.
    B_TILE = LANE if B >= LANE else _round_up(B, 8)
    B_pad = _round_up(B, B_TILE)
    if B_pad != B:
        # pad with ones (avoids NaN from zero-norm rows); padded rows are sliced off.
        xi = jnp.pad(image_embeddings, ((0, B_pad - B), (0, 0)), constant_values=1.0)
        xt = jnp.pad(text_embeddings, ((0, B_pad - B), (0, 0)), constant_values=1.0)
    else:
        xi, xt = image_embeddings, text_embeddings
    num_tiles = B_pad // B_TILE

    def batch_spec(d):
        return pl.BlockSpec((B_TILE, d), lambda i: (i, 0))

    def resident_spec(shape):
        # constant index_map -> block stays VMEM-resident across grid iterations
        return pl.BlockSpec(shape, lambda i: (0, 0))

    in_specs = [
        batch_spec(E), batch_spec(E),
        resident_spec((1, E)), resident_spec((1, E)),
        resident_spec((E, CP)), resident_spec((1, CP)),
        resident_spec((1, E)), resident_spec((1, E)),
        resident_spec((E, CP)), resident_spec((1, CP)),
        resident_spec((2 * E, H1)), resident_spec((1, H1)),
        resident_spec((1, H1)), resident_spec((1, H1)),
        resident_spec((H1, H2)), resident_spec((1, H2)),
        resident_spec((1, H2)), resident_spec((1, H2)),
        resident_spec((H2, CP)), resident_spec((1, CP)),
    ]
    out_specs = [
        batch_spec(E), batch_spec(E), batch_spec(H2),
        batch_spec(CP), batch_spec(CP), batch_spec(CP),
    ]
    out_shape = [
        jax.ShapeDtypeStruct((B_pad, E), jnp.float32),
        jax.ShapeDtypeStruct((B_pad, E), jnp.float32),
        jax.ShapeDtypeStruct((B_pad, H2), jnp.float32),
        jax.ShapeDtypeStruct((B_pad, CP), jnp.float32),
        jax.ShapeDtypeStruct((B_pad, CP), jnp.float32),
        jax.ShapeDtypeStruct((B_pad, CP), jnp.float32),
    ]

    (img_feat, txt_feat, fused_feat,
     img_logit, txt_logit, fused_logit) = pl.pallas_call(
        functools.partial(fused_clip_head_kernel, dot_dtype=mat_dtype),
        grid=(num_tiles,),
        in_specs=in_specs,
        out_specs=out_specs,
        out_shape=out_shape,
        compiler_params=pltpu.CompilerParams(
            dimension_semantics=("parallel",)),
    )(
        xi, xt,
        params["img_ln_g"], params["img_ln_b"], wi, bwi,
        params["txt_ln_g"], params["txt_ln_b"], wt, bwt,
        w1, params["fusion_b1"], params["fusion_ln1_g"], params["fusion_ln1_b"],
        w2, params["fusion_b2"], params["fusion_ln2_g"], params["fusion_ln2_b"],
        wc, bc,
    )

    return {
        "image_features": img_feat[:B],
        "image_logits": img_logit[:B, :C],
        "text_features": txt_feat[:B],
        "text_logits": txt_logit[:B, :C],
        "fused_features": fused_feat[:B],
        "fused_logits": fused_logit[:B, :C],
    }


def init_params(key, embedding_dim=128, num_classes=2, h1=1024, h2=512):
    ks = jax.random.split(key, 8)

    def lin(k, fan_in, fan_out):
        scale = 1.0 / jnp.sqrt(fan_in)
        kw, kb = jax.random.split(k)
        w = jax.random.uniform(kw, (fan_in, fan_out), jnp.float32, -scale, scale)
        b = jax.random.uniform(kb, (1, fan_out), jnp.float32, -scale, scale)
        return w, b

    p = {}
    # image_norm / text_norm (LayerNorm init: gamma=1, beta=0)
    p["img_ln_g"] = jnp.ones((1, embedding_dim), jnp.float32)
    p["img_ln_b"] = jnp.zeros((1, embedding_dim), jnp.float32)
    p["txt_ln_g"] = jnp.ones((1, embedding_dim), jnp.float32)
    p["txt_ln_b"] = jnp.zeros((1, embedding_dim), jnp.float32)
    # per-modality classifiers
    p["img_cls_w"], p["img_cls_b"] = lin(ks[0], embedding_dim, num_classes)
    p["txt_cls_w"], p["txt_cls_b"] = lin(ks[1], embedding_dim, num_classes)
    # fusion MLP
    p["fusion_w1"], p["fusion_b1"] = lin(ks[2], 2 * embedding_dim, h1)
    p["fusion_ln1_g"] = jnp.ones((1, h1), jnp.float32)
    p["fusion_ln1_b"] = jnp.zeros((1, h1), jnp.float32)
    p["fusion_w2"], p["fusion_b2"] = lin(ks[3], h1, h2)
    p["fusion_ln2_g"] = jnp.ones((1, h2), jnp.float32)
    p["fusion_ln2_b"] = jnp.zeros((1, h2), jnp.float32)
    # final classifier
    p["cls_w"], p["cls_b"] = lin(ks[4], h2, num_classes)
    return p


def _reference(image_embeddings, text_embeddings, p):
    # pure-JAX reference for correctness check
    def ln(x, g, b):
        m = jnp.mean(x, -1, keepdims=True)
        v = jnp.mean((x - m) ** 2, -1, keepdims=True)
        return (x - m) / jnp.sqrt(v + LN_EPS) * g + b

    def head(x, g, b, w, wb):
        x = x / jnp.linalg.norm(x, axis=1, keepdims=True)
        f = ln(x, g, b)
        return f, f @ w + wb

    fi, li = head(image_embeddings, p["img_ln_g"], p["img_ln_b"], p["img_cls_w"], p["img_cls_b"])
    ft, lt = head(text_embeddings, p["txt_ln_g"], p["txt_ln_b"], p["txt_cls_w"], p["txt_cls_b"])
    cat = jnp.concatenate([fi, ft], axis=1)
    h1 = jnp.maximum(ln(cat @ p["fusion_w1"] + p["fusion_b1"], p["fusion_ln1_g"], p["fusion_ln1_b"]), 0.0)
    h2 = jnp.maximum(ln(h1 @ p["fusion_w2"] + p["fusion_b2"], p["fusion_ln2_g"], p["fusion_ln2_b"]), 0.0)
    return {
        "image_features": fi, "image_logits": li,
        "text_features": ft, "text_logits": lt,
        "fused_features": h2, "fused_logits": h2 @ p["cls_w"] + p["cls_b"],
    }


if __name__ == "__main__":
    B, E, C = 8, 128, 2
    key = jax.random.PRNGKey(0)
    k_img, k_txt, k_param = jax.random.split(key, 3)

    # synthetic stand-ins for frozen CLIP encode_image / encode_text outputs
    image_embeddings = jax.random.normal(k_img, (B, E), jnp.float32)
    text_embeddings = jax.random.normal(k_txt, (B, E), jnp.float32)
    params = init_params(k_param, embedding_dim=E, num_classes=C)

    # 1) f32 matmul path (exact) at small batch, single tile
    out = clip_finetuner_forward(image_embeddings, text_embeddings, params)
    out = jax.tree_util.tree_map(jax.block_until_ready, out)
    ref = _reference(image_embeddings, text_embeddings, params)
    for name in ref:
        assert out[name].shape == ref[name].shape, name
        err = float(jnp.max(jnp.abs(out[name] - ref[name])))
        assert err < 1e-4, (name, err)

    # 2) gridded path (batch > tile, with padding), still f32-exact
    B2 = 160
    k2i, k2t = jax.random.split(jax.random.PRNGKey(1))
    xi2 = jax.random.normal(k2i, (B2, E), jnp.float32)
    xt2 = jax.random.normal(k2t, (B2, E), jnp.float32)
    out2 = clip_finetuner_forward(xi2, xt2, params)
    out2 = jax.tree_util.tree_map(jax.block_until_ready, out2)
    ref2 = _reference(xi2, xt2, params)
    for name in ref2:
        assert out2[name].shape == ref2[name].shape, name
        err = float(jnp.max(jnp.abs(out2[name] - ref2[name])))
        assert err < 1e-4, (name, err)

    # 3) bf16 MXU operands (v6e/v7x fast path), f32 accumulation -> looser tolerance
    out_bf = clip_finetuner_forward(image_embeddings, text_embeddings, params,
                                    use_bf16_matmul=True)
    out_bf = jax.tree_util.tree_map(jax.block_until_ready, out_bf)
    for name in ref:
        assert out_bf[name].shape == ref[name].shape, name
        err = float(jnp.max(jnp.abs(out_bf[name] - ref[name])))
        assert err < 0.25, (name, err)

    print("KERNEL_OK")
</pallas_src>

<mosaic_0001>
module attributes {stable_mosaic.version = 11 : i64} {
  func.func @fused_clip_head_kernel(%arg0: i32, %arg1: memref<8x128xf32, #tpu.memory_space<vmem>>, %arg2: memref<8x128xf32, #tpu.memory_space<vmem>>, %arg3: memref<1x128xf32, #tpu.memory_space<vmem>>, %arg4: memref<1x128xf32, #tpu.memory_space<vmem>>, %arg5: memref<128x128xf32, #tpu.memory_space<vmem>>, %arg6: memref<1x128xf32, #tpu.memory_space<vmem>>, %arg7: memref<1x128xf32, #tpu.memory_space<vmem>>, %arg8: memref<1x128xf32, #tpu.memory_space<vmem>>, %arg9: memref<128x128xf32, #tpu.memory_space<vmem>>, %arg10: memref<1x128xf32, #tpu.memory_space<vmem>>, %arg11: memref<256x1024xf32, #tpu.memory_space<vmem>>, %arg12: memref<1x1024xf32, #tpu.memory_space<vmem>>, %arg13: memref<1x1024xf32, #tpu.memory_space<vmem>>, %arg14: memref<1x1024xf32, #tpu.memory_space<vmem>>, %arg15: memref<1024x512xf32, #tpu.memory_space<vmem>>, %arg16: memref<1x512xf32, #tpu.memory_space<vmem>>, %arg17: memref<1x512xf32, #tpu.memory_space<vmem>>, %arg18: memref<1x512xf32, #tpu.memory_space<vmem>>, %arg19: memref<512x128xf32, #tpu.memory_space<vmem>>, %arg20: memref<1x128xf32, #tpu.memory_space<vmem>>, %arg21: memref<8x128xf32, #tpu.memory_space<vmem>>, %arg22: memref<8x128xf32, #tpu.memory_space<vmem>>, %arg23: memref<8x512xf32, #tpu.memory_space<vmem>>, %arg24: memref<8x128xf32, #tpu.memory_space<vmem>>, %arg25: memref<8x128xf32, #tpu.memory_space<vmem>>, %arg26: memref<8x128xf32, #tpu.memory_space<vmem>>) attributes {dimension_semantics = [#tpu.dimension_semantics<parallel>], iteration_bounds = array<i64: 1>, scalar_prefetch = 0 : i64, scratch_operands = 0 : i64, tpu.core_type = #tpu.core_type<tc>, window_params = [{transform_indices = @transform_0, window_bounds = array<i64: 8, 128>}, {transform_indices = @transform_1, window_bounds = array<i64: 8, 128>}, {pipeline_mode = #tpu.pipeline_mode<synchronous>, transform_indices = @transform_2, window_bounds = array<i64: 1, 128>}, {pipeline_mode = #tpu.pipeline_mode<synchronous>, transform_indices = @transform_3, window_bounds = array<i64: 1, 128>}, {pipeline_mode = #tpu.pipeline_mode<synchronous>, transform_indices = @transform_4, window_bounds = array<i64: 128, 128>}, {pipeline_mode = #tpu.pipeline_mode<synchronous>, transform_indices = @transform_5, window_bounds = array<i64: 1, 128>}, {pipeline_mode = #tpu.pipeline_mode<synchronous>, transform_indices = @transform_6, window_bounds = array<i64: 1, 128>}, {pipeline_mode = #tpu.pipeline_mode<synchronous>, transform_indices = @transform_7, window_bounds = array<i64: 1, 128>}, {pipeline_mode = #tpu.pipeline_mode<synchronous>, transform_indices = @transform_8, window_bounds = array<i64: 128, 128>}, {pipeline_mode = #tpu.pipeline_mode<synchronous>, transform_indices = @transform_9, window_bounds = array<i64: 1, 128>}, {pipeline_mode = #tpu.pipeline_mode<synchronous>, transform_indices = @transform_10, window_bounds = array<i64: 256, 1024>}, {pipeline_mode = #tpu.pipeline_mode<synchronous>, transform_indices = @transform_11, window_bounds = array<i64: 1, 1024>}, {pipeline_mode = #tpu.pipeline_mode<synchronous>, transform_indices = @transform_12, window_bounds = array<i64: 1, 1024>}, {pipeline_mode = #tpu.pipeline_mode<synchronous>, transform_indices = @transform_13, window_bounds = array<i64: 1, 1024>}, {pipeline_mode = #tpu.pipeline_mode<synchronous>, transform_indices = @transform_14, window_bounds = array<i64: 1024, 512>}, {pipeline_mode = #tpu.pipeline_mode<synchronous>, transform_indices = @transform_15, window_bounds = array<i64: 1, 512>}, {pipeline_mode = #tpu.pipeline_mode<synchronous>, transform_indices = @transform_16, window_bounds = array<i64: 1, 512>}, {pipeline_mode = #tpu.pipeline_mode<synchronous>, transform_indices = @transform_17, window_bounds = array<i64: 1, 512>}, {pipeline_mode = #tpu.pipeline_mode<synchronous>, transform_indices = @transform_18, window_bounds = array<i64: 512, 128>}, {pipeline_mode = #tpu.pipeline_mode<synchronous>, transform_indices = @transform_19, window_bounds = array<i64: 1, 128>}, {transform_indices = @transform_20, window_bounds = array<i64: 8, 128>}, {transform_indices = @transform_21, window_bounds = array<i64: 8, 128>}, {transform_indices = @transform_22, window_bounds = array<i64: 8, 512>}, {transform_indices = @transform_23, window_bounds = array<i64: 8, 128>}, {transform_indices = @transform_24, window_bounds = array<i64: 8, 128>}, {transform_indices = @transform_25, window_bounds = array<i64: 8, 128>}]} {
    %c0 = arith.constant 0 : index
    %c0_0 = arith.constant 0 : index
    %0 = vector.load %arg1[%c0, %c0_0] : memref<8x128xf32, #tpu.memory_space<vmem>>, vector<8x128xf32>
    %c0_1 = arith.constant 0 : index
    %c0_2 = arith.constant 0 : index
    %1 = vector.load %arg2[%c0_1, %c0_2] : memref<8x128xf32, #tpu.memory_space<vmem>>, vector<8x128xf32>
    %2 = arith.mulf %0, %0 : vector<8x128xf32>
    %cst = arith.constant dense<0.000000e+00> : vector<8xf32>
    %3 = vector.multi_reduction <add>, %2, %cst [1] : vector<8x128xf32> to vector<8xf32>
    %4 = vector.shape_cast %3 : vector<8xf32> to vector<8x1xf32>
    %5 = math.rsqrt %4 : vector<8x1xf32>
    %6 = vector.broadcast %5 : vector<8x1xf32> to vector<8x128xf32>
    %7 = arith.mulf %0, %6 : vector<8x128xf32>
    %c0_3 = arith.constant 0 : index
    %c0_4 = arith.constant 0 : index
    %8 = vector.load %arg3[%c0_3, %c0_4] : memref<1x128xf32, #tpu.memory_space<vmem>>, vector<1x128xf32>
    %c0_5 = arith.constant 0 : index
    %c0_6 = arith.constant 0 : index
    %9 = vector.load %arg4[%c0_5, %c0_6] : memref<1x128xf32, #tpu.memory_space<vmem>>, vector<1x128xf32>
    %cst_7 = arith.constant dense<0.000000e+00> : vector<8xf32>
    %10 = vector.multi_reduction <add>, %7, %cst_7 [1] : vector<8x128xf32> to vector<8xf32>
    %11 = vector.shape_cast %10 : vector<8xf32> to vector<8x1xf32>
    %cst_8 = arith.constant 1.280000e+02 : f32
    %12 = vector.broadcast %cst_8 : f32 to vector<8x1xf32>
    %13 = arith.divf %11, %12 : vector<8x1xf32>
    %14 = vector.broadcast %13 : vector<8x1xf32> to vector<8x128xf32>
    %15 = arith.subf %7, %14 : vector<8x128xf32>
    %16 = arith.mulf %15, %15 : vector<8x128xf32>
    %cst_9 = arith.constant dense<0.000000e+00> : vector<8xf32>
    %17 = vector.multi_reduction <add>, %16, %cst_9 [1] : vector<8x128xf32> to vector<8xf32>
    %18 = vector.shape_cast %17 : vector<8xf32> to vector<8x1xf32>
    %cst_10 = arith.constant 1.280000e+02 : f32
    %19 = vector.broadcast %cst_10 : f32 to vector<8x1xf32>
    %20 = arith.divf %18, %19 : vector<8x1xf32>
    %cst_11 = arith.constant 9.99999974E-6 : f32
    %21 = vector.broadcast %cst_11 : f32 to vector<8x1xf32>
    %22 = arith.addf %20, %21 : vector<8x1xf32>
    %23 = math.rsqrt %22 : vector<8x1xf32>
    %24 = vector.broadcast %23 : vector<8x1xf32> to vector<8x128xf32>
    %25 = arith.mulf %15, %24 : vector<8x128xf32>
    %26 = vector.broadcast %8 : vector<1x128xf32> to vector<8x128xf32>
    %27 = arith.mulf %25, %26 : vector<8x128xf32>
    %28 = vector.broadcast %9 : vector<1x128xf32> to vector<8x128xf32>
    %29 = arith.addf %27, %28 : vector<8x128xf32>
    %30 = arith.mulf %1, %1 : vector<8x128xf32>
    %cst_12 = arith.constant dense<0.000000e+00> : vector<8xf32>
    %31 = vector.multi_reduction <add>, %30, %cst_12 [1] : vector<8x128xf32> to vector<8xf32>
    %32 = vector.shape_cast %31 : vector<8xf32> to vector<8x1xf32>
    %33 = math.rsqrt %32 : vector<8x1xf32>
    %34 = vector.broadcast %33 : vector<8x1xf32> to vector<8x128xf32>
    %35 = arith.mulf %1, %34 : vector<8x128xf32>
    %c0_13 = arith.constant 0 : index
    %c0_14 = arith.constant 0 : index
    %36 = vector.load %arg7[%c0_13, %c0_14] : memref<1x128xf32, #tpu.memory_space<vmem>>, vector<1x128xf32>
    %c0_15 = arith.constant 0 : index
    %c0_16 = arith.constant 0 : index
    %37 = vector.load %arg8[%c0_15, %c0_16] : memref<1x128xf32, #tpu.memory_space<vmem>>, vector<1x128xf32>
    %cst_17 = arith.constant dense<0.000000e+00> : vector<8xf32>
    %38 = vector.multi_reduction <add>, %35, %cst_17 [1] : vector<8x128xf32> to vector<8xf32>
    %39 = vector.shape_cast %38 : vector<8xf32> to vector<8x1xf32>
    %cst_18 = arith.constant 1.280000e+02 : f32
    %40 = vector.broadcast %cst_18 : f32 to vector<8x1xf32>
    %41 = arith.divf %39, %40 : vector<8x1xf32>
    %42 = vector.broadcast %41 : vector<8x1xf32> to vector<8x128xf32>
    %43 = arith.subf %35, %42 : vector<8x128xf32>
    %44 = arith.mulf %43, %43 : vector<8x128xf32>
    %cst_19 = arith.constant dense<0.000000e+00> : vector<8xf32>
    %45 = vector.multi_reduction <add>, %44, %cst_19 [1] : vector<8x128xf32> to vector<8xf32>
    %46 = vector.shape_cast %45 : vector<8xf32> to vector<8x1xf32>
    %cst_20 = arith.constant 1.280000e+02 : f32
    %47 = vector.broadcast %cst_20 : f32 to vector<8x1xf32>
    %48 = arith.divf %46, %47 : vector<8x1xf32>
    %cst_21 = arith.constant 9.99999974E-6 : f32
    %49 = vector.broadcast %cst_21 : f32 to vector<8x1xf32>
    %50 = arith.addf %48, %49 : vector<8x1xf32>
    %51 = math.rsqrt %50 : vector<8x1xf32>
    %52 = vector.broadcast %51 : vector<8x1xf32> to vector<8x128xf32>
    %53 = arith.mulf %43, %52 : vector<8x128xf32>
    %54 = vector.broadcast %36 : vector<1x128xf32> to vector<8x128xf32>
    %55 = arith.mulf %53, %54 : vector<8x128xf32>
    %56 = vector.broadcast %37 : vector<1x128xf32> to vector<8x128xf32>
    %57 = arith.addf %55, %56 : vector<8x128xf32>
    %c0_22 = arith.constant 0 : index
    %c0_23 = arith.constant 0 : index
    %58 = vector.load %arg21[%c0_22, %c0_23] : memref<8x128xf32, #tpu.memory_space<vmem>>, vector<8x128xf32>
    tpu.vector_store %arg21[%c0_22, %c0_23], %29 {strides = array<i32>} : memref<8x128xf32, #tpu.memory_space<vmem>>, vector<8x128xf32>,
    %c0_24 = arith.constant 0 : index
    %c0_25 = arith.constant 0 : index
    %59 = vector.load %arg22[%c0_24, %c0_25] : memref<8x128xf32, #tpu.memory_space<vmem>>, vector<8x128xf32>
    tpu.vector_store %arg22[%c0_24, %c0_25], %57 {strides = array<i32>} : memref<8x128xf32, #tpu.memory_space<vmem>>, vector<8x128xf32>,
    %c0_26 = arith.constant 0 : index
    %c0_27 = arith.constant 0 : index
    %60 = vector.load %arg5[%c0_26, %c0_27] : memref<128x128xf32, #tpu.memory_space<vmem>>, vector<128x128xf32>
    %cst_28 = arith.constant dense<0.000000e+00> : vector<8x128xf32>
    %61 = tpu.matmul %29, %60, %cst_28 {dimension_numbers = #tpu.dot_dimension_numbers<[1], [0], [0], [1], [0, 0, 1, 1], [], []>} : vector<8x128xf32>, vector<128x128xf32>, vector<8x128xf32> -> vector<8x128xf32>
    %c0_29 = arith.constant 0 : index
    %c0_30 = arith.constant 0 : index
    %62 = vector.load %arg6[%c0_29, %c0_30] : memref<1x128xf32, #tpu.memory_space<vmem>>, vector<1x128xf32>
    %63 = vector.broadcast %62 : vector<1x128xf32> to vector<8x128xf32>
    %64 = arith.addf %61, %63 : vector<8x128xf32>
    %c0_31 = arith.constant 0 : index
    %c0_32 = arith.constant 0 : index
    %65 = vector.load %arg24[%c0_31, %c0_32] : memref<8x128xf32, #tpu.memory_space<vmem>>, vector<8x128xf32>
    tpu.vector_store %arg24[%c0_31, %c0_32], %64 {strides = array<i32>} : memref<8x128xf32, #tpu.memory_space<vmem>>, vector<8x128xf32>,
    %c0_33 = arith.constant 0 : index
    %c0_34 = arith.constant 0 : index
    %66 = vector.load %arg9[%c0_33, %c0_34] : memref<128x128xf32, #tpu.memory_space<vmem>>, vector<128x128xf32>
    %cst_35 = arith.constant dense<0.000000e+00> : vector<8x128xf32>
    %67 = tpu.matmul %57, %66, %cst_35 {dimension_numbers = #tpu.dot_dimension_numbers<[1], [0], [0], [1], [0, 0, 1, 1], [], []>} : vector<8x128xf32>, vector<128x128xf32>, vector<8x128xf32> -> vector<8x128xf32>
    %c0_36 = arith.constant 0 : index
    %c0_37 = arith.constant 0 : index
    %68 = vector.load %arg10[%c0_36, %c0_37] : memref<1x128xf32, #tpu.memory_space<vmem>>, vector<1x128xf32>
    %69 = vector.broadcast %68 : vector<1x128xf32> to vector<8x128xf32>
    %70 = arith.addf %67, %69 : vector<8x128xf32>
    %c0_38 = arith.constant 0 : index
    %c0_39 = arith.constant 0 : index
    %71 = vector.load %arg25[%c0_38, %c0_39] : memref<8x128xf32, #tpu.memory_space<vmem>>, vector<8x128xf32>
    tpu.vector_store %arg25[%c0_38, %c0_39], %70 {strides = array<i32>} : memref<8x128xf32, #tpu.memory_space<vmem>>, vector<8x128xf32>,
    %72 = tpu.concatenate %29, %57 in 1 : vector<8x128xf32>, vector<8x128xf32> -> vector<8x256xf32>
    %c0_40 = arith.constant 0 : index
    %c0_41 = arith.constant 0 : index
    %73 = vector.load %arg11[%c0_40, %c0_41] : memref<256x1024xf32, #tpu.memory_space<vmem>>, vector<256x1024xf32>
    %cst_42 = arith.constant dense<0.000000e+00> : vector<8x1024xf32>
    %74 = tpu.matmul %72, %73, %cst_42 {dimension_numbers = #tpu.dot_dimension_numbers<[1], [0], [0], [1], [0, 0, 1, 1], [], []>} : vector<8x256xf32>, vector<256x1024xf32>, vector<8x1024xf32> -> vector<8x1024xf32>
    %c0_43 = arith.constant 0 : index
    %c0_44 = arith.constant 0 : index
    %75 = vector.load %arg12[%c0_43, %c0_44] : memref<1x1024xf32, #tpu.memory_space<vmem>>, vector<1x1024xf32>
    %76 = vector.broadcast %75 : vector<1x1024xf32> to vector<8x1024xf32>
    %77 = arith.addf %74, %76 : vector<8x1024xf32>
    %c0_45 = arith.constant 0 : index
    %c0_46 = arith.constant 0 : index
    %78 = vector.load %arg13[%c0_45, %c0_46] : memref<1x1024xf32, #tpu.memory_space<vmem>>, vector<1x1024xf32>
    %c0_47 = arith.constant 0 : index
    %c0_48 = arith.constant 0 : index
    %79 = vector.load %arg14[%c0_47, %c0_48] : memref<1x1024xf32, #tpu.memory_space<vmem>>, vector<1x1024xf32>
    %cst_49 = arith.constant dense<0.000000e+00> : vector<8xf32>
    %80 = vector.multi_reduction <add>, %77, %cst_49 [1] : vector<8x1024xf32> to vector<8xf32>
    %81 = vector.shape_cast %80 : vector<8xf32> to vector<8x1xf32>
    %cst_50 = arith.constant 1.024000e+03 : f32
    %82 = vector.broadcast %cst_50 : f32 to vector<8x1xf32>
    %83 = arith.divf %81, %82 : vector<8x1xf32>
    %84 = vector.broadcast %83 : vector<8x1xf32> to vector<8x1024xf32>
    %85 = arith.subf %77, %84 : vector<8x1024xf32>
    %86 = arith.mulf %85, %85 : vector<8x1024xf32>
    %cst_51 = arith.constant dense<0.000000e+00> : vector<8xf32>
    %87 = vector.multi_reduction <add>, %86, %cst_51 [1] : vector<8x1024xf32> to vector<8xf32>
    %88 = vector.shape_cast %87 : vector<8xf32> to vector<8x1xf32>
    %cst_52 = arith.constant 1.024000e+03 : f32
    %89 = vector.broadcast %cst_52 : f32 to vector<8x1xf32>
    %90 = arith.divf %88, %89 : vector<8x1xf32>
    %cst_53 = arith.constant 9.99999974E-6 : f32
    %91 = vector.broadcast %cst_53 : f32 to vector<8x1xf32>
    %92 = arith.addf %90, %91 : vector<8x1xf32>
    %93 = math.rsqrt %92 : vector<8x1xf32>
    %94 = vector.broadcast %93 : vector<8x1xf32> to vector<8x1024xf32>
    %95 = arith.mulf %85, %94 : vector<8x1024xf32>
    %96 = vector.broadcast %78 : vector<1x1024xf32> to vector<8x1024xf32>
    %97 = arith.mulf %95, %96 : vector<8x1024xf32>
    %98 = vector.broadcast %79 : vector<1x1024xf32> to vector<8x1024xf32>
    %99 = arith.addf %97, %98 : vector<8x1024xf32>
    %cst_54 = arith.constant 0.000000e+00 : f32
    %100 = vector.broadcast %cst_54 : f32 to vector<8x1024xf32>
    %101 = arith.maximumf %99, %100 : vector<8x1024xf32>
    %c0_55 = arith.constant 0 : index
    %c0_56 = arith.constant 0 : index
    %102 = vector.load %arg15[%c0_55, %c0_56] : memref<1024x512xf32, #tpu.memory_space<vmem>>, vector<1024x512xf32>
    %cst_57 = arith.constant dense<0.000000e+00> : vector<8x512xf32>
    %103 = tpu.matmul %101, %102, %cst_57 {dimension_numbers = #tpu.dot_dimension_numbers<[1], [0], [0], [1], [0, 0, 1, 1], [], []>} : vector<8x1024xf32>, vector<1024x512xf32>, vector<8x512xf32> -> vector<8x512xf32>
    %c0_58 = arith.constant 0 : index
    %c0_59 = arith.constant 0 : index
    %104 = vector.load %arg16[%c0_58, %c0_59] : memref<1x512xf32, #tpu.memory_space<vmem>>, vector<1x512xf32>
    %105 = vector.broadcast %104 : vector<1x512xf32> to vector<8x512xf32>
    %106 = arith.addf %103, %105 : vector<8x512xf32>
    %c0_60 = arith.constant 0 : index
    %c0_61 = arith.constant 0 : index
    %107 = vector.load %arg17[%c0_60, %c0_61] : memref<1x512xf32, #tpu.memory_space<vmem>>, vector<1x512xf32>
    %c0_62 = arith.constant 0 : index
    %c0_63 = arith.constant 0 : index
    %108 = vector.load %arg18[%c0_62, %c0_63] : memref<1x512xf32, #tpu.memory_space<vmem>>, vector<1x512xf32>
    %cst_64 = arith.constant dense<0.000000e+00> : vector<8xf32>
    %109 = vector.multi_reduction <add>, %106, %cst_64 [1] : vector<8x512xf32> to vector<8xf32>
    %110 = vector.shape_cast %109 : vector<8xf32> to vector<8x1xf32>
    %cst_65 = arith.constant 5.120000e+02 : f32
    %111 = vector.broadcast %cst_65 : f32 to vector<8x1xf32>
    %112 = arith.divf %110, %111 : vector<8x1xf32>
    %113 = vector.broadcast %112 : vector<8x1xf32> to vector<8x512xf32>
    %114 = arith.subf %106, %113 : vector<8x512xf32>
    %115 = arith.mulf %114, %114 : vector<8x512xf32>
    %cst_66 = arith.constant dense<0.000000e+00> : vector<8xf32>
    %116 = vector.multi_reduction <add>, %115, %cst_66 [1] : vector<8x512xf32> to vector<8xf32>
    %117 = vector.shape_cast %116 : vector<8xf32> to vector<8x1xf32>
    %cst_67 = arith.constant 5.120000e+02 : f32
    %118 = vector.broadcast %cst_67 : f32 to vector<8x1xf32>
    %119 = arith.divf %117, %118 : vector<8x1xf32>
    %cst_68 = arith.constant 9.99999974E-6 : f32
    %120 = vector.broadcast %cst_68 : f32 to vector<8x1xf32>
    %121 = arith.addf %119, %120 : vector<8x1xf32>
    %122 = math.rsqrt %121 : vector<8x1xf32>
    %123 = vector.broadcast %122 : vector<8x1xf32> to vector<8x512xf32>
    %124 = arith.mulf %114, %123 : vector<8x512xf32>
    %125 = vector.broadcast %107 : vector<1x512xf32> to vector<8x512xf32>
    %126 = arith.mulf %124, %125 : vector<8x512xf32>
    %127 = vector.broadcast %108 : vector<1x512xf32> to vector<8x512xf32>
    %128 = arith.addf %126, %127 : vector<8x512xf32>
    %cst_69 = arith.constant 0.000000e+00 : f32
    %129 = vector.broadcast %cst_69 : f32 to vector<8x512xf32>
    %130 = arith.maximumf %128, %129 : vector<8x512xf32>
    %c0_70 = arith.constant 0 : index
    %c0_71 = arith.constant 0 : index
    %131 = vector.load %arg23[%c0_70, %c0_71] : memref<8x512xf32, #tpu.memory_space<vmem>>, vector<8x512xf32>
    tpu.vector_store %arg23[%c0_70, %c0_71], %130 {strides = array<i32>} : memref<8x512xf32, #tpu.memory_space<vmem>>, vector<8x512xf32>,
    %c0_72 = arith.constant 0 : index
    %c0_73 = arith.constant 0 : index
    %132 = vector.load %arg19[%c0_72, %c0_73] : memref<512x128xf32, #tpu.memory_space<vmem>>, vector<512x128xf32>
    %cst_74 = arith.constant dense<0.000000e+00> : vector<8x128xf32>
    %133 = tpu.matmul %130, %132, %cst_74 {dimension_numbers = #tpu.dot_dimension_numbers<[1], [0], [0], [1], [0, 0, 1, 1], [], []>} : vector<8x512xf32>, vector<512x128xf32>, vector<8x128xf32> -> vector<8x128xf32>
    %c0_75 = arith.constant 0 : index
    %c0_76 = arith.constant 0 : index
    %134 = vector.load %arg20[%c0_75, %c0_76] : memref<1x128xf32, #tpu.memory_space<vmem>>, vector<1x128xf32>
    %135 = vector.broadcast %134 : vector<1x128xf32> to vector<8x128xf32>
    %136 = arith.addf %133, %135 : vector<8x128xf32>
    %c0_77 = arith.constant 0 : index
    %c0_78 = arith.constant 0 : index
    %137 = vector.load %arg26[%c0_77, %c0_78] : memref<8x128xf32, #tpu.memory_space<vmem>>, vector<8x128xf32>
    tpu.vector_store %arg26[%c0_77, %c0_78], %136 {strides = array<i32>} : memref<8x128xf32, #tpu.memory_space<vmem>>, vector<8x128xf32>,
    return
  }
  func.func @transform_0(%arg0: i32) -> (i32, i32) {
    %c0_i32 = arith.constant 0 : i32
    %c0_i32_0 = arith.constant 0 : i32
    return %arg0, %c0_i32 : i32, i32
  }
  func.func @transform_1(%arg0: i32) -> (i32, i32) {
    %c0_i32 = arith.constant 0 : i32
    %c0_i32_0 = arith.constant 0 : i32
    return %arg0, %c0_i32 : i32, i32
  }
  func.func @transform_2(%arg0: i32) -> (i32, i32) {
    %c0_i32 = arith.constant 0 : i32
    %c0_i32_0 = arith.constant 0 : i32
    %c0_i32_1 = arith.constant 0 : i32
    return %c0_i32, %c0_i32_0 : i32, i32
  }
  func.func @transform_3(%arg0: i32) -> (i32, i32) {
    %c0_i32 = arith.constant 0 : i32
    %c0_i32_0 = arith.constant 0 : i32
    %c0_i32_1 = arith.constant 0 : i32
    return %c0_i32, %c0_i32_0 : i32, i32
  }
  func.func @transform_4(%arg0: i32) -> (i32, i32) {
    %c0_i32 = arith.constant 0 : i32
    %c0_i32_0 = arith.constant 0 : i32
    %c0_i32_1 = arith.constant 0 : i32
    return %c0_i32, %c0_i32_0 : i32, i32
  }
  func.func @transform_5(%arg0: i32) -> (i32, i32) {
    %c0_i32 = arith.constant 0 : i32
    %c0_i32_0 = arith.constant 0 : i32
    %c0_i32_1 = arith.constant 0 : i32
    return %c0_i32, %c0_i32_0 : i32, i32
  }
  func.func @transform_6(%arg0: i32) -> (i32, i32) {
    %c0_i32 = arith.constant 0 : i32
    %c0_i32_0 = arith.constant 0 : i32
    %c0_i32_1 = arith.constant 0 : i32
    return %c0_i32, %c0_i32_0 : i32, i32
  }
  func.func @transform_7(%arg0: i32) -> (i32, i32) {
    %c0_i32 = arith.constant 0 : i32
    %c0_i32_0 = arith.constant 0 : i32
    %c0_i32_1 = arith.constant 0 : i32
    return %c0_i32, %c0_i32_0 : i32, i32
  }
  func.func @transform_8(%arg0: i32) -> (i32, i32) {
    %c0_i32 = arith.constant 0 : i32
    %c0_i32_0 = arith.constant 0 : i32
    %c0_i32_1 = arith.constant 0 : i32
    return %c0_i32, %c0_i32_0 : i32, i32
  }
  func.func @transform_9(%arg0: i32) -> (i32, i32) {
    %c0_i32 = arith.constant 0 : i32
    %c0_i32_0 = arith.constant 0 : i32
    %c0_i32_1 = arith.constant 0 : i32
    return %c0_i32, %c0_i32_0 : i32, i32
  }
  func.func @transform_10(%arg0: i32) -> (i32, i32) {
    %c0_i32 = arith.constant 0 : i32
    %c0_i32_0 = arith.constant 0 : i32
    %c0_i32_1 = arith.constant 0 : i32
    return %c0_i32, %c0_i32_0 : i32, i32
  }
  func.func @transform_11(%arg0: i32) -> (i32, i32) {
    %c0_i32 = arith.constant 0 : i32
    %c0_i32_0 = arith.constant 0 : i32
    %c0_i32_1 = arith.constant 0 : i32
    return %c0_i32, %c0_i32_0 : i32, i32
  }
  func.func @transform_12(%arg0: i32) -> (i32, i32) {
    %c0_i32 = arith.constant 0 : i32
    %c0_i32_0 = arith.constant 0 : i32
    %c0_i32_1 = arith.constant 0 : i32
    return %c0_i32, %c0_i32_0 : i32, i32
  }
  func.func @transform_13(%arg0: i32) -> (i32, i32) {
    %c0_i32 = arith.constant 0 : i32
    %c0_i32_0 = arith.constant 0 : i32
    %c0_i32_1 = arith.constant 0 : i32
    return %c0_i32, %c0_i32_0 : i32, i32
  }
  func.func @transform_14(%arg0: i32) -> (i32, i32) {
    %c0_i32 = arith.constant 0 : i32
    %c0_i32_0 = arith.constant 0 : i32
    %c0_i32_1 = arith.constant 0 : i32
    return %c0_i32, %c0_i32_0 : i32, i32
  }
  func.func @transform_15(%arg0: i32) -> (i32, i32) {
    %c0_i32 = arith.constant 0 : i32
    %c0_i32_0 = arith.constant 0 : i32
    %c0_i32_1 = arith.constant 0 : i32
    return %c0_i32, %c0_i32_0 : i32, i32
  }
  func.func @transform_16(%arg0: i32) -> (i32, i32) {
    %c0_i32 = arith.constant 0 : i32
    %c0_i32_0 = arith.constant 0 : i32
    %c0_i32_1 = arith.constant 0 : i32
    return %c0_i32, %c0_i32_0 : i32, i32
  }
  func.func @transform_17(%arg0: i32) -> (i32, i32) {
    %c0_i32 = arith.constant 0 : i32
    %c0_i32_0 = arith.constant 0 : i32
    %c0_i32_1 = arith.constant 0 : i32
    return %c0_i32, %c0_i32_0 : i32, i32
  }
  func.func @transform_18(%arg0: i32) -> (i32, i32) {
    %c0_i32 = arith.constant 0 : i32
    %c0_i32_0 = arith.constant 0 : i32
    %c0_i32_1 = arith.constant 0 : i32
    return %c0_i32, %c0_i32_0 : i32, i32
  }
  func.func @transform_19(%arg0: i32) -> (i32, i32) {
    %c0_i32 = arith.constant 0 : i32
    %c0_i32_0 = arith.constant 0 : i32
    %c0_i32_1 = arith.constant 0 : i32
    return %c0_i32, %c0_i32_0 : i32, i32
  }
  func.func @transform_20(%arg0: i32) -> (i32, i32) {
    %c0_i32 = arith.constant 0 : i32
    %c0_i32_0 = arith.constant 0 : i32
    return %arg0, %c0_i32 : i32, i32
  }
  func.func @transform_21(%arg0: i32) -> (i32, i32) {
    %c0_i32 = arith.constant 0 : i32
    %c0_i32_0 = arith.constant 0 : i32
    return %arg0, %c0_i32 : i32, i32
  }
  func.func @transform_22(%arg0: i32) -> (i32, i32) {
    %c0_i32 = arith.constant 0 : i32
    %c0_i32_0 = arith.constant 0 : i32
    return %arg0, %c0_i32 : i32, i32
  }
  func.func @transform_23(%arg0: i32) -> (i32, i32) {
    %c0_i32 = arith.constant 0 : i32
    %c0_i32_0 = arith.constant 0 : i32
    return %arg0, %c0_i32 : i32, i32
  }
  func.func @transform_24(%arg0: i32) -> (i32, i32) {
    %c0_i32 = arith.constant 0 : i32
    %c0_i32_0 = arith.constant 0 : i32
    return %arg0, %c0_i32 : i32, i32
  }
  func.func @transform_25(%arg0: i32) -> (i32, i32) {
    %c0_i32 = arith.constant 0 : i32
    %c0_i32_0 = arith.constant 0 : i32
    return %arg0, %c0_i32 : i32, i32
  }
}

</mosaic_0001>

<llo_original>
// kernel: clip_finetuner_forward.1
$region0: #{clip_finetuner_forward.1}
  #allocation0 [shape = 'u32[]', space=smem, size = 0x4, offset = 0x4, fixed_abs, tag = 'smem constant byte address 0x4 - core index']
  #allocation1 [shape = 'u32[144,128]{1,0:T(1,128)}', space=vmem, size = 0x12000, scoped, tag = 'internal scratch']
  %s0 = inlined_call_operand.hbm [shape: f32[8,128], index: 0, kind: input, shape index: {}]
  %s1 = inlined_call_operand.hbm [shape: f32[8,128], index: 1, kind: input, shape index: {}]
  %s2 = inlined_call_operand.hbm [shape: f32[1,128], index: 2, kind: input, shape index: {}]
  %s3 = inlined_call_operand.hbm [shape: f32[1,128], index: 3, kind: input, shape index: {}]
  %s4 = inlined_call_operand.vmem [shape: f32[128,128], index: 4, kind: input, shape index: {}]
  %s5 = inlined_call_operand.vmem [shape: f32[1,128], index: 5, kind: input, shape index: {}]
  %s6 = inlined_call_operand.hbm [shape: f32[1,128], index: 6, kind: input, shape index: {}]
  %s7 = inlined_call_operand.hbm [shape: f32[1,128], index: 7, kind: input, shape index: {}]
  %s8 = inlined_call_operand.vmem [shape: f32[128,128], index: 8, kind: input, shape index: {}]
  %s9 = inlined_call_operand.vmem [shape: f32[1,128], index: 9, kind: input, shape index: {}]
  %s10 = inlined_call_operand.hbm [shape: f32[256,1024], index: 10, kind: input, shape index: {}]
  %s11 = inlined_call_operand.hbm [shape: f32[1,1024], index: 11, kind: input, shape index: {}]
  %s12 = inlined_call_operand.hbm [shape: f32[1,1024], index: 12, kind: input, shape index: {}]
  %s13 = inlined_call_operand.hbm [shape: f32[1,1024], index: 13, kind: input, shape index: {}]
  %s14 = inlined_call_operand.hbm [shape: f32[1024,512], index: 14, kind: input, shape index: {}]
  %s15 = inlined_call_operand.hbm [shape: f32[1,512], index: 15, kind: input, shape index: {}]
  %s16 = inlined_call_operand.hbm [shape: f32[1,512], index: 16, kind: input, shape index: {}]
  %s17 = inlined_call_operand.hbm [shape: f32[1,512], index: 17, kind: input, shape index: {}]
  %s18 = inlined_call_operand.vmem [shape: f32[512,128], index: 18, kind: input, shape index: {}]
  %s19 = inlined_call_operand.vmem [shape: f32[1,128], index: 19, kind: input, shape index: {}]
  %s20 = inlined_call_operand.hbm [shape: f32[8,128], index: 20, kind: output, shape index: {0}]
  %s21 = inlined_call_operand.hbm [shape: f32[8,128], index: 21, kind: output, shape index: {1}]
  %s22 = inlined_call_operand.hbm [shape: f32[8,512], index: 22, kind: output, shape index: {2}]
  %s23 = inlined_call_operand.vmem [shape: f32[8,128], index: 23, kind: output, shape index: {3}]
  %s24 = inlined_call_operand.vmem [shape: f32[8,128], index: 24, kind: output, shape index: {4}]
  %s25 = inlined_call_operand.vmem [shape: f32[8,128], index: 25, kind: output, shape index: {5}]
  %26 = xla_tuple %s20, %s21, %s22, %s23, %s24, %s25
  %s27 = sld [smem:[#allocation0]]
  $region186: #{clip_finetuner_forward.1} parent=0
    _
  %s29 = ssub.s32 1, %s27
  %s30 = scalar_select 0, %s29, %s27
  $region1: #{clip_finetuner_forward.1} parent=0
    #allocation2 [shape = 'u8[4096]{0}', space=vmem, size = 0x1000, scoped, tag = 'input window, operand 0, single buffered']
    #allocation3 [shape = 's32[1]{0}', space=sflag, size = 0x4, scoped, tag = 'scoped memory for clip_finetuner_forward.1']
    #allocation4 [shape = 's32[1]{0}', space=sflag, size = 0x4, scoped, tag = 'scoped memory for clip_finetuner_forward.1']
    #allocation5 [shape = 'u8[4096]{0}', space=vmem, size = 0x1000, scoped, tag = 'input window, operand 1, single buffered']
    #allocation6 [shape = 's32[1]{0}', space=sflag, size = 0x4, scoped, tag = 'scoped memory for clip_finetuner_forward.1']
    #allocation7 [shape = 'u8[512]{0}', space=vmem, size = 0x400, scoped, tag = 'input window, operand 2, single buffered']
    #allocation8 [shape = 'u8[512]{0}', space=vmem, size = 0x400, scoped, tag = 'input window, operand 3, single buffered']
    #allocation9 [shape = 's32[1]{0}', space=sflag, size = 0x4, scoped, tag = 'scoped memory for clip_finetuner_forward.1']
    #allocation10 [shape = 'u8[512]{0}', space=vmem, size = 0x400, scoped, tag = 'input window, operand 6, single buffered']
    #allocation11 [shape = 'u8[512]{0}', space=vmem, size = 0x400, scoped, tag = 'input window, operand 7, single buffered']
    #allocation12 [shape = 's32[1]{0}', space=sflag, size = 0x4, scoped, tag = 'scoped memory for clip_finetuner_forward.1']
    #allocation13 [shape = 'u8[1048576]{0}', space=vmem, size = 0x100000, scoped, tag = 'input window, operand 10, single buffered']
    #allocation14 [shape = 'u8[4096]{0}', space=vmem, size = 0x1000, scoped, tag = 'input window, operand 11, single buffered']
    #allocation15 [shape = 's32[1]{0}', space=sflag, size = 0x4, scoped, tag = 'scoped memory for clip_finetuner_forward.1']
    #allocation16 [shape = 'u8[4096]{0}', space=vmem, size = 0x1000, scoped, tag = 'input window, operand 12, single buffered']
    #allocation17 [shape = 'u8[4096]{0}', space=vmem, size = 0x1000, scoped, tag = 'input window, operand 13, single buffered']
    #allocation18 [shape = 's32[1]{0}', space=sflag, size = 0x4, scoped, tag = 'scoped memory for clip_finetuner_forward.1']
    #allocation19 [shape = 'u8[2097152]{0}', space=vmem, size = 0x200000, scoped, tag = 'input window, operand 14, single buffered']
    #allocation20 [shape = 'u8[2048]{0}', space=vmem, size = 0x800, scoped, tag = 'input window, operand 15, single buffered']
    #allocation21 [shape = 's32[1]{0}', space=sflag, size = 0x4, scoped, tag = 'scoped memory for clip_finetuner_forward.1']
    #allocation22 [shape = 'u8[2048]{0}', space=vmem, size = 0x800, scoped, tag = 'input window, operand 16, single buffered']
    #allocation23 [shape = 'u8[2048]{0}', space=vmem, size = 0x800, scoped, tag = 'input window, operand 17, single buffered']
    #allocation24 [shape = 's32[1]{0}', space=sflag, size = 0x4, scoped, tag = 'scoped memory for clip_finetuner_forward.1']
    #allocation25 [shape = 'u8[4096]{0}', space=vmem, size = 0x1000, scoped, tag = 'output window, operand 0, single buffered']
    #allocation26 [shape = 'u8[4096]{0}', space=vmem, size = 0x1000, scoped, tag = 'output window, operand 1, single buffered']
    #allocation27 [shape = 's32[1]{0}', space=sflag, size = 0x4, scoped, tag = 'scoped memory for clip_finetuner_forward.1']
    #allocation28 [shape = 'u8[16384]{0}', space=vmem, size = 0x4000, scoped, tag = 'output window, operand 2, single buffered']
    %31 = vsyncpa [#allocation3], 0
    %32 = vsyncpa [#allocation6], 0
    %33 = vsyncpa [#allocation9], 0
    %34 = vsyncpa [#allocation12], 0
    %35 = vsyncpa [#allocation15], 0
    %36 = vsyncpa [#allocation18], 0
    %37 = vsyncpa [#allocation21], 0
    %38 = vsyncpa [#allocation24], 0
    %39 = vsyncpa [#allocation4], 0
    %40 = vsyncpa [#allocation27], 0
    // Predicated region
    $region2: #{clip_finetuner_forward.1} parent=1 // pred_check
      _
    $region3: #{clip_finetuner_forward.1} parent=1 // pred_check_branch
      %42 = sbr.rel (0) target = $region5
    $region4: #{clip_finetuner_forward.1} parent=1 // pred_region
      %s44 = ssub.s32 128, 128
      %45 = vsyncadd [#allocation3], %s44
      %s47 = sshll.u32 [#allocation2], 4
      %s48 = int_to_ptr.vmem [resolvable:$true] %s47
      %50 = dma.hbm_to_vmem [thread:$0]  %s0, 128, %s48, [#allocation3]
    $region5: #{clip_finetuner_forward.1} parent=1 // pred_fallthru
      _
    // Predicated region
    $region6: #{clip_finetuner_forward.1} parent=1 // pred_check
      _
    $region7: #{clip_finetuner_forward.1} parent=1 // pred_check_branch
      %52 = sbr.rel (0) target = $region9
    $region8: #{clip_finetuner_forward.1} parent=1 // pred_region
      %s54 = ssub.s32 128, 128
      %55 = vsyncadd [#allocation6], %s54
      %s57 = sshll.u32 [#allocation5], 4
      %s58 = int_to_ptr.vmem [resolvable:$true] %s57
      %60 = dma.hbm_to_vmem [thread:$0]  %s1, 128, %s58, [#allocation6]
    $region9: #{clip_finetuner_forward.1} parent=1 // pred_fallthru
      _
    // Predicated region
    $region10: #{clip_finetuner_forward.1} parent=1 // pred_check
      _
    $region11: #{clip_finetuner_forward.1} parent=1 // pred_check_branch
      %62 = sbr.rel (0) target = $region13
    $region12: #{clip_finetuner_forward.1} parent=1 // pred_region
      %s64 = ssub.s32 16, 16
      %65 = vsyncadd [#allocation6], %s64
      %s67 = sshll.u32 [#allocation7], 4
      %s68 = int_to_ptr.vmem [resolvable:$true] %s67
      %70 = dma.hbm_to_vmem [thread:$0]  %s2, 16, %s68, [#allocation6]
    $region13: #{clip_finetuner_forward.1} parent=1 // pred_fallthru
      _
    // Predicated region
    $region14: #{clip_finetuner_forward.1} parent=1 // pred_check
      _
    $region15: #{clip_finetuner_forward.1} parent=1 // pred_check_branch
      %72 = sbr.rel (0) target = $region17
    $region16: #{clip_finetuner_forward.1} parent=1 // pred_region
      %s74 = ssub.s32 16, 16
      %75 = vsyncadd [#allocation9], %s74
      %s77 = sshll.u32 [#allocation8], 4
      %s78 = int_to_ptr.vmem [resolvable:$true] %s77
      %80 = dma.hbm_to_vmem [thread:$0]  %s3, 16, %s78, [#allocation9]
    $region17: #{clip_finetuner_forward.1} parent=1 // pred_fallthru
      _
    // Predicated region
    $region18: #{clip_finetuner_forward.1} parent=1 // pred_check
      _
    $region19: #{clip_finetuner_forward.1} parent=1 // pred_check_branch
      %82 = sbr.rel (0) target = $region21
    $region20: #{clip_finetuner_forward.1} parent=1 // pred_region
      _
    $region21: #{clip_finetuner_forward.1} parent=1 // pred_fallthru
      _
    // Predicated region
    $region22: #{clip_finetuner_forward.1} parent=1 // pred_check
      _
    $region23: #{clip_finetuner_forward.1} parent=1 // pred_check_branch
      %84 = sbr.rel (0) target = $region25
    $region24: #{clip_finetuner_forward.1} parent=1 // pred_region
      _
    $region25: #{clip_finetuner_forward.1} parent=1 // pred_fallthru
      _
    // Predicated region
    $region26: #{clip_finetuner_forward.1} parent=1 // pred_check
      _
    $region27: #{clip_finetuner_forward.1} parent=1 // pred_check_branch
      %86 = sbr.rel (0) target = $region29
    $region28: #{clip_finetuner_forward.1} parent=1 // pred_region
      %s88 = ssub.s32 16, 16
      %89 = vsyncadd [#allocation9], %s88
      %s91 = sshll.u32 [#allocation10], 4
      %s92 = int_to_ptr.vmem [resolvable:$true] %s91
      %94 = dma.hbm_to_vmem [thread:$0]  %s6, 16, %s92, [#allocation9]
    $region29: #{clip_finetuner_forward.1} parent=1 // pred_fallthru
      _
    // Predicated region
    $region30: #{clip_finetuner_forward.1} parent=1 // pred_check
      _
    $region31: #{clip_finetuner_forward.1} parent=1 // pred_check_branch
      %96 = sbr.rel (0) target = $region33
    $region32: #{clip_finetuner_forward.1} parent=1 // pred_region
      %s98 = ssub.s32 16, 16
      %99 = vsyncadd [#allocation12], %s98
      %s101 = sshll.u32 [#allocation11], 4
      %s102 = int_to_ptr.vmem [resolvable:$true] %s101
      %104 = dma.hbm_to_vmem [thread:$0]  %s7, 16, %s102, [#allocation12]
    $region33: #{clip_finetuner_forward.1} parent=1 // pred_fallthru
      _
    // Predicated region
    $region34: #{clip_finetuner_forward.1} parent=1 // pred_check
      _
    $region35: #{clip_finetuner_forward.1} parent=1 // pred_check_branch
      %106 = sbr.rel (0) target = $region37
    $region36: #{clip_finetuner_forward.1} parent=1 // pred_region
      _
    $region37: #{clip_finetuner_forward.1} parent=1 // pred_fallthru
      _
    // Predicated region
    $region38: #{clip_finetuner_forward.1} parent=1 // pred_check
      _
    $region39: #{clip_finetuner_forward.1} parent=1 // pred_check_branch
      %108 = sbr.rel (0) target = $region41
    $region40: #{clip_finetuner_forward.1} parent=1 // pred_region
      _
    $region41: #{clip_finetuner_forward.1} parent=1 // pred_fallthru
      _
    // Predicated region
    $region42: #{clip_finetuner_forward.1} parent=1 // pred_check
      _
    $region43: #{clip_finetuner_forward.1} parent=1 // pred_check_branch
      %110 = sbr.rel (0) target = $region45
    $region44: #{clip_finetuner_forward.1} parent=1 // pred_region
      %s112 = ssub.s32 32768, 32768
      %113 = vsyncadd [#allocation12], %s112
      %s114 = sshll.u32 [#allocation13], 4
      %s115 = int_to_ptr.vmem [resolvable:$true] %s114
      %120 = dma.hbm_to_vmem [thread:$0]  %s10, 32768, %s115, [#allocation12], 1024, 1024, 64
    $region45: #{clip_finetuner_forward.1} parent=1 // pred_fallthru
      _
    // Predicated region
    $region46: #{clip_finetuner_forward.1} parent=1 // pred_check
      _
    $region47: #{clip_finetuner_forward.1} parent=1 // pred_check_branch
      %122 = sbr.rel (0) target = $region49
    $region48: #{clip_finetuner_forward.1} parent=1 // pred_region
      %s124 = ssub.s32 128, 128
      %125 = vsyncadd [#allocation15], %s124
      %s127 = sshll.u32 [#allocation14], 4
      %s128 = int_to_ptr.vmem [resolvable:$true] %s127
      %130 = dma.hbm_to_vmem [thread:$0]  %s11, 128, %s128, [#allocation15]
    $region49: #{clip_finetuner_forward.1} parent=1 // pred_fallthru
      _
    // Predicated region
    $region50: #{clip_finetuner_forward.1} parent=1 // pred_check
      _
    $region51: #{clip_finetuner_forward.1} parent=1 // pred_check_branch
      %132 = sbr.rel (0) target = $region53
    $region52: #{clip_finetuner_forward.1} parent=1 // pred_region
      %s134 = ssub.s32 128, 128
      %135 = vsyncadd [#allocation15], %s134
      %s137 = sshll.u32 [#allocation16], 4
      %s138 = int_to_ptr.vmem [resolvable:$true] %s137
      %140 = dma.hbm_to_vmem [thread:$0]  %s12, 128, %s138, [#allocation15]
    $region53: #{clip_finetuner_forward.1} parent=1 // pred_fallthru
      _
    // Predicated region
    $region54: #{clip_finetuner_forward.1} parent=1 // pred_check
      _
    $region55: #{clip_finetuner_forward.1} parent=1 // pred_check_branch
      %142 = sbr.rel (0) target = $region57
    $region56: #{clip_finetuner_forward.1} parent=1 // pred_region
      %s144 = ssub.s32 128, 128
      %145 = vsyncadd [#allocation18], %s144
      %s147 = sshll.u32 [#allocation17], 4
      %s148 = int_to_ptr.vmem [resolvable:$true] %s147
      %150 = dma.hbm_to_vmem [thread:$0]  %s13, 128, %s148, [#allocation18]
    $region57: #{clip_finetuner_forward.1} parent=1 // pred_fallthru
      _
    // Predicated region
    $region58: #{clip_finetuner_forward.1} parent=1 // pred_check
      _
    $region59: #{clip_finetuner_forward.1} parent=1 // pred_check_branch
      %152 = sbr.rel (0) target = $region61
    $region60: #{clip_finetuner_forward.1} parent=1 // pred_region
      %s154 = ssub.s32 65536, 65536
      %155 = vsyncadd [#allocation18], %s154
      %s156 = sshll.u32 [#allocation19], 4
      %s157 = int_to_ptr.vmem [resolvable:$true] %s156
      %162 = dma.hbm_to_vmem [thread:$0]  %s14, 65536, %s157, [#allocation18], 512, 512, 32
    $region61: #{clip_finetuner_forward.1} parent=1 // pred_fallthru
      _
    // Predicated region
    $region62: #{clip_finetuner_forward.1} parent=1 // pred_check
      _
    $region63: #{clip_finetuner_forward.1} parent=1 // pred_check_branch
      %164 = sbr.rel (0) target = $region65
    $region64: #{clip_finetuner_forward.1} parent=1 // pred_region
      %s166 = ssub.s32 64, 64
      %167 = vsyncadd [#allocation21], %s166
      %s169 = sshll.u32 [#allocation20], 4
      %s170 = int_to_ptr.vmem [resolvable:$true] %s169
      %172 = dma.hbm_to_vmem [thread:$0]  %s15, 64, %s170, [#allocation21]
    $region65: #{clip_finetuner_forward.1} parent=1 // pred_fallthru
      _
    // Predicated region
    $region66: #{clip_finetuner_forward.1} parent=1 // pred_check
      _
    $region67: #{clip_finetuner_forward.1} parent=1 // pred_check_branch
      %174 = sbr.rel (0) target = $region69
    $region68: #{clip_finetuner_forward.1} parent=1 // pred_region
      %s176 = ssub.s32 64, 64
      %177 = vsyncadd [#allocation21], %s176
      %s179 = sshll.u32 [#allocation22], 4
      %s180 = int_to_ptr.vmem [resolvable:$true] %s179
      %182 = dma.hbm_to_vmem [thread:$0]  %s16, 64, %s180, [#allocation21]
    $region69: #{clip_finetuner_forward.1} parent=1 // pred_fallthru
      _
    // Predicated region
    $region70: #{clip_finetuner_forward.1} parent=1 // pred_check
      _
    $region71: #{clip_finetuner_forward.1} parent=1 // pred_check_branch
      %184 = sbr.rel (0) target = $region73
    $region72: #{clip_finetuner_forward.1} parent=1 // pred_region
      %s186 = ssub.s32 64, 64
      %187 = vsyncadd [#allocation24], %s186
      %s189 = sshll.u32 [#allocation23], 4
      %s190 = int_to_ptr.vmem [resolvable:$true] %s189
      %192 = dma.hbm_to_vmem [thread:$0]  %s17, 64, %s190, [#allocation24]
    $region73: #{clip_finetuner_forward.1} parent=1 // pred_fallthru
      _
    // Predicated region
    $region74: #{clip_finetuner_forward.1} parent=1 // pred_check
      _
    $region75: #{clip_finetuner_forward.1} parent=1 // pred_check_branch
      %194 = sbr.rel (0) target = $region77
    $region76: #{clip_finetuner_forward.1} parent=1 // pred_region
      _
    $region77: #{clip_finetuner_forward.1} parent=1 // pred_fallthru
      _
    // Predicated region
    $region78: #{clip_finetuner_forward.1} parent=1 // pred_check
      _
    $region79: #{clip_finetuner_forward.1} parent=1 // pred_check_branch
      %196 = sbr.rel (0) target = $region81
    $region80: #{clip_finetuner_forward.1} parent=1 // pred_region
      _
    $region81: #{clip_finetuner_forward.1} parent=1 // pred_fallthru
      _
    // Predicated region
    $region82: #{clip_finetuner_forward.1} parent=1 // pred_check
      _
    $region83: #{clip_finetuner_forward.1} parent=1 // pred_check_branch
      %198 = sbr.rel (0) target = $region85
    $region84: #{clip_finetuner_forward.1} parent=1 // pred_region
      %199 = dma.done [#allocation3], 128
    $region85: #{clip_finetuner_forward.1} parent=1 // pred_fallthru
      _
    // Predicated region
    $region86: #{clip_finetuner_forward.1} parent=1 // pred_check
      _
    $region87: #{clip_finetuner_forward.1} parent=1 // pred_check_branch
      %201 = sbr.rel (0) target = $region89
    $region88: #{clip_finetuner_forward.1} parent=1 // pred_region
      %202 = dma.done [#allocation6], 128
    $region89: #{clip_finetuner_forward.1} parent=1 // pred_fallthru
      _
    // Predicated region
    $region90: #{clip_finetuner_forward.1} parent=1 // pred_check
      _
    $region91: #{clip_finetuner_forward.1} parent=1 // pred_check_branch
      %204 = sbr.rel (0) target = $region93
    $region92: #{clip_finetuner_forward.1} parent=1 // pred_region
      %205 = dma.done [#allocation6], 16
    $region93: #{clip_finetuner_forward.1} parent=1 // pred_fallthru
      _
    // Predicated region
    $region94: #{clip_finetuner_forward.1} parent=1 // pred_check
      _
    $region95: #{clip_finetuner_forward.1} parent=1 // pred_check_branch
      %207 = sbr.rel (0) target = $region97
    $region96: #{clip_finetuner_forward.1} parent=1 // pred_region
      %208 = dma.done [#allocation9], 16
    $region97: #{clip_finetuner_forward.1} parent=1 // pred_fallthru
      _
    // Predicated region
    $region98: #{clip_finetuner_forward.1} parent=1 // pred_check
      _
    $region99: #{clip_finetuner_forward.1} parent=1 // pred_check_branch
      %210 = sbr.rel (0) target = $region101
    $region100: #{clip_finetuner_forward.1} parent=1 // pred_region
      %211 = dma.done [#allocation9], 16
    $region101: #{clip_finetuner_forward.1} parent=1 // pred_fallthru
      _
    // Predicated region
    $region102: #{clip_finetuner_forward.1} parent=1 // pred_check
      _
    $region103: #{clip_finetuner_forward.1} parent=1 // pred_check_branch
      %213 = sbr.rel (0) target = $region105
    $region104: #{clip_finetuner_forward.1} parent=1 // pred_region
      %214 = dma.done [#allocation12], 16
    $region105: #{clip_finetuner_forward.1} parent=1 // pred_fallthru
      _
    // Predicated region
    $region106: #{clip_finetuner_forward.1} parent=1 // pred_check
      _
    $region107: #{clip_finetuner_forward.1} parent=1 // pred_check_branch
      %216 = sbr.rel (0) target = $region109
    $region108: #{clip_finetuner_forward.1} parent=1 // pred_region
      %217 = dma.done [#allocation12], 32768
    $region109: #{clip_finetuner_forward.1} parent=1 // pred_fallthru
      _
    // Predicated region
    $region110: #{clip_finetuner_forward.1} parent=1 // pred_check
      _
    $region111: #{clip_finetuner_forward.1} parent=1 // pred_check_branch
      %219 = sbr.rel (0) target = $region113
    $region112: #{clip_finetuner_forward.1} parent=1 // pred_region
      %220 = dma.done [#allocation15], 128
    $region113: #{clip_finetuner_forward.1} parent=1 // pred_fallthru
      _
    // Predicated region
    $region114: #{clip_finetuner_forward.1} parent=1 // pred_check
      _
    $region115: #{clip_finetuner_forward.1} parent=1 // pred_check_branch
      %222 = sbr.rel (0) target = $region117
    $region116: #{clip_finetuner_forward.1} parent=1 // pred_region
      %223 = dma.done [#allocation15], 128
    $region117: #{clip_finetuner_forward.1} parent=1 // pred_fallthru
      _
    // Predicated region
    $region118: #{clip_finetuner_forward.1} parent=1 // pred_check
      _
    $region119: #{clip_finetuner_forward.1} parent=1 // pred_check_branch
      %225 = sbr.rel (0) target = $region121
    $region120: #{clip_finetuner_forward.1} parent=1 // pred_region
      %226 = dma.done [#allocation18], 128
    $region121: #{clip_finetuner_forward.1} parent=1 // pred_fallthru
      _
    // Predicated region
    $region122: #{clip_finetuner_forward.1} parent=1 // pred_check
      _
    $region123: #{clip_finetuner_forward.1} parent=1 // pred_check_branch
      %228 = sbr.rel (0) target = $region125
    $region124: #{clip_finetuner_forward.1} parent=1 // pred_region
      %229 = dma.done [#allocation18], 65536
    $region125: #{clip_finetuner_forward.1} parent=1 // pred_fallthru
      _
    // Predicated region
    $region126: #{clip_finetuner_forward.1} parent=1 // pred_check
      _
    $region127: #{clip_finetuner_forward.1} parent=1 // pred_check_branch
      %231 = sbr.rel (0) target = $region129
    $region128: #{clip_finetuner_forward.1} parent=1 // pred_region
      %232 = dma.done [#allocation21], 64
    $region129: #{clip_finetuner_forward.1} parent=1 // pred_fallthru
      _
    // Predicated region
    $region130: #{clip_finetuner_forward.1} parent=1 // pred_check
      _
    $region131: #{clip_finetuner_forward.1} parent=1 // pred_check_branch
      %234 = sbr.rel (0) target = $region133
    $region132: #{clip_finetuner_forward.1} parent=1 // pred_region
      %235 = dma.done [#allocation21], 64
    $region133: #{clip_finetuner_forward.1} parent=1 // pred_fallthru
      _
    // Predicated region
    $region134: #{clip_finetuner_forward.1} parent=1 // pred_check
      _
    $region135: #{clip_finetuner_forward.1} parent=1 // pred_check_branch
      %237 = sbr.rel (0) target = $region137
    $region136: #{clip_finetuner_forward.1} parent=1 // pred_region
      %238 = dma.done [#allocation24], 64
    $region137: #{clip_finetuner_forward.1} parent=1 // pred_fallthru
      _
    %v239 = vld [vmem:[#allocation2] sm:$0xff]
    %v240 = vld [vmem:[#allocation5] sm:$0xff]
    %v241 = vmul.f32 %v239, %v239
    %242 = vadd.xlane.f32.xlu0 %v241
    %v243 = vpop.xlane.xlu0 %242
    %v244 = vrsqrt.pop %v243
    %v245 = vmul.f32 %v239, %v244
    %v246 = vld [vmem:[#allocation7] sm:$0x1]
    %v247 = vld [vmem:[#allocation8] sm:$0x1]
    %248 = vadd.xlane.f32.xlu0 %v245
    %v249 = vpop.xlane.xlu0 %248
    %v250 = vrcp.pop 128.0
    %v251 = vmul.f32 %v249, %v250
    %v252 = vsub.f32 %v245, %v251
    %v253 = vmul.f32 %v252, %v252
    %254 = vadd.xlane.f32.xlu0 %v253
    %v255 = vpop.xlane.xlu0 %254
    %v256 = vmul.f32 %v255, %v250
    %v257 = vadd.f32 %v256, 1e-05
    %v258 = vrsqrt.pop %v257
    %v259 = vmul.f32 %v252, %v258
    %v261 = vlaneseq
    %v262 = vshrl.u32 %v261, 7
    %v263 = vsub.s32 0, %v262
    %v264 = vrot.slane %v246, %v263
    %v266 = vmul.f32 %v259, %v264
    %v268 = vlaneseq
    %v269 = vshrl.u32 %v268, 7
    %v270 = vsub.s32 0, %v269
    %v271 = vrot.slane %v247, %v270
    %v273 = vadd.f32 %v266, %v271
    %v274 = vmul.f32 %v240, %v240
    %275 = vadd.xlane.f32.xlu0 %v274
    %v276 = vpop.xlane.xlu0 %275
    %v277 = vrsqrt.pop %v276
    %v278 = vmul.f32 %v240, %v277
    %v279 = vld [vmem:[#allocation10] sm:$0x1]
    %v280 = vld [vmem:[#allocation11] sm:$0x1]
    %281 = vadd.xlane.f32.xlu0 %v278
    %v282 = vpop.xlane.xlu0 %281
    %v283 = vmul.f32 %v282, %v250
    %v284 = vsub.f32 %v278, %v283
    %v285 = vmul.f32 %v284, %v284
    %286 = vadd.xlane.f32.xlu0 %v285
    %v287 = vpop.xlane.xlu0 %286
    %v288 = vmul.f32 %v287, %v250
    %v289 = vadd.f32 %v288, 1e-05
    %v290 = vrsqrt.pop %v289
    %v291 = vmul.f32 %v284, %v290
    %v293 = vlaneseq
    %v294 = vshrl.u32 %v293, 7
    %v295 = vsub.s32 0, %v294
    %v296 = vrot.slane %v279, %v295
    %v298 = vmul.f32 %v291, %v296
    %v300 = vlaneseq
    %v301 = vshrl.u32 %v300, 7
    %v302 = vsub.s32 0, %v301
    %v303 = vrot.slane %v280, %v302
    %v305 = vadd.f32 %v298, %v303
    %306 = vst [vmem:[#allocation25] sm:$0xff] %v273
    %307 = vst [vmem:[#allocation26] sm:$0xff] %v305
    %v308 = vld [vmem:[%s4] sm:$0xff]
    %v309 = vld [vmem:[%s4 + $0x8] sm:$0xff]
    %v310 = vld [vmem:[%s4 + $0x10] sm:$0xff]
    %v311 = vld [vmem:[%s4 + $0x18] sm:$0xff]
    %v312 = vld [vmem:[%s4 + $0x20] sm:$0xff]
    %v313 = vld [vmem:[%s4 + $0x28] sm:$0xff]
    %v314 = vld [vmem:[%s4 + $0x30] sm:$0xff]
    %v315 = vld [vmem:[%s4 + $0x38] sm:$0xff]
    %v316 = vld [vmem:[%s4 + $0x40] sm:$0xff]
    %v317 = vld [vmem:[%s4 + $0x48] sm:$0xff]
    %v318 = vld [vmem:[%s4 + $0x50] sm:$0xff]
    %v319 = vld [vmem:[%s4 + $0x58] sm:$0xff]
    %v320 = vld [vmem:[%s4 + $0x60] sm:$0xff]
    %v321 = vld [vmem:[%s4 + $0x68] sm:$0xff]
    %v322 = vld [vmem:[%s4 + $0x70] sm:$0xff]
    %v323 = vld [vmem:[%s4 + $0x78] sm:$0xff]
    %v324 = vld [vmem:[%s5] sm:$0x1]
    %v326 = vlaneseq
    %v327 = vshrl.u32 %v326, 7
    %v328 = vsub.s32 0, %v327
    %v329 = vrot.slane %v324, %v328
    %331 = vmatprep.subr.mxu0 0.0
    %332 = vmatpush1.msra.mxu0 %v308
    %333 = vmatprep.subr.mxu0 0.0
    %334 = vmatpush1.msra.mxu0 %v309
    %335 = vmatprep.subr.mxu0 0.0
    %336 = vmatpush1.msra.mxu0 %v310
    %337 = vmatprep.subr.mxu0 0.0
    %338 = vmatpush1.msra.mxu0 %v311
    %339 = vmatprep.subr.mxu0 0.0
    %340 = vmatpush1.msra.mxu0 %v312
    %341 = vmatprep.subr.mxu0 0.0
    %342 = vmatpush1.msra.mxu0 %v313
    %343 = vmatprep.subr.mxu0 0.0
    %344 = vmatpush1.msra.mxu0 %v314
    %345 = vmatprep.subr.mxu0 0.0
    %346 = vmatpush1.msra.mxu0 %v315
    %347 = vmatprep.subr.mxu0 0.0
    %348 = vmatpush1.msra.mxu0 %v316
    %349 = vmatprep.subr.mxu0 0.0
    %350 = vmatpush1.msra.mxu0 %v317
    %351 = vmatprep.subr.mxu0 0.0
    %352 = vmatpush1.msra.mxu0 %v318
    %353 = vmatprep.subr.mxu0 0.0
    %354 = vmatpush1.msra.mxu0 %v319
    %355 = vmatprep.subr.mxu0 0.0
    %356 = vmatpush1.msra.mxu0 %v320
    %357 = vmatprep.subr.mxu0 0.0
    %358 = vmatpush1.msra.mxu0 %v321
    %359 = vmatprep.subr.mxu0 0.0
    %360 = vmatpush1.msra.mxu0 %v322
    %361 = vmatprep.subr.mxu0 0.0
    %362 = vmatpush1.msra.mxu0 %v323
    %363 = vmatprep.subr.mxu0 0.0
    %364 = vmatpush1.msra.mxu0 0.0
    %365 = vmatprep.subr.mxu0 0.0
    %366 = vmatpush1.msra.mxu0 0.0
    %367 = vmatprep.subr.mxu0 0.0
    %368 = vmatpush1.msra.mxu0 0.0
    %369 = vmatprep.subr.mxu0 0.0
    %370 = vmatpush1.msra.mxu0 0.0
    %371 = vmatprep.subr.mxu0 0.0
    %372 = vmatpush1.msra.mxu0 0.0
    %373 = vmatprep.subr.mxu0 0.0
    %374 = vmatpush1.msra.mxu0 0.0
    %375 = vmatprep.subr.mxu0 0.0
    %376 = vmatpush1.msra.mxu0 0.0
    %377 = vmatprep.subr.mxu0 0.0
    %378 = vmatpush1.msra.mxu0 0.0
    %379 = vmatprep.subr.mxu0 0.0
    %380 = vmatpush1.msra.mxu0 0.0
    %381 = vmatprep.subr.mxu0 0.0
    %382 = vmatpush1.msra.mxu0 0.0
    %383 = vmatprep.subr.mxu0 0.0
    %384 = vmatpush1.msra.mxu0 0.0
    %385 = vmatprep.subr.mxu0 0.0
    %386 = vmatpush1.msra.mxu0 0.0
    %387 = vmatprep.subr.mxu0 0.0
    %388 = vmatpush1.msra.mxu0 0.0
    %389 = vmatprep.subr.mxu0 0.0
    %390 = vmatpush1.msra.mxu0 0.0
    %391 = vmatprep.subr.mxu0 0.0
    %392 = vmatpush1.msra.mxu0 0.0
    %393 = vmatprep.subr.mxu0 0.0
    %394 = vmatpush1.msra.mxu0 0.0
    %395 = vmatprep.mubr.f32.mxu0 0.0
    %396 = vmatmul.mubr.f32.gmra.mrb[0].mxu0 %v273
    %v397 = vpop.f32.mrb[0].mxu0
    %v398 = vadd.f32 %v329, %v397
    %v399 = vpop.f32.mrb[0].mxu0
    %400 = vdwg.mxu0
    %401 = vst [vmem:[%s23] sm:$0xff] %v398
    %v402 = vld [vmem:[%s8] sm:$0xff]
    %v403 = vld [vmem:[%s8 + $0x8] sm:$0xff]
    %v404 = vld [vmem:[%s8 + $0x10] sm:$0xff]
    %v405 = vld [vmem:[%s8 + $0x18] sm:$0xff]
    %v406 = vld [vmem:[%s8 + $0x20] sm:$0xff]
    %v407 = vld [vmem:[%s8 + $0x28] sm:$0xff]
    %v408 = vld [vmem:[%s8 + $0x30] sm:$0xff]
    %v409 = vld [vmem:[%s8 + $0x38] sm:$0xff]
    %v410 = vld [vmem:[%s8 + $0x40] sm:$0xff]
    %v411 = vld [vmem:[%s8 + $0x48] sm:$0xff]
    %v412 = vld [vmem:[%s8 + $0x50] sm:$0xff]
    %v413 = vld [vmem:[%s8 + $0x58] sm:$0xff]
    %v414 = vld [vmem:[%s8 + $0x60] sm:$0xff]
    %v415 = vld [vmem:[%s8 + $0x68] sm:$0xff]
    %v416 = vld [vmem:[%s8 + $0x70] sm:$0xff]
    %v417 = vld [vmem:[%s8 + $0x78] sm:$0xff]
    %v418 = vld [vmem:[%s9] sm:$0x1]
    %v420 = vlaneseq
    %v421 = vshrl.u32 %v420, 7
    %v422 = vsub.s32 0, %v421
    %v423 = vrot.slane %v418, %v422
    %425 = vmatprep.subr.mxu0 0.0
    %426 = vmatpush1.msra.mxu0 %v402
    %427 = vmatprep.subr.mxu0 0.0
    %428 = vmatpush1.msra.mxu0 %v403
    %429 = vmatprep.subr.mxu0 0.0
    %430 = vmatpush1.msra.mxu0 %v404
    %431 = vmatprep.subr.mxu0 0.0
    %432 = vmatpush1.msra.mxu0 %v405
    %433 = vmatprep.subr.mxu0 0.0
    %434 = vmatpush1.msra.mxu0 %v406
    %435 = vmatprep.subr.mxu0 0.0
    %436 = vmatpush1.msra.mxu0 %v407
    %437 = vmatprep.subr.mxu0 0.0
    %438 = vmatpush1.msra.mxu0 %v408
    %439 = vmatprep.subr.mxu0 0.0
    %440 = vmatpush1.msra.mxu0 %v409
    %441 = vmatprep.subr.mxu0 0.0
    %442 = vmatpush1.msra.mxu0 %v410
    %443 = vmatprep.subr.mxu0 0.0
    %444 = vmatpush1.msra.mxu0 %v411
    %445 = vmatprep.subr.mxu0 0.0
    %446 = vmatpush1.msra.mxu0 %v412
    %447 = vmatprep.subr.mxu0 0.0
    %448 = vmatpush1.msra.mxu0 %v413
    %449 = vmatprep.subr.mxu0 0.0
    %450 = vmatpush1.msra.mxu0 %v414
    %451 = vmatprep.subr.mxu0 0.0
    %452 = vmatpush1.msra.mxu0 %v415
    %453 = vmatprep.subr.mxu0 0.0
    %454 = vmatpush1.msra.mxu0 %v416
    %455 = vmatprep.subr.mxu0 0.0
    %456 = vmatpush1.msra.mxu0 %v417
    %457 = vmatprep.subr.mxu0 0.0
    %458 = vmatpush1.msra.mxu0 0.0
    %459 = vmatprep.subr.mxu0 0.0
    %460 = vmatpush1.msra.mxu0 0.0
    %461 = vmatprep.subr.mxu0 0.0
    %462 = vmatpush1.msra.mxu0 0.0
    %463 = vmatprep.subr.mxu0 0.0
    %464 = vmatpush1.msra.mxu0 0.0
    %465 = vmatprep.subr.mxu0 0.0
    %466 = vmatpush1.msra.mxu0 0.0
    %467 = vmatprep.subr.mxu0 0.0
    %468 = vmatpush1.msra.mxu0 0.0
    %469 = vmatprep.subr.mxu0 0.0
    %470 = vmatpush1.msra.mxu0 0.0
    %471 = vmatprep.subr.mxu0 0.0
    %472 = vmatpush1.msra.mxu0 0.0
    %473 = vmatprep.subr.mxu0 0.0
    %474 = vmatpush1.msra.mxu0 0.0
    %475 = vmatprep.subr.mxu0 0.0
    %476 = vmatpush1.msra.mxu0 0.0
    %477 = vmatprep.subr.mxu0 0.0
    %478 = vmatpush1.msra.mxu0 0.0
    %479 = vmatprep.subr.mxu0 0.0
    %480 = vmatpush1.msra.mxu0 0.0
    %481 = vmatprep.subr.mxu0 0.0
    %482 = vmatpush1.msra.mxu0 0.0
    %483 = vmatprep.subr.mxu0 0.0
    %484 = vmatpush1.msra.mxu0 0.0
    %485 = vmatprep.subr.mxu0 0.0
    %486 = vmatpush1.msra.mxu0 0.0
    %487 = vmatprep.subr.mxu0 0.0
    %488 = vmatpush1.msra.mxu0 0.0
    %489 = vmatprep.mubr.f32.mxu0 0.0
    %490 = vmatmul.mubr.f32.gmra.mrb[0].mxu0 %v305
    %v491 = vpop.f32.mrb[0].mxu0
    %v492 = vadd.f32 %v423, %v491
    %v493 = vpop.f32.mrb[0].mxu0
    %494 = vdwg.mxu0
    %495 = vst [vmem:[%s24] sm:$0xff] %v492
    %v496 = vld [vmem:[#allocation13] sm:$0xff]
    %v497 = vld [vmem:[#allocation13 + $0x8] sm:$0xff]
    %v498 = vld [vmem:[#allocation13 + $0x10] sm:$0xff]
    %v499 = vld [vmem:[#allocation13 + $0x18] sm:$0xff]
    %v500 = vld [vmem:[#allocation13 + $0x20] sm:$0xff]
    %v501 = vld [vmem:[#allocation13 + $0x28] sm:$0xff]
    %v502 = vld [vmem:[#allocation13 + $0x30] sm:$0xff]
    %v503 = vld [vmem:[#allocation13 + $0x38] sm:$0xff]
    %v504 = vld [vmem:[#allocation13 + $0x40] sm:$0xff]
    %v505 = vld [vmem:[#allocation13 + $0x48] sm:$0xff]
    %v506 = vld [vmem:[#allocation13 + $0x50] sm:$0xff]
    %v507 = vld [vmem:[#allocation13 + $0x58] sm:$0xff]
    %v508 = vld [vmem:[#allocation13 + $0x60] sm:$0xff]
    %v509 = vld [vmem:[#allocation13 + $0x68] sm:$0xff]
    %v510 = vld [vmem:[#allocation13 + $0x70] sm:$0xff]
    %v511 = vld [vmem:[#allocation13 + $0x78] sm:$0xff]
    %v512 = vld [vmem:[#allocation13 + $0x80] sm:$0xff]
    %v513 = vld [vmem:[#allocation13 + $0x88] sm:$0xff]
    %v514 = vld [vmem:[#allocation13 + $0x90] sm:$0xff]
    %v515 = vld [vmem:[#allocation13 + $0x98] sm:$0xff]
    %v516 = vld [vmem:[#allocation13 + $0xa0] sm:$0xff]
    %v517 = vld [vmem:[#allocation13 + $0xa8] sm:$0xff]
    %v518 = vld [vmem:[#allocation13 + $0xb0] sm:$0xff]
    %v519 = vld [vmem:[#allocation13 + $0xb8] sm:$0xff]
    %v520 = vld [vmem:[#allocation13 + $0xc0] sm:$0xff]
    %v521 = vld [vmem:[#allocation13 + $0xc8] sm:$0xff]
    %v522 = vld [vmem:[#allocation13 + $0xd0] sm:$0xff]
    %v523 = vld [vmem:[#allocation13 + $0xd8] sm:$0xff]
    %v524 = vld [vmem:[#allocation13 + $0xe0] sm:$0xff]
    %v525 = vld [vmem:[#allocation13 + $0xe8] sm:$0xff]
    %v526 = vld [vmem:[#allocation13 + $0xf0] sm:$0xff]
    %v527 = vld [vmem:[#allocation13 + $0xf8] sm:$0xff]
    %v528 = vld [vmem:[#allocation13 + $0x100] sm:$0xff]
    %v529 = vld [vmem:[#allocation13 + $0x108] sm:$0xff]
    %v530 = vld [vmem:[#allocation13 + $0x110] sm:$0xff]
    %v531 = vld [vmem:[#allocation13 + $0x118] sm:$0xff]
    %v532 = vld [vmem:[#allocation13 + $0x120] sm:$0xff]
    %v533 = vld [vmem:[#allocation13 + $0x128] sm:$0xff]
    %v534 = vld [vmem:[#allocation13 + $0x130] sm:$0xff]
    %v535 = vld [vmem:[#allocation13 + $0x138] sm:$0xff]
    %v536 = vld [vmem:[#allocation13 + $0x140] sm:$0xff]
    %v537 = vld [vmem:[#allocation13 + $0x148] sm:$0xff]
    %v538 = vld [vmem:[#allocation13 + $0x150] sm:$0xff]
    %v539 = vld [vmem:[#allocation13 + $0x158] sm:$0xff]
    %v540 = vld [vmem:[#allocation13 + $0x160] sm:$0xff]
    %v541 = vld [vmem:[#allocation13 + $0x168] sm:$0xff]
    %v542 = vld [vmem:[#allocation13 + $0x170] sm:$0xff]
    %v543 = vld [vmem:[#allocation13 + $0x178] sm:$0xff]
    %v544 = vld [vmem:[#allocation13 + $0x180] sm:$0xff]
    %v545 = vld [vmem:[#allocation13 + $0x188] sm:$0xff]
    %v546 = vld [vmem:[#allocation13 + $0x190] sm:$0xff]
    %v547 = vld [vmem:[#allocation13 + $0x198] sm:$0xff]
    %v548 = vld [vmem:[#allocation13 + $0x1a0] sm:$0xff]
    %v549 = vld [vmem:[#allocation13 + $0x1a8] sm:$0xff]
    %v550 = vld [vmem:[#allocation13 + $0x1b0] sm:$0xff]
    %v551 = vld [vmem:[#allocation13 + $0x1b8] sm:$0xff]
    %v552 = vld [vmem:[#allocation13 + $0x1c0] sm:$0xff]
    %v553 = vld [vmem:[#allocation13 + $0x1c8] sm:$0xff]
    %v554 = vld [vmem:[#allocation13 + $0x1d0] sm:$0xff]
    %v555 = vld [vmem:[#allocation13 + $0x1d8] sm:$0xff]
    %v556 = vld [vmem:[#allocation13 + $0x1e0] sm:$0xff]
    %v557 = vld [vmem:[#allocation13 + $0x1e8] sm:$0xff]
    %v558 = vld [vmem:[#allocation13 + $0x1f0] sm:$0xff]
    %v559 = vld [vmem:[#allocation13 + $0x1f8] sm:$0xff]
    %v560 = vld [vmem:[#allocation13 + $0x200] sm:$0xff]
    %v561 = vld [vmem:[#allocation13 + $0x208] sm:$0xff]
    %v562 = vld [vmem:[#allocation13 + $0x210] sm:$0xff]
    %v563 = vld [vmem:[#allocation13 + $0x218] sm:$0xff]
    %v564 = vld [vmem:[#allocation13 + $0x220] sm:$0xff]
    %v565 = vld [vmem:[#allocation13 + $0x228] sm:$0xff]
    %v566 = vld [vmem:[#allocation13 + $0x230] sm:$0xff]
    %v567 = vld [vmem:[#allocation13 + $0x238] sm:$0xff]
    %v568 = vld [vmem:[#allocation13 + $0x240] sm:$0xff]
    %v569 = vld [vmem:[#allocation13 + $0x248] sm:$0xff]
    %v570 = vld [vmem:[#allocation13 + $0x250] sm:$0xff]
    %v571 = vld [vmem:[#allocation13 + $0x258] sm:$0xff]
    %v572 = vld [vmem:[#allocation13 + $0x260] sm:$0xff]
    %v573 = vld [vmem:[#allocation13 + $0x268] sm:$0xff]
    %v574 = vld [vmem:[#allocation13 + $0x270] sm:$0xff]
    %v575 = vld [vmem:[#allocation13 + $0x278] sm:$0xff]
    %v576 = vld [vmem:[#allocation13 + $0x280] sm:$0xff]
    %v577 = vld [vmem:[#allocation13 + $0x288] sm:$0xff]
    %v578 = vld [vmem:[#allocation13 + $0x290] sm:$0xff]
    %v579 = vld [vmem:[#allocation13 + $0x298] sm:$0xff]
    %v580 = vld [vmem:[#allocation13 + $0x2a0] sm:$0xff]
    %v581 = vld [vmem:[#allocation13 + $0x2a8] sm:$0xff]
    %v582 = vld [vmem:[#allocation13 + $0x2b0] sm:$0xff]
    %v583 = vld [vmem:[#allocation13 + $0x2b8] sm:$0xff]
    %v584 = vld [vmem:[#allocation13 + $0x2c0] sm:$0xff]
    %v585 = vld [vmem:[#allocation13 + $0x2c8] sm:$0xff]
    %v586 = vld [vmem:[#allocation13 + $0x2d0] sm:$0xff]
    %v587 = vld [vmem:[#allocation13 + $0x2d8] sm:$0xff]
    %v588 = vld [vmem:[#allocation13 + $0x2e0] sm:$0xff]
    %v589 = vld [vmem:[#allocation13 + $0x2e8] sm:$0xff]
    %v590 = vld [vmem:[#allocation13 + $0x2f0] sm:$0xff]
    %v591 = vld [vmem:[#allocation13 + $0x2f8] sm:$0xff]
    %v592 = vld [vmem:[#allocation13 + $0x300] sm:$0xff]
    %v593 = vld [vmem:[#allocation13 + $0x308] sm:$0xff]
    %v594 = vld [vmem:[#allocation13 + $0x310] sm:$0xff]
    %v595 = vld [vmem:[#allocation13 + $0x318] sm:$0xff]
    %v596 = vld [vmem:[#allocation13 + $0x320] sm:$0xff]
    %v597 = vld [vmem:[#allocation13 + $0x328] sm:$0xff]
    %v598 = vld [vmem:[#allocation13 + $0x330] sm:$0xff]
    %v599 = vld [vmem:[#allocation13 + $0x338] sm:$0xff]
    %v600 = vld [vmem:[#allocation13 + $0x340] sm:$0xff]
    %v601 = vld [vmem:[#allocation13 + $0x348] sm:$0xff]
    %v602 = vld [vmem:[#allocation13 + $0x350] sm:$0xff]
    %v603 = vld [vmem:[#allocation13 + $0x358] sm:$0xff]
    %v604 = vld [vmem:[#allocation13 + $0x360] sm:$0xff]
    %v605 = vld [vmem:[#allocation13 + $0x368] sm:$0xff]
    %v606 = vld [vmem:[#allocation13 + $0x370] sm:$0xff]
    %v607 = vld [vmem:[#allocation13 + $0x378] sm:$0xff]
    %v608 = vld [vmem:[#allocation13 + $0x380] sm:$0xff]
    %v609 = vld [vmem:[#allocation13 + $0x388] sm:$0xff]
    %v610 = vld [vmem:[#allocation13 + $0x390] sm:$0xff]
    %v611 = vld [vmem:[#allocation13 + $0x398] sm:$0xff]
    %v612 = vld [vmem:[#allocation13 + $0x3a0] sm:$0xff]
    %v613 = vld [vmem:[#allocation13 + $0x3a8] sm:$0xff]
    %v614 = vld [vmem:[#allocation13 + $0x3b0] sm:$0xff]
    %v615 = vld [vmem:[#allocation13 + $0x3b8] sm:$0xff]
    %v616 = vld [vmem:[#allocation13 + $0x3c0] sm:$0xff]
    %v617 = vld [vmem:[#allocation13 + $0x3c8] sm:$0xff]
    %v618 = vld [vmem:[#allocation13 + $0x3d0] sm:$0xff]
    %v619 = vld [vmem:[#allocation13 + $0x3d8] sm:$0xff]
    %v620 = vld [vmem:[#allocation13 + $0x3e0] sm:$0xff]
    %v621 = vld [vmem:[#allocation13 + $0x3e8] sm:$0xff]
    %v622 = vld [vmem:[#allocation13 + $0x3f0] sm:$0xff]
    %v623 = vld [vmem:[#allocation13 + $0x3f8] sm:$0xff]
    %v624 = vld [vmem:[#allocation13 + $0x400] sm:$0xff]
    %v625 = vld [vmem:[#allocation13 + $0x408] sm:$0xff]
    %v626 = vld [vmem:[#allocation13 + $0x410] sm:$0xff]
    %v627 = vld [vmem:[#allocation13 + $0x418] sm:$0xff]
    %v628 = vld [vmem:[#allocation13 + $0x420] sm:$0xff]
    %v629 = vld [vmem:[#allocation13 + $0x428] sm:$0xff]
    %v630 = vld [vmem:[#allocation13 + $0x430] sm:$0xff]
    %v631 = vld [vmem:[#allocation13 + $0x438] sm:$0xff]
    %v632 = vld [vmem:[#allocation13 + $0x440] sm:$0xff]
    %v633 = vld [vmem:[#allocation13 + $0x448] sm:$0xff]
    %v634 = vld [vmem:[#allocation13 + $0x450] sm:$0xff]
    %v635 = vld [vmem:[#allocation13 + $0x458] sm:$0xff]
    %v636 = vld [vmem:[#allocation13 + $0x460] sm:$0xff]
    %v637 = vld [vmem:[#allocation13 + $0x468] sm:$0xff]
    %v638 = vld [vmem:[#allocation13 + $0x470] sm:$0xff]
    %v639 = vld [vmem:[#allocation13 + $0x478] sm:$0xff]
    %v640 = vld [vmem:[#allocation13 + $0x480] sm:$0xff]
    %v641 = vld [vmem:[#allocation13 + $0x488] sm:$0xff]
    %v642 = vld [vmem:[#allocation13 + $0x490] sm:$0xff]
    %v643 = vld [vmem:[#allocation13 + $0x498] sm:$0xff]
    %v644 = vld [vmem:[#allocation13 + $0x4a0] sm:$0xff]
    %v645 = vld [vmem:[#allocation13 + $0x4a8] sm:$0xff]
    %v646 = vld [vmem:[#allocation13 + $0x4b0] sm:$0xff]
    %v647 = vld [vmem:[#allocation13 + $0x4b8] sm:$0xff]
    %v648 = vld [vmem:[#allocation13 + $0x4c0] sm:$0xff]
    %v649 = vld [vmem:[#allocation13 + $0x4c8] sm:$0xff]
    %v650 = vld [vmem:[#allocation13 + $0x4d0] sm:$0xff]
    %v651 = vld [vmem:[#allocation13 + $0x4d8] sm:$0xff]
    %v652 = vld [vmem:[#allocation13 + $0x4e0] sm:$0xff]
    %v653 = vld [vmem:[#allocation13 + $0x4e8] sm:$0xff]
    %v654 = vld [vmem:[#allocation13 + $0x4f0] sm:$0xff]
    %v655 = vld [vmem:[#allocation13 + $0x4f8] sm:$0xff]
    %v656 = vld [vmem:[#allocation13 + $0x500] sm:$0xff]
    %v657 = vld [vmem:[#allocation13 + $0x508] sm:$0xff]
    %v658 = vld [vmem:[#allocation13 + $0x510] sm:$0xff]
    %v659 = vld [vmem:[#allocation13 + $0x518] sm:$0xff]
    %v660 = vld [vmem:[#allocation13 + $0x520] sm:$0xff]
    %v661 = vld [vmem:[#allocation13 + $0x528] sm:$0xff]
    %v662 = vld [vmem:[#allocation13 + $0x530] sm:$0xff]
    %v663 = vld [vmem:[#allocation13 + $0x538] sm:$0xff]
    %v664 = vld [vmem:[#allocation13 + $0x540] sm:$0xff]
    %v665 = vld [vmem:[#allocation13 + $0x548] sm:$0xff]
    %v666 = vld [vmem:[#allocation13 + $0x550] sm:$0xff]
    %v667 = vld [vmem:[#allocation13 + $0x558] sm:$0xff]
    %v668 = vld [vmem:[#allocation13 + $0x560] sm:$0xff]
    %v669 = vld [vmem:[#allocation13 + $0x568] sm:$0xff]
    %v670 = vld [vmem:[#allocation13 + $0x570] sm:$0xff]
    %v671 = vld [vmem:[#allocation13 + $0x578] sm:$0xff]
    %v672 = vld [vmem:[#allocation13 + $0x580] sm:$0xff]
    %v673 = vld [vmem:[#allocation13 + $0x588] sm:$0xff]
    %v674 = vld [vmem:[#allocation13 + $0x590] sm:$0xff]
    %v675 = vld [vmem:[#allocation13 + $0x598] sm:$0xff]
    %v676 = vld [vmem:[#allocation13 + $0x5a0] sm:$0xff]
    %v677 = vld [vmem:[#allocation13 + $0x5a8] sm:$0xff]
    %v678 = vld [vmem:[#allocation13 + $0x5b0] sm:$0xff]
    %v679 = vld [vmem:[#allocation13 + $0x5b8] sm:$0xff]
    %v680 = vld [vmem:[#allocation13 + $0x5c0] sm:$0xff]
    %v681 = vld [vmem:[#allocation13 + $0x5c8] sm:$0xff]
    %v682 = vld [vmem:[#allocation13 + $0x5d0] sm:$0xff]
    %v683 = vld [vmem:[#allocation13 + $0x5d8] sm:$0xff]
    %v684 = vld [vmem:[#allocation13 + $0x5e0] sm:$0xff]
    %v685 = vld [vmem:[#allocation13 + $0x5e8] sm:$0xff]
    %v686 = vld [vmem:[#allocation13 + $0x5f0] sm:$0xff]
    %v687 = vld [vmem:[#allocation13 + $0x5f8] sm:$0xff]
    %v688 = vld [vmem:[#allocation13 + $0x600] sm:$0xff]
    %v689 = vld [vmem:[#allocation13 + $0x608] sm:$0xff]
    %v690 = vld [vmem:[#allocation13 + $0x610] sm:$0xff]
    %v691 = vld [vmem:[#allocation13 + $0x618] sm:$0xff]
    %v692 = vld [vmem:[#allocation13 + $0x620] sm:$0xff]
    %v693 = vld [vmem:[#allocation13 + $0x628] sm:$0xff]
    %v694 = vld [vmem:[#allocation13 + $0x630] sm:$0xff]
    %v695 = vld [vmem:[#allocation13 + $0x638] sm:$0xff]
    %v696 = vld [vmem:[#allocation13 + $0x640] sm:$0xff]
    %v697 = vld [vmem:[#allocation13 + $0x648] sm:$0xff]
    %v698 = vld [vmem:[#allocation13 + $0x650] sm:$0xff]
    %v699 = vld [vmem:[#allocation13 + $0x658] sm:$0xff]
    %v700 = vld [vmem:[#allocation13 + $0x660] sm:$0xff]
    %v701 = vld [vmem:[#allocation13 + $0x668] sm:$0xff]
    %v702 = vld [vmem:[#allocation13 + $0x670] sm:$0xff]
    %v703 = vld [vmem:[#allocation13 + $0x678] sm:$0xff]
    %v704 = vld [vmem:[#allocation13 + $0x680] sm:$0xff]
    %v705 = vld [vmem:[#allocation13 + $0x688] sm:$0xff]
    %v706 = vld [vmem:[#allocation13 + $0x690] sm:$0xff]
    %v707 = vld [vmem:[#allocation13 + $0x698] sm:$0xff]
    %v708 = vld [vmem:[#allocation13 + $0x6a0] sm:$0xff]
    %v709 = vld [vmem:[#allocation13 + $0x6a8] sm:$0xff]
    %v710 = vld [vmem:[#allocation13 + $0x6b0] sm:$0xff]
    %v711 = vld [vmem:[#allocation13 + $0x6b8] sm:$0xff]
    %v712 = vld [vmem:[#allocation13 + $0x6c0] sm:$0xff]
    %v713 = vld [vmem:[#allocation13 + $0x6c8] sm:$0xff]
    %v714 = vld [vmem:[#allocation13 + $0x6d0] sm:$0xff]
    %v715 = vld [vmem:[#allocation13 + $0x6d8] sm:$0xff]
    %v716 = vld [vmem:[#allocation13 + $0x6e0] sm:$0xff]
    %v717 = vld [vmem:[#allocation13 + $0x6e8] sm:$0xff]
    %v718 = vld [vmem:[#allocation13 + $0x6f0] sm:$0xff]
    %v719 = vld [vmem:[#allocation13 + $0x6f8] sm:$0xff]
    %v720 = vld [vmem:[#allocation13 + $0x700] sm:$0xff]
    %v721 = vld [vmem:[#allocation13 + $0x708] sm:$0xff]
    %v722 = vld [vmem:[#allocation13 + $0x710] sm:$0xff]
    %v723 = vld [vmem:[#allocation13 + $0x718] sm:$0xff]
    %v724 = vld [vmem:[#allocation13 + $0x720] sm:$0xff]
    %v725 = vld [vmem:[#allocation13 + $0x728] sm:$0xff]
    %v726 = vld [vmem:[#allocation13 + $0x730] sm:$0xff]
    %v727 = vld [vmem:[#allocation13 + $0x738] sm:$0xff]
    %v728 = vld [vmem:[#allocation13 + $0x740] sm:$0xff]
    %v729 = vld [vmem:[#allocation13 + $0x748] sm:$0xff]
    %v730 = vld [vmem:[#allocation13 + $0x750] sm:$0xff]
    %v731 = vld [vmem:[#allocation13 + $0x758] sm:$0xff]
    %v732 = vld [vmem:[#allocation13 + $0x760] sm:$0xff]
    %v733 = vld [vmem:[#allocation13 + $0x768] sm:$0xff]
    %v734 = vld [vmem:[#allocation13 + $0x770] sm:$0xff]
    %v735 = vld [vmem:[#allocation13 + $0x778] sm:$0xff]
    %v736 = vld [vmem:[#allocation13 + $0x780] sm:$0xff]
    %v737 = vld [vmem:[#allocation13 + $0x788] sm:$0xff]
    %v738 = vld [vmem:[#allocation13 + $0x790] sm:$0xff]
    %v739 = vld [vmem:[#allocation13 + $0x798] sm:$0xff]
    %v740 = vld [vmem:[#allocation13 + $0x7a0] sm:$0xff]
    %v741 = vld [vmem:[#allocation13 + $0x7a8] sm:$0xff]
    %v742 = vld [vmem:[#allocation13 + $0x7b0] sm:$0xff]
    %v743 = vld [vmem:[#allocation13 + $0x7b8] sm:$0xff]
    %v744 = vld [vmem:[#allocation13 + $0x7c0] sm:$0xff]
    %v745 = vld [vmem:[#allocation13 + $0x7c8] sm:$0xff]
    %v746 = vld [vmem:[#allocation13 + $0x7d0] sm:$0xff]
    %v747 = vld [vmem:[#allocation13 + $0x7d8] sm:$0xff]
    %v748 = vld [vmem:[#allocation13 + $0x7e0] sm:$0xff]
    %v749 = vld [vmem:[#allocation13 + $0x7e8] sm:$0xff]
    %v750 = vld [vmem:[#allocation13 + $0x7f0] sm:$0xff]
    %v751 = vld [vmem:[#allocation13 + $0x7f8] sm:$0xff]
    %v752 = vld [vmem:[#allocation14] sm:$0xff]
    %v754 = vlaneseq
    %v755 = vshrl.u32 %v754, 7
    %v756 = vsub.s32 0, %v755
    %v757 = vrot.slane %v752, %v756
    %v758 = vlaneseq
    %v759 = vshrl.u32 %v758, 7
    %v760 = vsub.s32 1, %v759
    %v761 = vrot.slane %v752, %v760
    %v762 = vlaneseq
    %v763 = vshrl.u32 %v762, 7
    %v764 = vsub.s32 2, %v763
    %v765 = vrot.slane %v752, %v764
    %v766 = vlaneseq
    %v767 = vshrl.u32 %v766, 7
    %v768 = vsub.s32 3, %v767
    %v769 = vrot.slane %v752, %v768
    %v770 = vlaneseq
    %v771 = vshrl.u32 %v770, 7
    %v772 = vsub.s32 4, %v771
    %v773 = vrot.slane %v752, %v772
    %v774 = vlaneseq
    %v775 = vshrl.u32 %v774, 7
    %v776 = vsub.s32 5, %v775
    %v777 = vrot.slane %v752, %v776
    %v778 = vlaneseq
    %v779 = vshrl.u32 %v778, 7
    %v780 = vsub.s32 6, %v779
    %v781 = vrot.slane %v752, %v780
    %v782 = vlaneseq
    %v783 = vshrl.u32 %v782, 7
    %v784 = vsub.s32 7, %v783
    %v785 = vrot.slane %v752, %v784
    %794 = vmatprep.subr.mxu0 %v497
    %795 = vmatpush1.msra.mxu0 %v496
    %796 = vmatprep.subr.mxu0 %v505
    %797 = vmatpush1.msra.mxu0 %v504
    %798 = vmatprep.subr.mxu0 %v513
    %799 = vmatpush1.msra.mxu0 %v512
    %800 = vmatprep.subr.mxu0 %v521
    %801 = vmatpush1.msra.mxu0 %v520
    %802 = vmatprep.subr.mxu0 %v529
    %803 = vmatpush1.msra.mxu0 %v528
    %804 = vmatprep.subr.mxu0 %v537
    %805 = vmatpush1.msra.mxu0 %v536
    %806 = vmatprep.subr.mxu0 %v545
    %807 = vmatpush1.msra.mxu0 %v544
    %808 = vmatprep.subr.mxu0 %v553
    %809 = vmatpush1.msra.mxu0 %v552
    %810 = vmatprep.subr.mxu0 %v561
    %811 = vmatpush1.msra.mxu0 %v560
    %812 = vmatprep.subr.mxu0 %v569
    %813 = vmatpush1.msra.mxu0 %v568
    %814 = vmatprep.subr.mxu0 %v577
    %815 = vmatpush1.msra.mxu0 %v576
    %816 = vmatprep.subr.mxu0 %v585
    %817 = vmatpush1.msra.mxu0 %v584
    %818 = vmatprep.subr.mxu0 %v593
    %819 = vmatpush1.msra.mxu0 %v592
    %820 = vmatprep.subr.mxu0 %v601
    %821 = vmatpush1.msra.mxu0 %v600
    %822 = vmatprep.subr.mxu0 %v609
    %823 = vmatpush1.msra.mxu0 %v608
    %824 = vmatprep.subr.mxu0 %v617
    %825 = vmatpush1.msra.mxu0 %v616
    %826 = vmatprep.subr.mxu0 %v625
    %827 = vmatpush1.msra.mxu0 %v624
    %828 = vmatprep.subr.mxu0 %v633
    %829 = vmatpush1.msra.mxu0 %v632
    %830 = vmatprep.subr.mxu0 %v641
    %831 = vmatpush1.msra.mxu0 %v640
    %832 = vmatprep.subr.mxu0 %v649
    %833 = vmatpush1.msra.mxu0 %v648
    %834 = vmatprep.subr.mxu0 %v657
    %835 = vmatpush1.msra.mxu0 %v656
    %836 = vmatprep.subr.mxu0 %v665
    %837 = vmatpush1.msra.mxu0 %v664
    %838 = vmatprep.subr.mxu0 %v673
    %839 = vmatpush1.msra.mxu0 %v672
    %840 = vmatprep.subr.mxu0 %v681
    %841 = vmatpush1.msra.mxu0 %v680
    %842 = vmatprep.subr.mxu0 %v689
    %843 = vmatpush1.msra.mxu0 %v688
    %844 = vmatprep.subr.mxu0 %v697
    %845 = vmatpush1.msra.mxu0 %v696
    %846 = vmatprep.subr.mxu0 %v705
    %847 = vmatpush1.msra.mxu0 %v704
    %848 = vmatprep.subr.mxu0 %v713
    %849 = vmatpush1.msra.mxu0 %v712
    %850 = vmatprep.subr.mxu0 %v721
    %851 = vmatpush1.msra.mxu0 %v720
    %852 = vmatprep.subr.mxu0 %v729
    %853 = vmatpush1.msra.mxu0 %v728
    %854 = vmatprep.subr.mxu0 %v737
    %855 = vmatpush1.msra.mxu0 %v736
    %856 = vmatprep.subr.mxu0 %v745
    %857 = vmatpush1.msra.mxu0 %v744
    %858 = vmatprep.mubr.f32.mxu0 %v305
    %859 = vmatmul.mubr.f32.gmra.mrb[0].mxu0 %v273
    %v860 = vpop.f32.mrb[0].mxu0
    %v861 = vadd.f32 %v757, %v860
    %v862 = vpop.f32.mrb[0].mxu0
    %v863 = vadd.f32 %v761, %v862
    %864 = vdwg.mxu0
    %865 = vmatprep.subr.mxu0 %v499
    %866 = vmatpush1.msra.mxu0 %v498
    %867 = vmatprep.subr.mxu0 %v507
    %868 = vmatpush1.msra.mxu0 %v506
    %869 = vmatprep.subr.mxu0 %v515
    %870 = vmatpush1.msra.mxu0 %v514
    %871 = vmatprep.subr.mxu0 %v523
    %872 = vmatpush1.msra.mxu0 %v522
    %873 = vmatprep.subr.mxu0 %v531
    %874 = vmatpush1.msra.mxu0 %v530
    %875 = vmatprep.subr.mxu0 %v539
    %876 = vmatpush1.msra.mxu0 %v538
    %877 = vmatprep.subr.mxu0 %v547
    %878 = vmatpush1.msra.mxu0 %v546
    %879 = vmatprep.subr.mxu0 %v555
    %880 = vmatpush1.msra.mxu0 %v554
    %881 = vmatprep.subr.mxu0 %v563
    %882 = vmatpush1.msra.mxu0 %v562
    %883 = vmatprep.subr.mxu0 %v571
    %884 = vmatpush1.msra.mxu0 %v570
    %885 = vmatprep.subr.mxu0 %v579
    %886 = vmatpush1.msra.mxu0 %v578
    %887 = vmatprep.subr.mxu0 %v587
    %888 = vmatpush1.msra.mxu0 %v586
    %889 = vmatprep.subr.mxu0 %v595
    %890 = vmatpush1.msra.mxu0 %v594
    %891 = vmatprep.subr.mxu0 %v603
    %892 = vmatpush1.msra.mxu0 %v602
    %893 = vmatprep.subr.mxu0 %v611
    %894 = vmatpush1.msra.mxu0 %v610
    %895 = vmatprep.subr.mxu0 %v619
    %896 = vmatpush1.msra.mxu0 %v618
    %897 = vmatprep.subr.mxu0 %v627
    %898 = vmatpush1.msra.mxu0 %v626
    %899 = vmatprep.subr.mxu0 %v635
    %900 = vmatpush1.msra.mxu0 %v634
    %901 = vmatprep.subr.mxu0 %v643
    %902 = vmatpush1.msra.mxu0 %v642
    %903 = vmatprep.subr.mxu0 %v651
    %904 = vmatpush1.msra.mxu0 %v650
    %905 = vmatprep.subr.mxu0 %v659
    %906 = vmatpush1.msra.mxu0 %v658
    %907 = vmatprep.subr.mxu0 %v667
    %908 = vmatpush1.msra.mxu0 %v666
    %909 = vmatprep.subr.mxu0 %v675
    %910 = vmatpush1.msra.mxu0 %v674
    %911 = vmatprep.subr.mxu0 %v683
    %912 = vmatpush1.msra.mxu0 %v682
    %913 = vmatprep.subr.mxu0 %v691
    %914 = vmatpush1.msra.mxu0 %v690
    %915 = vmatprep.subr.mxu0 %v699
    %916 = vmatpush1.msra.mxu0 %v698
    %917 = vmatprep.subr.mxu0 %v707
    %918 = vmatpush1.msra.mxu0 %v706
    %919 = vmatprep.subr.mxu0 %v715
    %920 = vmatpush1.msra.mxu0 %v714
    %921 = vmatprep.subr.mxu0 %v723
    %922 = vmatpush1.msra.mxu0 %v722
    %923 = vmatprep.subr.mxu0 %v731
    %924 = vmatpush1.msra.mxu0 %v730
    %925 = vmatprep.subr.mxu0 %v739
    %926 = vmatpush1.msra.mxu0 %v738
    %927 = vmatprep.subr.mxu0 %v747
    %928 = vmatpush1.msra.mxu0 %v746
    %929 = vmatprep.mubr.f32.mxu0 %v305
    %930 = vmatmul.mubr.f32.gmra.mrb[0].mxu0 %v273
    %v931 = vpop.f32.mrb[0].mxu0
    %v932 = vadd.f32 %v765, %v931
    %v933 = vpop.f32.mrb[0].mxu0
    %v934 = vadd.f32 %v769, %v933
    %935 = vdwg.mxu0
    %936 = vmatprep.subr.mxu0 %v501
    %937 = vmatpush1.msra.mxu0 %v500
    %938 = vmatprep.subr.mxu0 %v509
    %939 = vmatpush1.msra.mxu0 %v508
    %940 = vmatprep.subr.mxu0 %v517
    %941 = vmatpush1.msra.mxu0 %v516
    %942 = vmatprep.subr.mxu0 %v525
    %943 = vmatpush1.msra.mxu0 %v524
    %944 = vmatprep.subr.mxu0 %v533
    %945 = vmatpush1.msra.mxu0 %v532
    %946 = vmatprep.subr.mxu0 %v541
    %947 = vmatpush1.msra.mxu0 %v540
    %948 = vmatprep.subr.mxu0 %v549
    %949 = vmatpush1.msra.mxu0 %v548
    %950 = vmatprep.subr.mxu0 %v557
    %951 = vmatpush1.msra.mxu0 %v556
    %952 = vmatprep.subr.mxu0 %v565
    %953 = vmatpush1.msra.mxu0 %v564
    %954 = vmatprep.subr.mxu0 %v573
    %955 = vmatpush1.msra.mxu0 %v572
    %956 = vmatprep.subr.mxu0 %v581
    %957 = vmatpush1.msra.mxu0 %v580
    %958 = vmatprep.subr.mxu0 %v589
    %959 = vmatpush1.msra.mxu0 %v588
    %960 = vmatprep.subr.mxu0 %v597
    %961 = vmatpush1.msra.mxu0 %v596
    %962 = vmatprep.subr.mxu0 %v605
    %963 = vmatpush1.msra.mxu0 %v604
    %964 = vmatprep.subr.mxu0 %v613
    %965 = vmatpush1.msra.mxu0 %v612
    %966 = vmatprep.subr.mxu0 %v621
    %967 = vmatpush1.msra.mxu0 %v620
    %968 = vmatprep.subr.mxu0 %v629
    %969 = vmatpush1.msra.mxu0 %v628
    %970 = vmatprep.subr.mxu0 %v637
    %971 = vmatpush1.msra.mxu0 %v636
    %972 = vmatprep.subr.mxu0 %v645
    %973 = vmatpush1.msra.mxu0 %v644
    %974 = vmatprep.subr.mxu0 %v653
    %975 = vmatpush1.msra.mxu0 %v652
    %976 = vmatprep.subr.mxu0 %v661
    %977 = vmatpush1.msra.mxu0 %v660
    %978 = vmatprep.subr.mxu0 %v669
    %979 = vmatpush1.msra.mxu0 %v668
    %980 = vmatprep.subr.mxu0 %v677
    %981 = vmatpush1.msra.mxu0 %v676
    %982 = vmatprep.subr.mxu0 %v685
    %983 = vmatpush1.msra.mxu0 %v684
    %984 = vmatprep.subr.mxu0 %v693
    %985 = vmatpush1.msra.mxu0 %v692
    %986 = vmatprep.subr.mxu0 %v701
    %987 = vmatpush1.msra.mxu0 %v700
    %988 = vmatprep.subr.mxu0 %v709
    %989 = vmatpush1.msra.mxu0 %v708
    %990 = vmatprep.subr.mxu0 %v717
    %991 = vmatpush1.msra.mxu0 %v716
    %992 = vmatprep.subr.mxu0 %v725
    %993 = vmatpush1.msra.mxu0 %v724
    %994 = vmatprep.subr.mxu0 %v733
    %995 = vmatpush1.msra.mxu0 %v732
    %996 = vmatprep.subr.mxu0 %v741
    %997 = vmatpush1.msra.mxu0 %v740
    %998 = vmatprep.subr.mxu0 %v749
    %999 = vmatpush1.msra.mxu0 %v748
    %1000 = vmatprep.mubr.f32.mxu0 %v305
    %1001 = vmatmul.mubr.f32.gmra.mrb[0].mxu0 %v273
    %v1002 = vpop.f32.mrb[0].mxu0
    %v1003 = vadd.f32 %v773, %v1002
    %v1004 = vpop.f32.mrb[0].mxu0
    %v1005 = vadd.f32 %v777, %v1004
    %1006 = vdwg.mxu0
    %1007 = vmatprep.subr.mxu0 %v503
    %1008 = vmatpush1.msra.mxu0 %v502
    %1009 = vmatprep.subr.mxu0 %v511
    %1010 = vmatpush1.msra.mxu0 %v510
    %1011 = vmatprep.subr.mxu0 %v519
    %1012 = vmatpush1.msra.mxu0 %v518
    %1013 = vmatprep.subr.mxu0 %v527
    %1014 = vmatpush1.msra.mxu0 %v526
    %1015 = vmatprep.subr.mxu0 %v535
    %1016 = vmatpush1.msra.mxu0 %v534
    %1017 = vmatprep.subr.mxu0 %v543
    %1018 = vmatpush1.msra.mxu0 %v542
    %1019 = vmatprep.subr.mxu0 %v551
    %1020 = vmatpush1.msra.mxu0 %v550
    %1021 = vmatprep.subr.mxu0 %v559
    %1022 = vmatpush1.msra.mxu0 %v558
    %1023 = vmatprep.subr.mxu0 %v567
    %1024 = vmatpush1.msra.mxu0 %v566
    %1025 = vmatprep.subr.mxu0 %v575
    %1026 = vmatpush1.msra.mxu0 %v574
    %1027 = vmatprep.subr.mxu0 %v583
    %1028 = vmatpush1.msra.mxu0 %v582
    %1029 = vmatprep.subr.mxu0 %v591
    %1030 = vmatpush1.msra.mxu0 %v590
    %1031 = vmatprep.subr.mxu0 %v599
    %1032 = vmatpush1.msra.mxu0 %v598
    %1033 = vmatprep.subr.mxu0 %v607
    %1034 = vmatpush1.msra.mxu0 %v606
    %1035 = vmatprep.subr.mxu0 %v615
    %1036 = vmatpush1.msra.mxu0 %v614
    %1037 = vmatprep.subr.mxu0 %v623
    %1038 = vmatpush1.msra.mxu0 %v622
    %1039 = vmatprep.subr.mxu0 %v631
    %1040 = vmatpush1.msra.mxu0 %v630
    %1041 = vmatprep.subr.mxu0 %v639
    %1042 = vmatpush1.msra.mxu0 %v638
    %1043 = vmatprep.subr.mxu0 %v647
    %1044 = vmatpush1.msra.mxu0 %v646
    %1045 = vmatprep.subr.mxu0 %v655
    %1046 = vmatpush1.msra.mxu0 %v654
    %1047 = vmatprep.subr.mxu0 %v663
    %1048 = vmatpush1.msra.mxu0 %v662
    %1049 = vmatprep.subr.mxu0 %v671
    %1050 = vmatpush1.msra.mxu0 %v670
    %1051 = vmatprep.subr.mxu0 %v679
    %1052 = vmatpush1.msra.mxu0 %v678
    %1053 = vmatprep.subr.mxu0 %v687
    %1054 = vmatpush1.msra.mxu0 %v686
    %1055 = vmatprep.subr.mxu0 %v695
    %1056 = vmatpush1.msra.mxu0 %v694
    %1057 = vmatprep.subr.mxu0 %v703
    %1058 = vmatpush1.msra.mxu0 %v702
    %1059 = vmatprep.subr.mxu0 %v711
    %1060 = vmatpush1.msra.mxu0 %v710
    %1061 = vmatprep.subr.mxu0 %v719
    %1062 = vmatpush1.msra.mxu0 %v718
    %1063 = vmatprep.subr.mxu0 %v727
    %1064 = vmatpush1.msra.mxu0 %v726
    %1065 = vmatprep.subr.mxu0 %v735
    %1066 = vmatpush1.msra.mxu0 %v734
    %1067 = vmatprep.subr.mxu0 %v743
    %1068 = vmatpush1.msra.mxu0 %v742
    %1069 = vmatprep.subr.mxu0 %v751
    %1070 = vmatpush1.msra.mxu0 %v750
    %1071 = vmatprep.mubr.f32.mxu0 %v305
    %1072 = vmatmul.mubr.f32.gmra.mrb[0].mxu0 %v273
    %v1073 = vpop.f32.mrb[0].mxu0
    %v1074 = vadd.f32 %v781, %v1073
    %v1075 = vpop.f32.mrb[0].mxu0
    %v1076 = vadd.f32 %v785, %v1075
    %1077 = vdwg.mxu0
    %v1078 = vld [vmem:[#allocation16] sm:$0xff]
    %v1079 = vld [vmem:[#allocation17] sm:$0xff]
    %v1080 = vadd.f32 %v861, %v863
    %v1081 = vadd.f32 %v1080, %v932
    %v1082 = vadd.f32 %v1081, %v934
    %v1083 = vadd.f32 %v1082, %v1003
    %v1084 = vadd.f32 %v1083, %v1005
    %v1085 = vadd.f32 %v1084, %v1074
    %v1086 = vadd.f32 %v1085, %v1076
    %1087 = vadd.xlane.f32.xlu0 %v1086
    %v1088 = vpop.xlane.xlu0 %1087
    %v1089 = vrcp.pop 1024.0
    %v1090 = vmul.f32 %v1088, %v1089
    %v1091 = vsub.f32 %v861, %v1090
    %v1092 = vsub.f32 %v863, %v1090
    %v1093 = vsub.f32 %v932, %v1090
    %v1094 = vsub.f32 %v934, %v1090
    %v1095 = vsub.f32 %v1003, %v1090
    %v1096 = vsub.f32 %v1005, %v1090
    %v1097 = vsub.f32 %v1074, %v1090
    %v1098 = vsub.f32 %v1076, %v1090
    %v1099 = vmul.f32 %v1091, %v1091
    %v1100 = vmul.f32 %v1092, %v1092
    %v1101 = vmul.f32 %v1093, %v1093
    %v1102 = vmul.f32 %v1094, %v1094
    %v1103 = vmul.f32 %v1095, %v1095
    %v1104 = vmul.f32 %v1096, %v1096
    %v1105 = vmul.f32 %v1097, %v1097
    %v1106 = vmul.f32 %v1098, %v1098
    %v1107 = vadd.f32 %v1099, %v1100
    %v1108 = vadd.f32 %v1107, %v1101
    %v1109 = vadd.f32 %v1108, %v1102
    %v1110 = vadd.f32 %v1109, %v1103
    %v1111 = vadd.f32 %v1110, %v1104
    %v1112 = vadd.f32 %v1111, %v1105
    %v1113 = vadd.f32 %v1112, %v1106
    %1114 = vadd.xlane.f32.xlu0 %v1113
    %v1115 = vpop.xlane.xlu0 %1114
    %v1116 = vmul.f32 %v1115, %v1089
    %v1117 = vadd.f32 %v1116, 1e-05
    %v1118 = vrsqrt.pop %v1117
    %v1119 = vmul.f32 %v1091, %v1118
    %v1120 = vmul.f32 %v1092, %v1118
    %v1121 = vmul.f32 %v1093, %v1118
    %v1122 = vmul.f32 %v1094, %v1118
    %v1123 = vmul.f32 %v1095, %v1118
    %v1124 = vmul.f32 %v1096, %v1118
    %v1125 = vmul.f32 %v1097, %v1118
    %v1126 = vmul.f32 %v1098, %v1118
    %v1128 = vlaneseq
    %v1129 = vshrl.u32 %v1128, 7
    %v1130 = vsub.s32 0, %v1129
    %v1131 = vrot.slane %v1078, %v1130
    %v1132 = vlaneseq
    %v1133 = vshrl.u32 %v1132, 7
    %v1134 = vsub.s32 1, %v1133
    %v1135 = vrot.slane %v1078, %v1134
    %v1136 = vlaneseq
    %v1137 = vshrl.u32 %v1136, 7
    %v1138 = vsub.s32 2, %v1137
    %v1139 = vrot.slane %v1078, %v1138
    %v1140 = vlaneseq
    %v1141 = vshrl.u32 %v1140, 7
    %v1142 = vsub.s32 3, %v1141
    %v1143 = vrot.slane %v1078, %v1142
    %v1144 = vlaneseq
    %v1145 = vshrl.u32 %v1144, 7
    %v1146 = vsub.s32 4, %v1145
    %v1147 = vrot.slane %v1078, %v1146
    %v1148 = vlaneseq
    %v1149 = vshrl.u32 %v1148, 7
    %v1150 = vsub.s32 5, %v1149
    %v1151 = vrot.slane %v1078, %v1150
    %v1152 = vlaneseq
    %v1153 = vshrl.u32 %v1152, 7
    %v1154 = vsub.s32 6, %v1153
    %v1155 = vrot.slane %v1078, %v1154
    %v1156 = vlaneseq
    %v1157 = vshrl.u32 %v1156, 7
    %v1158 = vsub.s32 7, %v1157
    %v1159 = vrot.slane %v1078, %v1158
    %v1168 = vmul.f32 %v1119, %v1131
    %v1169 = vmul.f32 %v1120, %v1135
    %v1170 = vmul.f32 %v1121, %v1139
    %v1171 = vmul.f32 %v1122, %v1143
    %v1172 = vmul.f32 %v1123, %v1147
    %v1173 = vmul.f32 %v1124, %v1151
    %v1174 = vmul.f32 %v1125, %v1155
    %v1175 = vmul.f32 %v1126, %v1159
    %v1177 = vlaneseq
    %v1178 = vshrl.u32 %v1177, 7
    %v1179 = vsub.s32 0, %v1178
    %v1180 = vrot.slane %v1079, %v1179
    %v1181 = vlaneseq
    %v1182 = vshrl.u32 %v1181, 7
    %v1183 = vsub.s32 1, %v1182
    %v1184 = vrot.slane %v1079, %v1183
    %v1185 = vlaneseq
    %v1186 = vshrl.u32 %v1185, 7
    %v1187 = vsub.s32 2, %v1186
    %v1188 = vrot.slane %v1079, %v1187
    %v1189 = vlaneseq
    %v1190 = vshrl.u32 %v1189, 7
    %v1191 = vsub.s32 3, %v1190
    %v1192 = vrot.slane %v1079, %v1191
    %v1193 = vlaneseq
    %v1194 = vshrl.u32 %v1193, 7
    %v1195 = vsub.s32 4, %v1194
    %v1196 = vrot.slane %v1079, %v1195
    %v1197 = vlaneseq
    %v1198 = vshrl.u32 %v1197, 7
    %v1199 = vsub.s32 5, %v1198
    %v1200 = vrot.slane %v1079, %v1199
    %v1201 = vlaneseq
    %v1202 = vshrl.u32 %v1201, 7
    %v1203 = vsub.s32 6, %v1202
    %v1204 = vrot.slane %v1079, %v1203
    %v1205 = vlaneseq
    %v1206 = vshrl.u32 %v1205, 7
    %v1207 = vsub.s32 7, %v1206
    %v1208 = vrot.slane %v1079, %v1207
    %v1217 = vadd.f32 %v1168, %v1180
    %v1218 = vadd.f32 %v1169, %v1184
    %v1219 = vadd.f32 %v1170, %v1188
    %v1220 = vadd.f32 %v1171, %v1192
    %v1221 = vadd.f32 %v1172, %v1196
    %v1222 = vadd.f32 %v1173, %v1200
    %v1223 = vadd.f32 %v1174, %v1204
    %v1224 = vadd.f32 %v1175, %v1208
    %v1225 = vmax.f32 %v1217, 0.0
    %v1226 = vmax.f32 %v1218, 0.0
    %v1227 = vmax.f32 %v1219, 0.0
    %v1228 = vmax.f32 %v1220, 0.0
    %v1229 = vmax.f32 %v1221, 0.0
    %v1230 = vmax.f32 %v1222, 0.0
    %v1231 = vmax.f32 %v1223, 0.0
    %v1232 = vmax.f32 %v1224, 0.0
    %v1233 = vld [vmem:[#allocation19] sm:$0xff]
    %v1234 = vld [vmem:[#allocation19 + $0x8] sm:$0xff]
    %v1235 = vld [vmem:[#allocation19 + $0x10] sm:$0xff]
    %v1236 = vld [vmem:[#allocation19 + $0x18] sm:$0xff]
    %v1237 = vld [vmem:[#allocation19 + $0x20] sm:$0xff]
    %v1238 = vld [vmem:[#allocation19 + $0x28] sm:$0xff]
    %v1239 = vld [vmem:[#allocation19 + $0x30] sm:$0xff]
    %v1240 = vld [vmem:[#allocation19 + $0x38] sm:$0xff]
    %v1241 = vld [vmem:[#allocation19 + $0x40] sm:$0xff]
    %v1242 = vld [vmem:[#allocation19 + $0x48] sm:$0xff]
    %v1243 = vld [vmem:[#allocation19 + $0x50] sm:$0xff]
    %v1244 = vld [vmem:[#allocation19 + $0x58] sm:$0xff]
    %v1245 = vld [vmem:[#allocation19 + $0x60] sm:$0xff]
    %v1246 = vld [vmem:[#allocation19 + $0x68] sm:$0xff]
    %v1247 = vld [vmem:[#allocation19 + $0x70] sm:$0xff]
    %v1248 = vld [vmem:[#allocation19 + $0x78] sm:$0xff]
    %v1249 = vld [vmem:[#allocation19 + $0x80] sm:$0xff]
    %v1250 = vld [vmem:[#allocation19 + $0x88] sm:$0xff]
    %v1251 = vld [vmem:[#allocation19 + $0x90] sm:$0xff]
    %v1252 = vld [vmem:[#allocation19 + $0x98] sm:$0xff]
    %v1253 = vld [vmem:[#allocation19 + $0xa0] sm:$0xff]
    %v1254 = vld [vmem:[#allocation19 + $0xa8] sm:$0xff]
    %v1255 = vld [vmem:[#allocation19 + $0xb0] sm:$0xff]
    %v1256 = vld [vmem:[#allocation19 + $0xb8] sm:$0xff]
    %v1257 = vld [vmem:[#allocation19 + $0xc0] sm:$0xff]
    %v1258 = vld [vmem:[#allocation19 + $0xc8] sm:$0xff]
    %v1259 = vld [vmem:[#allocation19 + $0xd0] sm:$0xff]
    %v1260 = vld [vmem:[#allocation19 + $0xd8] sm:$0xff]
    %v1261 = vld [vmem:[#allocation19 + $0xe0] sm:$0xff]
    %v1262 = vld [vmem:[#allocation19 + $0xe8] sm:$0xff]
    %v1263 = vld [vmem:[#allocation19 + $0xf0] sm:$0xff]
    %v1264 = vld [vmem:[#allocation19 + $0xf8] sm:$0xff]
    %v1265 = vld [vmem:[#allocation19 + $0x100] sm:$0xff]
    %v1266 = vld [vmem:[#allocation19 + $0x108] sm:$0xff]
    %v1267 = vld [vmem:[#allocation19 + $0x110] sm:$0xff]
    %v1268 = vld [vmem:[#allocation19 + $0x118] sm:$0xff]
    %v1269 = vld [vmem:[#allocation19 + $0x120] sm:$0xff]
    %v1270 = vld [vmem:[#allocation19 + $0x128] sm:$0xff]
    %v1271 = vld [vmem:[#allocation19 + $0x130] sm:$0xff]
    %v1272 = vld [vmem:[#allocation19 + $0x138] sm:$0xff]
    %v1273 = vld [vmem:[#allocation19 + $0x140] sm:$0xff]
    %v1274 = vld [vmem:[#allocation19 + $0x148] sm:$0xff]
    %v1275 = vld [vmem:[#allocation19 + $0x150] sm:$0xff]
    %v1276 = vld [vmem:[#allocation19 + $0x158] sm:$0xff]
    %v1277 = vld [vmem:[#allocation19 + $0x160] sm:$0xff]
    %v1278 = vld [vmem:[#allocation19 + $0x168] sm:$0xff]
    %v1279 = vld [vmem:[#allocation19 + $0x170] sm:$0xff]
    %v1280 = vld [vmem:[#allocation19 + $0x178] sm:$0xff]
    %v1281 = vld [vmem:[#allocation19 + $0x180] sm:$0xff]
    %v1282 = vld [vmem:[#allocation19 + $0x188] sm:$0xff]
    %v1283 = vld [vmem:[#allocation19 + $0x190] sm:$0xff]
    %v1284 = vld [vmem:[#allocation19 + $0x198] sm:$0xff]
    %v1285 = vld [vmem:[#allocation19 + $0x1a0] sm:$0xff]
    %v1286 = vld [vmem:[#allocation19 + $0x1a8] sm:$0xff]
    %v1287 = vld [vmem:[#allocation19 + $0x1b0] sm:$0xff]
    %v1288 = vld [vmem:[#allocation19 + $0x1b8] sm:$0xff]
    %v1289 = vld [vmem:[#allocation19 + $0x1c0] sm:$0xff]
    %v1290 = vld [vmem:[#allocation19 + $0x1c8] sm:$0xff]
    %v1291 = vld [vmem:[#allocation19 + $0x1d0] sm:$0xff]
    %v1292 = vld [vmem:[#allocation19 + $0x1d8] sm:$0xff]
    %v1293 = vld [vmem:[#allocation19 + $0x1e0] sm:$0xff]
    %v1294 = vld [vmem:[#allocation19 + $0x1e8] sm:$0xff]
    %v1295 = vld [vmem:[#allocation19 + $0x1f0] sm:$0xff]
    %v1296 = vld [vmem:[#allocation19 + $0x1f8] sm:$0xff]
    %v1297 = vld [vmem:[#allocation19 + $0x200] sm:$0xff]
    %v1298 = vld [vmem:[#allocation19 + $0x208] sm:$0xff]
    %v1299 = vld [vmem:[#allocation19 + $0x210] sm:$0xff]
    %v1300 = vld [vmem:[#allocation19 + $0x218] sm:$0xff]
    %v1301 = vld [vmem:[#allocation19 + $0x220] sm:$0xff]
    %v1302 = vld [vmem:[#allocation19 + $0x228] sm:$0xff]
    %v1303 = vld [vmem:[#allocation19 + $0x230] sm:$0xff]
    %v1304 = vld [vmem:[#allocation19 + $0x238] sm:$0xff]
    %v1305 = vld [vmem:[#allocation19 + $0x240] sm:$0xff]
    %v1306 = vld [vmem:[#allocation19 + $0x248] sm:$0xff]
    %v1307 = vld [vmem:[#allocation19 + $0x250] sm:$0xff]
    %v1308 = vld [vmem:[#allocation19 + $0x258] sm:$0xff]
    %v1309 = vld [vmem:[#allocation19 + $0x260] sm:$0xff]
    %v1310 = vld [vmem:[#allocation19 + $0x268] sm:$0xff]
    %v1311 = vld [vmem:[#allocation19 + $0x270] sm:$0xff]
    %v1312 = vld [vmem:[#allocation19 + $0x278] sm:$0xff]
    %v1313 = vld [vmem:[#allocation19 + $0x280] sm:$0xff]
    %v1314 = vld [vmem:[#allocation19 + $0x288] sm:$0xff]
    %v1315 = vld [vmem:[#allocation19 + $0x290] sm:$0xff]
    %v1316 = vld [vmem:[#allocation19 + $0x298] sm:$0xff]
    %v1317 = vld [vmem:[#allocation19 + $0x2a0] sm:$0xff]
    %v1318 = vld [vmem:[#allocation19 + $0x2a8] sm:$0xff]
    %v1319 = vld [vmem:[#allocation19 + $0x2b0] sm:$0xff]
    %v1320 = vld [vmem:[#allocation19 + $0x2b8] sm:$0xff]
    %v1321 = vld [vmem:[#allocation19 + $0x2c0] sm:$0xff]
    %v1322 = vld [vmem:[#allocation19 + $0x2c8] sm:$0xff]
    %v1323 = vld [vmem:[#allocation19 + $0x2d0] sm:$0xff]
    %v1324 = vld [vmem:[#allocation19 + $0x2d8] sm:$0xff]
    %v1325 = vld [vmem:[#allocation19 + $0x2e0] sm:$0xff]
    %v1326 = vld [vmem:[#allocation19 + $0x2e8] sm:$0xff]
    %v1327 = vld [vmem:[#allocation19 + $0x2f0] sm:$0xff]
    %v1328 = vld [vmem:[#allocation19 + $0x2f8] sm:$0xff]
    %v1329 = vld [vmem:[#allocation19 + $0x300] sm:$0xff]
    %v1330 = vld [vmem:[#allocation19 + $0x308] sm:$0xff]
    %v1331 = vld [vmem:[#allocation19 + $0x310] sm:$0xff]
    %v1332 = vld [vmem:[#allocation19 + $0x318] sm:$0xff]
    %v1333 = vld [vmem:[#allocation19 + $0x320] sm:$0xff]
    %v1334 = vld [vmem:[#allocation19 + $0x328] sm:$0xff]
    %v1335 = vld [vmem:[#allocation19 + $0x330] sm:$0xff]
    %v1336 = vld [vmem:[#allocation19 + $0x338] sm:$0xff]
    %v1337 = vld [vmem:[#allocation19 + $0x340] sm:$0xff]
    %v1338 = vld [vmem:[#allocation19 + $0x348] sm:$0xff]
    %v1339 = vld [vmem:[#allocation19 + $0x350] sm:$0xff]
    %v1340 = vld [vmem:[#allocation19 + $0x358] sm:$0xff]
    %v1341 = vld [vmem:[#allocation19 + $0x360] sm:$0xff]
    %v1342 = vld [vmem:[#allocation19 + $0x368] sm:$0xff]
    %v1343 = vld [vmem:[#allocation19 + $0x370] sm:$0xff]
    %v1344 = vld [vmem:[#allocation19 + $0x378] sm:$0xff]
    %v1345 = vld [vmem:[#allocation19 + $0x380] sm:$0xff]
    %v1346 = vld [vmem:[#allocation19 + $0x388] sm:$0xff]
    %v1347 = vld [vmem:[#allocation19 + $0x390] sm:$0xff]
    %v1348 = vld [vmem:[#allocation19 + $0x398] sm:$0xff]
    %v1349 = vld [vmem:[#allocation19 + $0x3a0] sm:$0xff]
    %v1350 = vld [vmem:[#allocation19 + $0x3a8] sm:$0xff]
    %v1351 = vld [vmem:[#allocation19 + $0x3b0] sm:$0xff]
    %v1352 = vld [vmem:[#allocation19 + $0x3b8] sm:$0xff]
    %v1353 = vld [vmem:[#allocation19 + $0x3c0] sm:$0xff]
    %v1354 = vld [vmem:[#allocation19 + $0x3c8] sm:$0xff]
    %v1355 = vld [vmem:[#allocation19 + $0x3d0] sm:$0xff]
    %v1356 = vld [vmem:[#allocation19 + $0x3d8] sm:$0xff]
    %v1357 = vld [vmem:[#allocation19 + $0x3e0] sm:$0xff]
    %v1358 = vld [vmem:[#allocation19 + $0x3e8] sm:$0xff]
    %v1359 = vld [vmem:[#allocation19 + $0x3f0] sm:$0xff]
    %v1360 = vld [vmem:[#allocation19 + $0x3f8] sm:$0xff]
    %v1361 = vld [vmem:[#allocation19 + $0x400] sm:$0xff]
    %v1362 = vld [vmem:[#allocation19 + $0x408] sm:$0xff]
    %v1363 = vld [vmem:[#allocation19 + $0x410] sm:$0xff]
    %v1364 = vld [vmem:[#allocation19 + $0x418] sm:$0xff]
    %v1365 = vld [vmem:[#allocation19 + $0x420] sm:$0xff]
    %v1366 = vld [vmem:[#allocation19 + $0x428] sm:$0xff]
    %v1367 = vld [vmem:[#allocation19 + $0x430] sm:$0xff]
    %v1368 = vld [vmem:[#allocation19 + $0x438] sm:$0xff]
    %v1369 = vld [vmem:[#allocation19 + $0x440] sm:$0xff]
    %v1370 = vld [vmem:[#allocation19 + $0x448] sm:$0xff]
    %v1371 = vld [vmem:[#allocation19 + $0x450] sm:$0xff]
    %v1372 = vld [vmem:[#allocation19 + $0x458] sm:$0xff]
    %v1373 = vld [vmem:[#allocation19 + $0x460] sm:$0xff]
    %v1374 = vld [vmem:[#allocation19 + $0x468] sm:$0xff]
    %v1375 = vld [vmem:[#allocation19 + $0x470] sm:$0xff]
    %v1376 = vld [vmem:[#allocation19 + $0x478] sm:$0xff]
    %v1377 = vld [vmem:[#allocation19 + $0x480] sm:$0xff]
    %v1378 = vld [vmem:[#allocation19 + $0x488] sm:$0xff]
    %v1379 = vld [vmem:[#allocation19 + $0x490] sm:$0xff]
    %v1380 = vld [vmem:[#allocation19 + $0x498] sm:$0xff]
    %v1381 = vld [vmem:[#allocation19 + $0x4a0] sm:$0xff]
    %v1382 = vld [vmem:[#allocation19 + $0x4a8] sm:$0xff]
    %v1383 = vld [vmem:[#allocation19 + $0x4b0] sm:$0xff]
    %v1384 = vld [vmem:[#allocation19 + $0x4b8] sm:$0xff]
    %v1385 = vld [vmem:[#allocation19 + $0x4c0] sm:$0xff]
    %v1386 = vld [vmem:[#allocation19 + $0x4c8] sm:$0xff]
    %v1387 = vld [vmem:[#allocation19 + $0x4d0] sm:$0xff]
    %v1388 = vld [vmem:[#allocation19 + $0x4d8] sm:$0xff]
    %v1389 = vld [vmem:[#allocation19 + $0x4e0] sm:$0xff]
    %v1390 = vld [vmem:[#allocation19 + $0x4e8] sm:$0xff]
    %v1391 = vld [vmem:[#allocation19 + $0x4f0] sm:$0xff]
    %v1392 = vld [vmem:[#allocation19 + $0x4f8] sm:$0xff]
    %v1393 = vld [vmem:[#allocation19 + $0x500] sm:$0xff]
    %v1394 = vld [vmem:[#allocation19 + $0x508] sm:$0xff]
    %v1395 = vld [vmem:[#allocation19 + $0x510] sm:$0xff]
    %v1396 = vld [vmem:[#allocation19 + $0x518] sm:$0xff]
    %v1397 = vld [vmem:[#allocation19 + $0x520] sm:$0xff]
    %v1398 = vld [vmem:[#allocation19 + $0x528] sm:$0xff]
    %v1399 = vld [vmem:[#allocation19 + $0x530] sm:$0xff]
    %v1400 = vld [vmem:[#allocation19 + $0x538] sm:$0xff]
    %v1401 = vld [vmem:[#allocation19 + $0x540] sm:$0xff]
    %v1402 = vld [vmem:[#allocation19 + $0x548] sm:$0xff]
    %v1403 = vld [vmem:[#allocation19 + $0x550] sm:$0xff]
    %v1404 = vld [vmem:[#allocation19 + $0x558] sm:$0xff]
    %v1405 = vld [vmem:[#allocation19 + $0x560] sm:$0xff]
    %v1406 = vld [vmem:[#allocation19 + $0x568] sm:$0xff]
    %v1407 = vld [vmem:[#allocation19 + $0x570] sm:$0xff]
    %v1408 = vld [vmem:[#allocation19 + $0x578] sm:$0xff]
    %v1409 = vld [vmem:[#allocation19 + $0x580] sm:$0xff]
    %v1410 = vld [vmem:[#allocation19 + $0x588] sm:$0xff]
    %v1411 = vld [vmem:[#allocation19 + $0x590] sm:$0xff]
    %v1412 = vld [vmem:[#allocation19 + $0x598] sm:$0xff]
    %v1413 = vld [vmem:[#allocation19 + $0x5a0] sm:$0xff]
    %v1414 = vld [vmem:[#allocation19 + $0x5a8] sm:$0xff]
    %v1415 = vld [vmem:[#allocation19 + $0x5b0] sm:$0xff]
    %v1416 = vld [vmem:[#allocation19 + $0x5b8] sm:$0xff]
    %v1417 = vld [vmem:[#allocation19 + $0x5c0] sm:$0xff]
    %v1418 = vld [vmem:[#allocation19 + $0x5c8] sm:$0xff]
    %v1419 = vld [vmem:[#allocation19 + $0x5d0] sm:$0xff]
    %v1420 = vld [vmem:[#allocation19 + $0x5d8] sm:$0xff]
    %v1421 = vld [vmem:[#allocation19 + $0x5e0] sm:$0xff]
    %v1422 = vld [vmem:[#allocation19 + $0x5e8] sm:$0xff]
    %v1423 = vld [vmem:[#allocation19 + $0x5f0] sm:$0xff]
    %v1424 = vld [vmem:[#allocation19 + $0x5f8] sm:$0xff]
    %v1425 = vld [vmem:[#allocation19 + $0x600] sm:$0xff]
    %v1426 = vld [vmem:[#allocation19 + $0x608] sm:$0xff]
    %v1427 = vld [vmem:[#allocation19 + $0x610] sm:$0xff]
    %v1428 = vld [vmem:[#allocation19 + $0x618] sm:$0xff]
    %v1429 = vld [vmem:[#allocation19 + $0x620] sm:$0xff]
    %v1430 = vld [vmem:[#allocation19 + $0x628] sm:$0xff]
    %v1431 = vld [vmem:[#allocation19 + $0x630] sm:$0xff]
    %v1432 = vld [vmem:[#allocation19 + $0x638] sm:$0xff]
    %v1433 = vld [vmem:[#allocation19 + $0x640] sm:$0xff]
    %v1434 = vld [vmem:[#allocation19 + $0x648] sm:$0xff]
    %v1435 = vld [vmem:[#allocation19 + $0x650] sm:$0xff]
    %v1436 = vld [vmem:[#allocation19 + $0x658] sm:$0xff]
    %v1437 = vld [vmem:[#allocation19 + $0x660] sm:$0xff]
    %v1438 = vld [vmem:[#allocation19 + $0x668] sm:$0xff]
    %v1439 = vld [vmem:[#allocation19 + $0x670] sm:$0xff]
    %v1440 = vld [vmem:[#allocation19 + $0x678] sm:$0xff]
    %v1441 = vld [vmem:[#allocation19 + $0x680] sm:$0xff]
    %v1442 = vld [vmem:[#allocation19 + $0x688] sm:$0xff]
    %v1443 = vld [vmem:[#allocation19 + $0x690] sm:$0xff]
    %v1444 = vld [vmem:[#allocation19 + $0x698] sm:$0xff]
    %v1445 = vld [vmem:[#allocation19 + $0x6a0] sm:$0xff]
    %v1446 = vld [vmem:[#allocation19 + $0x6a8] sm:$0xff]
    %v1447 = vld [vmem:[#allocation19 + $0x6b0] sm:$0xff]
    %v1448 = vld [vmem:[#allocation19 + $0x6b8] sm:$0xff]
    %v1449 = vld [vmem:[#allocation19 + $0x6c0] sm:$0xff]
    %v1450 = vld [vmem:[#allocation19 + $0x6c8] sm:$0xff]
    %v1451 = vld [vmem:[#allocation19 + $0x6d0] sm:$0xff]
    %v1452 = vld [vmem:[#allocation19 + $0x6d8] sm:$0xff]
    %v1453 = vld [vmem:[#allocation19 + $0x6e0] sm:$0xff]
    %v1454 = vld [vmem:[#allocation19 + $0x6e8] sm:$0xff]
    %v1455 = vld [vmem:[#allocation19 + $0x6f0] sm:$0xff]
    %v1456 = vld [vmem:[#allocation19 + $0x6f8] sm:$0xff]
    %v1457 = vld [vmem:[#allocation19 + $0x700] sm:$0xff]
    %v1458 = vld [vmem:[#allocation19 + $0x708] sm:$0xff]
    %v1459 = vld [vmem:[#allocation19 + $0x710] sm:$0xff]
    %v1460 = vld [vmem:[#allocation19 + $0x718] sm:$0xff]
    %v1461 = vld [vmem:[#allocation19 + $0x720] sm:$0xff]
    %v1462 = vld [vmem:[#allocation19 + $0x728] sm:$0xff]
    %v1463 = vld [vmem:[#allocation19 + $0x730] sm:$0xff]
    %v1464 = vld [vmem:[#allocation19 + $0x738] sm:$0xff]
    %v1465 = vld [vmem:[#allocation19 + $0x740] sm:$0xff]
    %v1466 = vld [vmem:[#allocation19 + $0x748] sm:$0xff]
    %v1467 = vld [vmem:[#allocation19 + $0x750] sm:$0xff]
    %v1468 = vld [vmem:[#allocation19 + $0x758] sm:$0xff]
    %v1469 = vld [vmem:[#allocation19 + $0x760] sm:$0xff]
    %v1470 = vld [vmem:[#allocation19 + $0x768] sm:$0xff]
    %v1471 = vld [vmem:[#allocation19 + $0x770] sm:$0xff]
    %v1472 = vld [vmem:[#allocation19 + $0x778] sm:$0xff]
    %v1473 = vld [vmem:[#allocation19 + $0x780] sm:$0xff]
    %v1474 = vld [vmem:[#allocation19 + $0x788] sm:$0xff]
    %v1475 = vld [vmem:[#allocation19 + $0x790] sm:$0xff]
    %v1476 = vld [vmem:[#allocation19 + $0x798] sm:$0xff]
    %v1477 = vld [vmem:[#allocation19 + $0x7a0] sm:$0xff]
    %v1478 = vld [vmem:[#allocation19 + $0x7a8] sm:$0xff]
    %v1479 = vld [vmem:[#allocation19 + $0x7b0] sm:$0xff]
    %v1480 = vld [vmem:[#allocation19 + $0x7b8] sm:$0xff]
    %v1481 = vld [vmem:[#allocation19 + $0x7c0] sm:$0xff]
    %v1482 = vld [vmem:[#allocation19 + $0x7c8] sm:$0xff]
    %v1483 = vld [vmem:[#allocation19 + $0x7d0] sm:$0xff]
    %v1484 = vld [vmem:[#allocation19 + $0x7d8] sm:$0xff]
    %v1485 = vld [vmem:[#allocation19 + $0x7e0] sm:$0xff]
    %v1486 = vld [vmem:[#allocation19 + $0x7e8] sm:$0xff]
    %v1487 = vld [vmem:[#allocation19 + $0x7f0] sm:$0xff]
    %v1488 = vld [vmem:[#allocation19 + $0x7f8] sm:$0xff]
    %v1489 = vld [vmem:[#allocation19 + $0x800] sm:$0xff]
    %v1490 = vld [vmem:[#allocation19 + $0x808] sm:$0xff]
    %v1491 = vld [vmem:[#allocation19 + $0x810] sm:$0xff]
    %v1492 = vld [vmem:[#allocation19 + $0x818] sm:$0xff]
    %v1493 = vld [vmem:[#allocation19 + $0x820] sm:$0xff]
    %v1494 = vld [vmem:[#allocation19 + $0x828] sm:$0xff]
    %v1495 = vld [vmem:[#allocation19 + $0x830] sm:$0xff]
    %v1496 = vld [vmem:[#allocation19 + $0x838] sm:$0xff]
    %v1497 = vld [vmem:[#allocation19 + $0x840] sm:$0xff]
    %v1498 = vld [vmem:[#allocation19 + $0x848] sm:$0xff]
    %v1499 = vld [vmem:[#allocation19 + $0x850] sm:$0xff]
    %v1500 = vld [vmem:[#allocation19 + $0x858] sm:$0xff]
    %v1501 = vld [vmem:[#allocation19 + $0x860] sm:$0xff]
    %v1502 = vld [vmem:[#allocation19 + $0x868] sm:$0xff]
    %v1503 = vld [vmem:[#allocation19 + $0x870] sm:$0xff]
    %v1504 = vld [vmem:[#allocation19 + $0x878] sm:$0xff]
    %v1505 = vld [vmem:[#allocation19 + $0x880] sm:$0xff]
    %v1506 = vld [vmem:[#allocation19 + $0x888] sm:$0xff]
    %v1507 = vld [vmem:[#allocation19 + $0x890] sm:$0xff]
    %v1508 = vld [vmem:[#allocation19 + $0x898] sm:$0xff]
    %v1509 = vld [vmem:[#allocation19 + $0x8a0] sm:$0xff]
    %v1510 = vld [vmem:[#allocation19 + $0x8a8] sm:$0xff]
    %v1511 = vld [vmem:[#allocation19 + $0x8b0] sm:$0xff]
    %v1512 = vld [vmem:[#allocation19 + $0x8b8] sm:$0xff]
    %v1513 = vld [vmem:[#allocation19 + $0x8c0] sm:$0xff]
    %v1514 = vld [vmem:[#allocation19 + $0x8c8] sm:$0xff]
    %v1515 = vld [vmem:[#allocation19 + $0x8d0] sm:$0xff]
    %v1516 = vld [vmem:[#allocation19 + $0x8d8] sm:$0xff]
    %v1517 = vld [vmem:[#allocation19 + $0x8e0] sm:$0xff]
    %v1518 = vld [vmem:[#allocation19 + $0x8e8] sm:$0xff]
    %v1519 = vld [vmem:[#allocation19 + $0x8f0] sm:$0xff]
    %v1520 = vld [vmem:[#allocation19 + $0x8f8] sm:$0xff]
    %v1521 = vld [vmem:[#allocation19 + $0x900] sm:$0xff]
    %v1522 = vld [vmem:[#allocation19 + $0x908] sm:$0xff]
    %v1523 = vld [vmem:[#allocation19 + $0x910] sm:$0xff]
    %v1524 = vld [vmem:[#allocation19 + $0x918] sm:$0xff]
    %v1525 = vld [vmem:[#allocation19 + $0x920] sm:$0xff]
    %v1526 = vld [vmem:[#allocation19 + $0x928] sm:$0xff]
    %v1527 = vld [vmem:[#allocation19 + $0x930] sm:$0xff]
    %v1528 = vld [vmem:[#allocation19 + $0x938] sm:$0xff]
    %v1529 = vld [vmem:[#allocation19 + $0x940] sm:$0xff]
    %v1530 = vld [vmem:[#allocation19 + $0x948] sm:$0xff]
    %v1531 = vld [vmem:[#allocation19 + $0x950] sm:$0xff]
    %v1532 = vld [vmem:[#allocation19 + $0x958] sm:$0xff]
    %v1533 = vld [vmem:[#allocation19 + $0x960] sm:$0xff]
    %v1534 = vld [vmem:[#allocation19 + $0x968] sm:$0xff]
    %v1535 = vld [vmem:[#allocation19 + $0x970] sm:$0xff]
    %v1536 = vld [vmem:[#allocation19 + $0x978] sm:$0xff]
    %v1537 = vld [vmem:[#allocation19 + $0x980] sm:$0xff]
    %v1538 = vld [vmem:[#allocation19 + $0x988] sm:$0xff]
    %v1539 = vld [vmem:[#allocation19 + $0x990] sm:$0xff]
    %v1540 = vld [vmem:[#allocation19 + $0x998] sm:$0xff]
    %v1541 = vld [vmem:[#allocation19 + $0x9a0] sm:$0xff]
    %v1542 = vld [vmem:[#allocation19 + $0x9a8] sm:$0xff]
    %v1543 = vld [vmem:[#allocation19 + $0x9b0] sm:$0xff]
    %v1544 = vld [vmem:[#allocation19 + $0x9b8] sm:$0xff]
    %v1545 = vld [vmem:[#allocation19 + $0x9c0] sm:$0xff]
    %v1546 = vld [vmem:[#allocation19 + $0x9c8] sm:$0xff]
    %v1547 = vld [vmem:[#allocation19 + $0x9d0] sm:$0xff]
    %v1548 = vld [vmem:[#allocation19 + $0x9d8] sm:$0xff]
    %v1549 = vld [vmem:[#allocation19 + $0x9e0] sm:$0xff]
    %v1550 = vld [vmem:[#allocation19 + $0x9e8] sm:$0xff]
    %v1551 = vld [vmem:[#allocation19 + $0x9f0] sm:$0xff]
    %v1552 = vld [vmem:[#allocation19 + $0x9f8] sm:$0xff]
    %v1553 = vld [vmem:[#allocation19 + $0xa00] sm:$0xff]
    %v1554 = vld [vmem:[#allocation19 + $0xa08] sm:$0xff]
    %v1555 = vld [vmem:[#allocation19 + $0xa10] sm:$0xff]
    %v1556 = vld [vmem:[#allocation19 + $0xa18] sm:$0xff]
    %v1557 = vld [vmem:[#allocation19 + $0xa20] sm:$0xff]
    %v1558 = vld [vmem:[#allocation19 + $0xa28] sm:$0xff]
    %v1559 = vld [vmem:[#allocation19 + $0xa30] sm:$0xff]
    %v1560 = vld [vmem:[#allocation19 + $0xa38] sm:$0xff]
    %v1561 = vld [vmem:[#allocation19 + $0xa40] sm:$0xff]
    %v1562 = vld [vmem:[#allocation19 + $0xa48] sm:$0xff]
    %v1563 = vld [vmem:[#allocation19 + $0xa50] sm:$0xff]
    %v1564 = vld [vmem:[#allocation19 + $0xa58] sm:$0xff]
    %v1565 = vld [vmem:[#allocation19 + $0xa60] sm:$0xff]
    %v1566 = vld [vmem:[#allocation19 + $0xa68] sm:$0xff]
    %v1567 = vld [vmem:[#allocation19 + $0xa70] sm:$0xff]
    %v1568 = vld [vmem:[#allocation19 + $0xa78] sm:$0xff]
    %v1569 = vld [vmem:[#allocation19 + $0xa80] sm:$0xff]
    %v1570 = vld [vmem:[#allocation19 + $0xa88] sm:$0xff]
    %v1571 = vld [vmem:[#allocation19 + $0xa90] sm:$0xff]
    %v1572 = vld [vmem:[#allocation19 + $0xa98] sm:$0xff]
    %v1573 = vld [vmem:[#allocation19 + $0xaa0] sm:$0xff]
    %v1574 = vld [vmem:[#allocation19 + $0xaa8] sm:$0xff]
    %v1575 = vld [vmem:[#allocation19 + $0xab0] sm:$0xff]
    %v1576 = vld [vmem:[#allocation19 + $0xab8] sm:$0xff]
    %v1577 = vld [vmem:[#allocation19 + $0xac0] sm:$0xff]
    %v1578 = vld [vmem:[#allocation19 + $0xac8] sm:$0xff]
    %v1579 = vld [vmem:[#allocation19 + $0xad0] sm:$0xff]
    %v1580 = vld [vmem:[#allocation19 + $0xad8] sm:$0xff]
    %v1581 = vld [vmem:[#allocation19 + $0xae0] sm:$0xff]
    %v1582 = vld [vmem:[#allocation19 + $0xae8] sm:$0xff]
    %v1583 = vld [vmem:[#allocation19 + $0xaf0] sm:$0xff]
    %v1584 = vld [vmem:[#allocation19 + $0xaf8] sm:$0xff]
    %v1585 = vld [vmem:[#allocation19 + $0xb00] sm:$0xff]
    %v1586 = vld [vmem:[#allocation19 + $0xb08] sm:$0xff]
    %v1587 = vld [vmem:[#allocation19 + $0xb10] sm:$0xff]
    %v1588 = vld [vmem:[#allocation19 + $0xb18] sm:$0xff]
    %v1589 = vld [vmem:[#allocation19 + $0xb20] sm:$0xff]
    %v1590 = vld [vmem:[#allocation19 + $0xb28] sm:$0xff]
    %v1591 = vld [vmem:[#allocation19 + $0xb30] sm:$0xff]
    %v1592 = vld [vmem:[#allocation19 + $0xb38] sm:$0xff]
    %v1593 = vld [vmem:[#allocation19 + $0xb40] sm:$0xff]
    %v1594 = vld [vmem:[#allocation19 + $0xb48] sm:$0xff]
    %v1595 = vld [vmem:[#allocation19 + $0xb50] sm:$0xff]
    %v1596 = vld [vmem:[#allocation19 + $0xb58] sm:$0xff]
    %v1597 = vld [vmem:[#allocation19 + $0xb60] sm:$0xff]
    %v1598 = vld [vmem:[#allocation19 + $0xb68] sm:$0xff]
    %v1599 = vld [vmem:[#allocation19 + $0xb70] sm:$0xff]
    %v1600 = vld [vmem:[#allocation19 + $0xb78] sm:$0xff]
    %v1601 = vld [vmem:[#allocation19 + $0xb80] sm:$0xff]
    %v1602 = vld [vmem:[#allocation19 + $0xb88] sm:$0xff]
    %v1603 = vld [vmem:[#allocation19 + $0xb90] sm:$0xff]
    %v1604 = vld [vmem:[#allocation19 + $0xb98] sm:$0xff]
    %v1605 = vld [vmem:[#allocation19 + $0xba0] sm:$0xff]
    %v1606 = vld [vmem:[#allocation19 + $0xba8] sm:$0xff]
    %v1607 = vld [vmem:[#allocation19 + $0xbb0] sm:$0xff]
    %v1608 = vld [vmem:[#allocation19 + $0xbb8] sm:$0xff]
    %v1609 = vld [vmem:[#allocation19 + $0xbc0] sm:$0xff]
    %v1610 = vld [vmem:[#allocation19 + $0xbc8] sm:$0xff]
    %v1611 = vld [vmem:[#allocation19 + $0xbd0] sm:$0xff]
    %v1612 = vld [vmem:[#allocation19 + $0xbd8] sm:$0xff]
    %v1613 = vld [vmem:[#allocation19 + $0xbe0] sm:$0xff]
    %v1614 = vld [vmem:[#allocation19 + $0xbe8] sm:$0xff]
    %v1615 = vld [vmem:[#allocation19 + $0xbf0] sm:$0xff]
    %v1616 = vld [vmem:[#allocation19 + $0xbf8] sm:$0xff]
    %v1617 = vld [vmem:[#allocation19 + $0xc00] sm:$0xff]
    %v1618 = vld [vmem:[#allocation19 + $0xc08] sm:$0xff]
    %v1619 = vld [vmem:[#allocation19 + $0xc10] sm:$0xff]
    %v1620 = vld [vmem:[#allocation19 + $0xc18] sm:$0xff]
    %v1621 = vld [vmem:[#allocation19 + $0xc20] sm:$0xff]
    %v1622 = vld [vmem:[#allocation19 + $0xc28] sm:$0xff]
    %v1623 = vld [vmem:[#allocation19 + $0xc30] sm:$0xff]
    %v1624 = vld [vmem:[#allocation19 + $0xc38] sm:$0xff]
    %v1625 = vld [vmem:[#allocation19 + $0xc40] sm:$0xff]
    %v1626 = vld [vmem:[#allocation19 + $0xc48] sm:$0xff]
    %v1627 = vld [vmem:[#allocation19 + $0xc50] sm:$0xff]
    %v1628 = vld [vmem:[#allocation19 + $0xc58] sm:$0xff]
    %v1629 = vld [vmem:[#allocation19 + $0xc60] sm:$0xff]
    %v1630 = vld [vmem:[#allocation19 + $0xc68] sm:$0xff]
    %v1631 = vld [vmem:[#allocation19 + $0xc70] sm:$0xff]
    %v1632 = vld [vmem:[#allocation19 + $0xc78] sm:$0xff]
    %v1633 = vld [vmem:[#allocation19 + $0xc80] sm:$0xff]
    %v1634 = vld [vmem:[#allocation19 + $0xc88] sm:$0xff]
    %v1635 = vld [vmem:[#allocation19 + $0xc90] sm:$0xff]
    %v1636 = vld [vmem:[#allocation19 + $0xc98] sm:$0xff]
    %v1637 = vld [vmem:[#allocation19 + $0xca0] sm:$0xff]
    %v1638 = vld [vmem:[#allocation19 + $0xca8] sm:$0xff]
    %v1639 = vld [vmem:[#allocation19 + $0xcb0] sm:$0xff]
    %v1640 = vld [vmem:[#allocation19 + $0xcb8] sm:$0xff]
    %v1641 = vld [vmem:[#allocation19 + $0xcc0] sm:$0xff]
    %v1642 = vld [vmem:[#allocation19 + $0xcc8] sm:$0xff]
    %v1643 = vld [vmem:[#allocation19 + $0xcd0] sm:$0xff]
    %v1644 = vld [vmem:[#allocation19 + $0xcd8] sm:$0xff]
    %v1645 = vld [vmem:[#allocation19 + $0xce0] sm:$0xff]
    %v1646 = vld [vmem:[#allocation19 + $0xce8] sm:$0xff]
    %v1647 = vld [vmem:[#allocation19 + $0xcf0] sm:$0xff]
    %v1648 = vld [vmem:[#allocation19 + $0xcf8] sm:$0xff]
    %v1649 = vld [vmem:[#allocation19 + $0xd00] sm:$0xff]
    %v1650 = vld [vmem:[#allocation19 + $0xd08] sm:$0xff]
    %v1651 = vld [vmem:[#allocation19 + $0xd10] sm:$0xff]
    %v1652 = vld [vmem:[#allocation19 + $0xd18] sm:$0xff]
    %v1653 = vld [vmem:[#allocation19 + $0xd20] sm:$0xff]
    %v1654 = vld [vmem:[#allocation19 + $0xd28] sm:$0xff]
    %v1655 = vld [vmem:[#allocation19 + $0xd30] sm:$0xff]
    %v1656 = vld [vmem:[#allocation19 + $0xd38] sm:$0xff]
    %v1657 = vld [vmem:[#allocation19 + $0xd40] sm:$0xff]
    %v1658 = vld [vmem:[#allocation19 + $0xd48] sm:$0xff]
    %v1659 = vld [vmem:[#allocation19 + $0xd50] sm:$0xff]
    %v1660 = vld [vmem:[#allocation19 + $0xd58] sm:$0xff]
    %v1661 = vld [vmem:[#allocation19 + $0xd60] sm:$0xff]
    %v1662 = vld [vmem:[#allocation19 + $0xd68] sm:$0xff]
    %v1663 = vld [vmem:[#allocation19 + $0xd70] sm:$0xff]
    %v1664 = vld [vmem:[#allocation19 + $0xd78] sm:$0xff]
    %v1665 = vld [vmem:[#allocation19 + $0xd80] sm:$0xff]
    %v1666 = vld [vmem:[#allocation19 + $0xd88] sm:$0xff]
    %v1667 = vld [vmem:[#allocation19 + $0xd90] sm:$0xff]
    %v1668 = vld [vmem:[#allocation19 + $0xd98] sm:$0xff]
    %v1669 = vld [vmem:[#allocation19 + $0xda0] sm:$0xff]
    %v1670 = vld [vmem:[#allocation19 + $0xda8] sm:$0xff]
    %v1671 = vld [vmem:[#allocation19 + $0xdb0] sm:$0xff]
    %v1672 = vld [vmem:[#allocation19 + $0xdb8] sm:$0xff]
    %v1673 = vld [vmem:[#allocation19 + $0xdc0] sm:$0xff]
    %v1674 = vld [vmem:[#allocation19 + $0xdc8] sm:$0xff]
    %v1675 = vld [vmem:[#allocation19 + $0xdd0] sm:$0xff]
    %v1676 = vld [vmem:[#allocation19 + $0xdd8] sm:$0xff]
    %v1677 = vld [vmem:[#allocation19 + $0xde0] sm:$0xff]
    %v1678 = vld [vmem:[#allocation19 + $0xde8] sm:$0xff]
    %v1679 = vld [vmem:[#allocation19 + $0xdf0] sm:$0xff]
    %v1680 = vld [vmem:[#allocation19 + $0xdf8] sm:$0xff]
    %v1681 = vld [vmem:[#allocation19 + $0xe00] sm:$0xff]
    %v1682 = vld [vmem:[#allocation19 + $0xe08] sm:$0xff]
    %v1683 = vld [vmem:[#allocation19 + $0xe10] sm:$0xff]
    %v1684 = vld [vmem:[#allocation19 + $0xe18] sm:$0xff]
    %v1685 = vld [vmem:[#allocation19 + $0xe20] sm:$0xff]
    %v1686 = vld [vmem:[#allocation19 + $0xe28] sm:$0xff]
    %v1687 = vld [vmem:[#allocation19 + $0xe30] sm:$0xff]
    %v1688 = vld [vmem:[#allocation19 + $0xe38] sm:$0xff]
    %v1689 = vld [vmem:[#allocation19 + $0xe40] sm:$0xff]
    %v1690 = vld [vmem:[#allocation19 + $0xe48] sm:$0xff]
    %v1691 = vld [vmem:[#allocation19 + $0xe50] sm:$0xff]
    %v1692 = vld [vmem:[#allocation19 + $0xe58] sm:$0xff]
    %v1693 = vld [vmem:[#allocation19 + $0xe60] sm:$0xff]
    %v1694 = vld [vmem:[#allocation19 + $0xe68] sm:$0xff]
    %v1695 = vld [vmem:[#allocation19 + $0xe70] sm:$0xff]
    %v1696 = vld [vmem:[#allocation19 + $0xe78] sm:$0xff]
    %v1697 = vld [vmem:[#allocation19 + $0xe80] sm:$0xff]
    %v1698 = vld [vmem:[#allocation19 + $0xe88] sm:$0xff]
    %v1699 = vld [vmem:[#allocation19 + $0xe90] sm:$0xff]
    %v1700 = vld [vmem:[#allocation19 + $0xe98] sm:$0xff]
    %v1701 = vld [vmem:[#allocation19 + $0xea0] sm:$0xff]
    %v1702 = vld [vmem:[#allocation19 + $0xea8] sm:$0xff]
    %v1703 = vld [vmem:[#allocation19 + $0xeb0] sm:$0xff]
    %v1704 = vld [vmem:[#allocation19 + $0xeb8] sm:$0xff]
    %v1705 = vld [vmem:[#allocation19 + $0xec0] sm:$0xff]
    %v1706 = vld [vmem:[#allocation19 + $0xec8] sm:$0xff]
    %v1707 = vld [vmem:[#allocation19 + $0xed0] sm:$0xff]
    %v1708 = vld [vmem:[#allocation19 + $0xed8] sm:$0xff]
    %v1709 = vld [vmem:[#allocation19 + $0xee0] sm:$0xff]
    %v1710 = vld [vmem:[#allocation19 + $0xee8] sm:$0xff]
    %v1711 = vld [vmem:[#allocation19 + $0xef0] sm:$0xff]
    %v1712 = vld [vmem:[#allocation19 + $0xef8] sm:$0xff]
    %v1713 = vld [vmem:[#allocation19 + $0xf00] sm:$0xff]
    %v1714 = vld [vmem:[#allocation19 + $0xf08] sm:$0xff]
    %v1715 = vld [vmem:[#allocation19 + $0xf10] sm:$0xff]
    %v1716 = vld [vmem:[#allocation19 + $0xf18] sm:$0xff]
    %v1717 = vld [vmem:[#allocation19 + $0xf20] sm:$0xff]
    %v1718 = vld [vmem:[#allocation19 + $0xf28] sm:$0xff]
    %v1719 = vld [vmem:[#allocation19 + $0xf30] sm:$0xff]
    %v1720 = vld [vmem:[#allocation19 + $0xf38] sm:$0xff]
    %v1721 = vld [vmem:[#allocation19 + $0xf40] sm:$0xff]
    %v1722 = vld [vmem:[#allocation19 + $0xf48] sm:$0xff]
    %v1723 = vld [vmem:[#allocation19 + $0xf50] sm:$0xff]
    %v1724 = vld [vmem:[#allocation19 + $0xf58] sm:$0xff]
    %v1725 = vld [vmem:[#allocation19 + $0xf60] sm:$0xff]
    %v1726 = vld [vmem:[#allocation19 + $0xf68] sm:$0xff]
    %v1727 = vld [vmem:[#allocation19 + $0xf70] sm:$0xff]
    %v1728 = vld [vmem:[#allocation19 + $0xf78] sm:$0xff]
    %v1729 = vld [vmem:[#allocation19 + $0xf80] sm:$0xff]
    %v1730 = vld [vmem:[#allocation19 + $0xf88] sm:$0xff]
    %v1731 = vld [vmem:[#allocation19 + $0xf90] sm:$0xff]
    %v1732 = vld [vmem:[#allocation19 + $0xf98] sm:$0xff]
    %v1733 = vld [vmem:[#allocation19 + $0xfa0] sm:$0xff]
    %v1734 = vld [vmem:[#allocation19 + $0xfa8] sm:$0xff]
    %v1735 = vld [vmem:[#allocation19 + $0xfb0] sm:$0xff]
    %v1736 = vld [vmem:[#allocation19 + $0xfb8] sm:$0xff]
    %v1737 = vld [vmem:[#allocation19 + $0xfc0] sm:$0xff]
    %v1738 = vld [vmem:[#allocation19 + $0xfc8] sm:$0xff]
    %v1739 = vld [vmem:[#allocation19 + $0xfd0] sm:$0xff]
    %v1740 = vld [vmem:[#allocation19 + $0xfd8] sm:$0xff]
    %v1741 = vld [vmem:[#allocation19 + $0xfe0] sm:$0xff]
    %v1742 = vld [vmem:[#allocation19 + $0xfe8] sm:$0xff]
    %v1743 = vld [vmem:[#allocation19 + $0xff0] sm:$0xff]
    %v1744 = vld [vmem:[#allocation19 + $0xff8] sm:$0xff]
    %v1745 = vld [vmem:[#allocation20] sm:$0xf]
    %v1747 = vlaneseq
    %v1748 = vshrl.u32 %v1747, 7
    %v1749 = vsub.s32 0, %v1748
    %v1750 = vrot.slane %v1745, %v1749
    %v1751 = vlaneseq
    %v1752 = vshrl.u32 %v1751, 7
    %v1753 = vsub.s32 1, %v1752
    %v1754 = vrot.slane %v1745, %v1753
    %v1755 = vlaneseq
    %v1756 = vshrl.u32 %v1755, 7
    %v1757 = vsub.s32 2, %v1756
    %v1758 = vrot.slane %v1745, %v1757
    %v1759 = vlaneseq
    %v1760 = vshrl.u32 %v1759, 7
    %v1761 = vsub.s32 3, %v1760
    %v1762 = vrot.slane %v1745, %v1761
    %1767 = vmatprep.subr.mxu0 %v1234
    %1768 = vmatpush1.msra.mxu0 %v1233
    %1769 = vmatprep.subr.mxu0 %v1238
    %1770 = vmatpush1.msra.mxu0 %v1237
    %1771 = vmatprep.subr.mxu0 %v1242
    %1772 = vmatpush1.msra.mxu0 %v1241
    %1773 = vmatprep.subr.mxu0 %v1246
    %1774 = vmatpush1.msra.mxu0 %v1245
    %1775 = vmatprep.subr.mxu0 %v1250
    %1776 = vmatpush1.msra.mxu0 %v1249
    %1777 = vmatprep.subr.mxu0 %v1254
    %1778 = vmatpush1.msra.mxu0 %v1253
    %1779 = vmatprep.subr.mxu0 %v1258
    %1780 = vmatpush1.msra.mxu0 %v1257
    %1781 = vmatprep.subr.mxu0 %v1262
    %1782 = vmatpush1.msra.mxu0 %v1261
    %1783 = vmatprep.subr.mxu0 %v1266
    %1784 = vmatpush1.msra.mxu0 %v1265
    %1785 = vmatprep.subr.mxu0 %v1270
    %1786 = vmatpush1.msra.mxu0 %v1269
    %1787 = vmatprep.subr.mxu0 %v1274
    %1788 = vmatpush1.msra.mxu0 %v1273
    %1789 = vmatprep.subr.mxu0 %v1278
    %1790 = vmatpush1.msra.mxu0 %v1277
    %1791 = vmatprep.subr.mxu0 %v1282
    %1792 = vmatpush1.msra.mxu0 %v1281
    %1793 = vmatprep.subr.mxu0 %v1286
    %1794 = vmatpush1.msra.mxu0 %v1285
    %1795 = vmatprep.subr.mxu0 %v1290
    %1796 = vmatpush1.msra.mxu0 %v1289
    %1797 = vmatprep.subr.mxu0 %v1294
    %1798 = vmatpush1.msra.mxu0 %v1293
    %1799 = vmatprep.subr.mxu0 %v1298
    %1800 = vmatpush1.msra.mxu0 %v1297
    %1801 = vmatprep.subr.mxu0 %v1302
    %1802 = vmatpush1.msra.mxu0 %v1301
    %1803 = vmatprep.subr.mxu0 %v1306
    %1804 = vmatpush1.msra.mxu0 %v1305
    %1805 = vmatprep.subr.mxu0 %v1310
    %1806 = vmatpush1.msra.mxu0 %v1309
    %1807 = vmatprep.subr.mxu0 %v1314
    %1808 = vmatpush1.msra.mxu0 %v1313
    %1809 = vmatprep.subr.mxu0 %v1318
    %1810 = vmatpush1.msra.mxu0 %v1317
    %1811 = vmatprep.subr.mxu0 %v1322
    %1812 = vmatpush1.msra.mxu0 %v1321
    %1813 = vmatprep.subr.mxu0 %v1326
    %1814 = vmatpush1.msra.mxu0 %v1325
    %1815 = vmatprep.subr.mxu0 %v1330
    %1816 = vmatpush1.msra.mxu0 %v1329
    %1817 = vmatprep.subr.mxu0 %v1334
    %1818 = vmatpush1.msra.mxu0 %v1333
    %1819 = vmatprep.subr.mxu0 %v1338
    %1820 = vmatpush1.msra.mxu0 %v1337
    %1821 = vmatprep.subr.mxu0 %v1342
    %1822 = vmatpush1.msra.mxu0 %v1341
    %1823 = vmatprep.subr.mxu0 %v1346
    %1824 = vmatpush1.msra.mxu0 %v1345
    %1825 = vmatprep.subr.mxu0 %v1350
    %1826 = vmatpush1.msra.mxu0 %v1349
    %1827 = vmatprep.subr.mxu0 %v1354
    %1828 = vmatpush1.msra.mxu0 %v1353
    %1829 = vmatprep.subr.mxu0 %v1358
    %1830 = vmatpush1.msra.mxu0 %v1357
    %1831 = vmatprep.mubr.f32.mxu0 %v1226
    %1832 = vmatmul.mubr.f32.gmra.mrb[0].mxu0 %v1225
    %v1833 = vpop.f32.mrb[0].mxu0
    %v1834 = vadd.f32 %v1750, %v1833
    %v1835 = vpop.f32.mrb[0].mxu0
    %v1836 = vadd.f32 %v1754, %v1835
    %1837 = vdwg.mxu0
    %1838 = vmatprep.subr.mxu0 %v1362
    %1839 = vmatpush1.msra.mxu0 %v1361
    %1840 = vmatprep.subr.mxu0 %v1366
    %1841 = vmatpush1.msra.mxu0 %v1365
    %1842 = vmatprep.subr.mxu0 %v1370
    %1843 = vmatpush1.msra.mxu0 %v1369
    %1844 = vmatprep.subr.mxu0 %v1374
    %1845 = vmatpush1.msra.mxu0 %v1373
    %1846 = vmatprep.subr.mxu0 %v1378
    %1847 = vmatpush1.msra.mxu0 %v1377
    %1848 = vmatprep.subr.mxu0 %v1382
    %1849 = vmatpush1.msra.mxu0 %v1381
    %1850 = vmatprep.subr.mxu0 %v1386
    %1851 = vmatpush1.msra.mxu0 %v1385
    %1852 = vmatprep.subr.mxu0 %v1390
    %1853 = vmatpush1.msra.mxu0 %v1389
    %1854 = vmatprep.subr.mxu0 %v1394
    %1855 = vmatpush1.msra.mxu0 %v1393
    %1856 = vmatprep.subr.mxu0 %v1398
    %1857 = vmatpush1.msra.mxu0 %v1397
    %1858 = vmatprep.subr.mxu0 %v1402
    %1859 = vmatpush1.msra.mxu0 %v1401
    %1860 = vmatprep.subr.mxu0 %v1406
    %1861 = vmatpush1.msra.mxu0 %v1405
    %1862 = vmatprep.subr.mxu0 %v1410
    %1863 = vmatpush1.msra.mxu0 %v1409
    %1864 = vmatprep.subr.mxu0 %v1414
    %1865 = vmatpush1.msra.mxu0 %v1413
    %1866 = vmatprep.subr.mxu0 %v1418
    %1867 = vmatpush1.msra.mxu0 %v1417
    %1868 = vmatprep.subr.mxu0 %v1422
    %1869 = vmatpush1.msra.mxu0 %v1421
    %1870 = vmatprep.subr.mxu0 %v1426
    %1871 = vmatpush1.msra.mxu0 %v1425
    %1872 = vmatprep.subr.mxu0 %v1430
    %1873 = vmatpush1.msra.mxu0 %v1429
    %1874 = vmatprep.subr.mxu0 %v1434
    %1875 = vmatpush1.msra.mxu0 %v1433
    %1876 = vmatprep.subr.mxu0 %v1438
    %1877 = vmatpush1.msra.mxu0 %v1437
    %1878 = vmatprep.subr.mxu0 %v1442
    %1879 = vmatpush1.msra.mxu0 %v1441
    %1880 = vmatprep.subr.mxu0 %v1446
    %1881 = vmatpush1.msra.mxu0 %v1445
    %1882 = vmatprep.subr.mxu0 %v1450
    %1883 = vmatpush1.msra.mxu0 %v1449
    %1884 = vmatprep.subr.mxu0 %v1454
    %1885 = vmatpush1.msra.mxu0 %v1453
    %1886 = vmatprep.subr.mxu0 %v1458
    %1887 = vmatpush1.msra.mxu0 %v1457
    %1888 = vmatprep.subr.mxu0 %v1462
    %1889 = vmatpush1.msra.mxu0 %v1461
    %1890 = vmatprep.subr.mxu0 %v1466
    %1891 = vmatpush1.msra.mxu0 %v1465
    %1892 = vmatprep.subr.mxu0 %v1470
    %1893 = vmatpush1.msra.mxu0 %v1469
    %1894 = vmatprep.subr.mxu0 %v1474
    %1895 = vmatpush1.msra.mxu0 %v1473
    %1896 = vmatprep.subr.mxu0 %v1478
    %1897 = vmatpush1.msra.mxu0 %v1477
    %1898 = vmatprep.subr.mxu0 %v1482
    %1899 = vmatpush1.msra.mxu0 %v1481
    %1900 = vmatprep.subr.mxu0 %v1486
    %1901 = vmatpush1.msra.mxu0 %v1485
    %1902 = vmatprep.mubr.f32.mxu0 %v1228
    %1903 = vmatmul.mubr.f32.gmra.mrb[0].mxu0 %v1227
    %v1904 = vpop.f32.mrb[0].mxu0
    %v1905 = vadd.f32 %v1834, %v1904
    %v1906 = vpop.f32.mrb[0].mxu0
    %v1907 = vadd.f32 %v1836, %v1906
    %1908 = vdwg.mxu0
    %1909 = vmatprep.subr.mxu0 %v1490
    %1910 = vmatpush1.msra.mxu0 %v1489
    %1911 = vmatprep.subr.mxu0 %v1494
    %1912 = vmatpush1.msra.mxu0 %v1493
    %1913 = vmatprep.subr.mxu0 %v1498
    %1914 = vmatpush1.msra.mxu0 %v1497
    %1915 = vmatprep.subr.mxu0 %v1502
    %1916 = vmatpush1.msra.mxu0 %v1501
    %1917 = vmatprep.subr.mxu0 %v1506
    %1918 = vmatpush1.msra.mxu0 %v1505
    %1919 = vmatprep.subr.mxu0 %v1510
    %1920 = vmatpush1.msra.mxu0 %v1509
    %1921 = vmatprep.subr.mxu0 %v1514
    %1922 = vmatpush1.msra.mxu0 %v1513
    %1923 = vmatprep.subr.mxu0 %v1518
    %1924 = vmatpush1.msra.mxu0 %v1517
    %1925 = vmatprep.subr.mxu0 %v1522
    %1926 = vmatpush1.msra.mxu0 %v1521
    %1927 = vmatprep.subr.mxu0 %v1526
    %1928 = vmatpush1.msra.mxu0 %v1525
    %1929 = vmatprep.subr.mxu0 %v1530
    %1930 = vmatpush1.msra.mxu0 %v1529
    %1931 = vmatprep.subr.mxu0 %v1534
    %1932 = vmatpush1.msra.mxu0 %v1533
    %1933 = vmatprep.subr.mxu0 %v1538
    %1934 = vmatpush1.msra.mxu0 %v1537
    %1935 = vmatprep.subr.mxu0 %v1542
    %1936 = vmatpush1.msra.mxu0 %v1541
    %1937 = vmatprep.subr.mxu0 %v1546
    %1938 = vmatpush1.msra.mxu0 %v1545
    %1939 = vmatprep.subr.mxu0 %v1550
    %1940 = vmatpush1.msra.mxu0 %v1549
    %1941 = vmatprep.subr.mxu0 %v1554
    %1942 = vmatpush1.msra.mxu0 %v1553
    %1943 = vmatprep.subr.mxu0 %v1558
    %1944 = vmatpush1.msra.mxu0 %v1557
    %1945 = vmatprep.subr.mxu0 %v1562
    %1946 = vmatpush1.msra.mxu0 %v1561
    %1947 = vmatprep.subr.mxu0 %v1566
    %1948 = vmatpush1.msra.mxu0 %v1565
    %1949 = vmatprep.subr.mxu0 %v1570
    %1950 = vmatpush1.msra.mxu0 %v1569
    %1951 = vmatprep.subr.mxu0 %v1574
    %1952 = vmatpush1.msra.mxu0 %v1573
    %1953 = vmatprep.subr.mxu0 %v1578
    %1954 = vmatpush1.msra.mxu0 %v1577
    %1955 = vmatprep.subr.mxu0 %v1582
    %1956 = vmatpush1.msra.mxu0 %v1581
    %1957 = vmatprep.subr.mxu0 %v1586
    %1958 = vmatpush1.msra.mxu0 %v1585
    %1959 = vmatprep.subr.mxu0 %v1590
    %1960 = vmatpush1.msra.mxu0 %v1589
    %1961 = vmatprep.subr.mxu0 %v1594
    %1962 = vmatpush1.msra.mxu0 %v1593
    %1963 = vmatprep.subr.mxu0 %v1598
    %1964 = vmatpush1.msra.mxu0 %v1597
    %1965 = vmatprep.subr.mxu0 %v1602
    %1966 = vmatpush1.msra.mxu0 %v1601
    %1967 = vmatprep.subr.mxu0 %v1606
    %1968 = vmatpush1.msra.mxu0 %v1605
    %1969 = vmatprep.subr.mxu0 %v1610
    %1970 = vmatpush1.msra.mxu0 %v1609
    %1971 = vmatprep.subr.mxu0 %v1614
    %1972 = vmatpush1.msra.mxu0 %v1613
    %1973 = vmatprep.mubr.f32.mxu0 %v1230
    %1974 = vmatmul.mubr.f32.gmra.mrb[0].mxu0 %v1229
    %v1975 = vpop.f32.mrb[0].mxu0
    %v1976 = vadd.f32 %v1905, %v1975
    %v1977 = vpop.f32.mrb[0].mxu0
    %v1978 = vadd.f32 %v1907, %v1977
    %1979 = vdwg.mxu0
    %1980 = vmatprep.subr.mxu0 %v1618
    %1981 = vmatpush1.msra.mxu0 %v1617
    %1982 = vmatprep.subr.mxu0 %v1622
    %1983 = vmatpush1.msra.mxu0 %v1621
    %1984 = vmatprep.subr.mxu0 %v1626
    %1985 = vmatpush1.msra.mxu0 %v1625
    %1986 = vmatprep.subr.mxu0 %v1630
    %1987 = vmatpush1.msra.mxu0 %v1629
    %1988 = vmatprep.subr.mxu0 %v1634
    %1989 = vmatpush1.msra.mxu0 %v1633
    %1990 = vmatprep.subr.mxu0 %v1638
    %1991 = vmatpush1.msra.mxu0 %v1637
    %1992 = vmatprep.subr.mxu0 %v1642
    %1993 = vmatpush1.msra.mxu0 %v1641
    %1994 = vmatprep.subr.mxu0 %v1646
    %1995 = vmatpush1.msra.mxu0 %v1645
    %1996 = vmatprep.subr.mxu0 %v1650
    %1997 = vmatpush1.msra.mxu0 %v1649
    %1998 = vmatprep.subr.mxu0 %v1654
    %1999 = vmatpush1.msra.mxu0 %v1653
    %2000 = vmatprep.subr.mxu0 %v1658
    %2001 = vmatpush1.msra.mxu0 %v1657
    %2002 = vmatprep.subr.mxu0 %v1662
    %2003 = vmatpush1.msra.mxu0 %v1661
    %2004 = vmatprep.subr.mxu0 %v1666
    %2005 = vmatpush1.msra.mxu0 %v1665
    %2006 = vmatprep.subr.mxu0 %v1670
    %2007 = vmatpush1.msra.mxu0 %v1669
    %2008 = vmatprep.subr.mxu0 %v1674
    %2009 = vmatpush1.msra.mxu0 %v1673
    %2010 = vmatprep.subr.mxu0 %v1678
    %2011 = vmatpush1.msra.mxu0 %v1677
    %2012 = vmatprep.subr.mxu0 %v1682
    %2013 = vmatpush1.msra.mxu0 %v1681
    %2014 = vmatprep.subr.mxu0 %v1686
    %2015 = vmatpush1.msra.mxu0 %v1685
    %2016 = vmatprep.subr.mxu0 %v1690
    %2017 = vmatpush1.msra.mxu0 %v1689
    %2018 = vmatprep.subr.mxu0 %v1694
    %2019 = vmatpush1.msra.mxu0 %v1693
    %2020 = vmatprep.subr.mxu0 %v1698
    %2021 = vmatpush1.msra.mxu0 %v1697
    %2022 = vmatprep.subr.mxu0 %v1702
    %2023 = vmatpush1.msra.mxu0 %v1701
    %2024 = vmatprep.subr.mxu0 %v1706
    %2025 = vmatpush1.msra.mxu0 %v1705
    %2026 = vmatprep.subr.mxu0 %v1710
    %2027 = vmatpush1.msra.mxu0 %v1709
    %2028 = vmatprep.subr.mxu0 %v1714
    %2029 = vmatpush1.msra.mxu0 %v1713
    %2030 = vmatprep.subr.mxu0 %v1718
    %2031 = vmatpush1.msra.mxu0 %v1717
    %2032 = vmatprep.subr.mxu0 %v1722
    %2033 = vmatpush1.msra.mxu0 %v1721
    %2034 = vmatprep.subr.mxu0 %v1726
    %2035 = vmatpush1.msra.mxu0 %v1725
    %2036 = vmatprep.subr.mxu0 %v1730
    %2037 = vmatpush1.msra.mxu0 %v1729
    %2038 = vmatprep.subr.mxu0 %v1734
    %2039 = vmatpush1.msra.mxu0 %v1733
    %2040 = vmatprep.subr.mxu0 %v1738
    %2041 = vmatpush1.msra.mxu0 %v1737
    %2042 = vmatprep.subr.mxu0 %v1742
    %2043 = vmatpush1.msra.mxu0 %v1741
    %2044 = vmatprep.mubr.f32.mxu0 %v1232
    %2045 = vmatmul.mubr.f32.gmra.mrb[0].mxu0 %v1231
    %v2046 = vpop.f32.mrb[0].mxu0
    %v2047 = vadd.f32 %v1976, %v2046
    %v2048 = vpop.f32.mrb[0].mxu0
    %v2049 = vadd.f32 %v1978, %v2048
    %2050 = vdwg.mxu0
    %2051 = vmatprep.subr.mxu0 %v1236
    %2052 = vmatpush1.msra.mxu0 %v1235
    %2053 = vmatprep.subr.mxu0 %v1240
    %2054 = vmatpush1.msra.mxu0 %v1239
    %2055 = vmatprep.subr.mxu0 %v1244
    %2056 = vmatpush1.msra.mxu0 %v1243
    %2057 = vmatprep.subr.mxu0 %v1248
    %2058 = vmatpush1.msra.mxu0 %v1247
    %2059 = vmatprep.subr.mxu0 %v1252
    %2060 = vmatpush1.msra.mxu0 %v1251
    %2061 = vmatprep.subr.mxu0 %v1256
    %2062 = vmatpush1.msra.mxu0 %v1255
    %2063 = vmatprep.subr.mxu0 %v1260
    %2064 = vmatpush1.msra.mxu0 %v1259
    %2065 = vmatprep.subr.mxu0 %v1264
    %2066 = vmatpush1.msra.mxu0 %v1263
    %2067 = vmatprep.subr.mxu0 %v1268
    %2068 = vmatpush1.msra.mxu0 %v1267
    %2069 = vmatprep.subr.mxu0 %v1272
    %2070 = vmatpush1.msra.mxu0 %v1271
    %2071 = vmatprep.subr.mxu0 %v1276
    %2072 = vmatpush1.msra.mxu0 %v1275
    %2073 = vmatprep.subr.mxu0 %v1280
    %2074 = vmatpush1.msra.mxu0 %v1279
    %2075 = vmatprep.subr.mxu0 %v1284
    %2076 = vmatpush1.msra.mxu0 %v1283
    %2077 = vmatprep.subr.mxu0 %v1288
    %2078 = vmatpush1.msra.mxu0 %v1287
    %2079 = vmatprep.subr.mxu0 %v1292
    %2080 = vmatpush1.msra.mxu0 %v1291
    %2081 = vmatprep.subr.mxu0 %v1296
    %2082 = vmatpush1.msra.mxu0 %v1295
    %2083 = vmatprep.subr.mxu0 %v1300
    %2084 = vmatpush1.msra.mxu0 %v1299
    %2085 = vmatprep.subr.mxu0 %v1304
    %2086 = vmatpush1.msra.mxu0 %v1303
    %2087 = vmatprep.subr.mxu0 %v1308
    %2088 = vmatpush1.msra.mxu0 %v1307
    %2089 = vmatprep.subr.mxu0 %v1312
    %2090 = vmatpush1.msra.mxu0 %v1311
    %2091 = vmatprep.subr.mxu0 %v1316
    %2092 = vmatpush1.msra.mxu0 %v1315
    %2093 = vmatprep.subr.mxu0 %v1320
    %2094 = vmatpush1.msra.mxu0 %v1319
    %2095 = vmatprep.subr.mxu0 %v1324
    %2096 = vmatpush1.msra.mxu0 %v1323
    %2097 = vmatprep.subr.mxu0 %v1328
    %2098 = vmatpush1.msra.mxu0 %v1327
    %2099 = vmatprep.subr.mxu0 %v1332
    %2100 = vmatpush1.msra.mxu0 %v1331
    %2101 = vmatprep.subr.mxu0 %v1336
    %2102 = vmatpush1.msra.mxu0 %v1335
    %2103 = vmatprep.subr.mxu0 %v1340
    %2104 = vmatpush1.msra.mxu0 %v1339
    %2105 = vmatprep.subr.mxu0 %v1344
    %2106 = vmatpush1.msra.mxu0 %v1343
    %2107 = vmatprep.subr.mxu0 %v1348
    %2108 = vmatpush1.msra.mxu0 %v1347
    %2109 = vmatprep.subr.mxu0 %v1352
    %2110 = vmatpush1.msra.mxu0 %v1351
    %2111 = vmatprep.subr.mxu0 %v1356
    %2112 = vmatpush1.msra.mxu0 %v1355
    %2113 = vmatprep.subr.mxu0 %v1360
    %2114 = vmatpush1.msra.mxu0 %v1359
    %2115 = vmatprep.mubr.f32.mxu0 %v1226
    %2116 = vmatmul.mubr.f32.gmra.mrb[0].mxu0 %v1225
    %v2117 = vpop.f32.mrb[0].mxu0
    %v2118 = vadd.f32 %v1758, %v2117
    %v2119 = vpop.f32.mrb[0].mxu0
    %v2120 = vadd.f32 %v1762, %v2119
    %2121 = vdwg.mxu0
    %2122 = vmatprep.subr.mxu0 %v1364
    %2123 = vmatpush1.msra.mxu0 %v1363
    %2124 = vmatprep.subr.mxu0 %v1368
    %2125 = vmatpush1.msra.mxu0 %v1367
    %2126 = vmatprep.subr.mxu0 %v1372
    %2127 = vmatpush1.msra.mxu0 %v1371
    %2128 = vmatprep.subr.mxu0 %v1376
    %2129 = vmatpush1.msra.mxu0 %v1375
    %2130 = vmatprep.subr.mxu0 %v1380
    %2131 = vmatpush1.msra.mxu0 %v1379
    %2132 = vmatprep.subr.mxu0 %v1384
    %2133 = vmatpush1.msra.mxu0 %v1383
    %2134 = vmatprep.subr.mxu0 %v1388
    %2135 = vmatpush1.msra.mxu0 %v1387
    %2136 = vmatprep.subr.mxu0 %v1392
    %2137 = vmatpush1.msra.mxu0 %v1391
    %2138 = vmatprep.subr.mxu0 %v1396
    %2139 = vmatpush1.msra.mxu0 %v1395
    %2140 = vmatprep.subr.mxu0 %v1400
    %2141 = vmatpush1.msra.mxu0 %v1399
    %2142 = vmatprep.subr.mxu0 %v1404
    %2143 = vmatpush1.msra.mxu0 %v1403
    %2144 = vmatprep.subr.mxu0 %v1408
    %2145 = vmatpush1.msra.mxu0 %v1407
    %2146 = vmatprep.subr.mxu0 %v1412
    %2147 = vmatpush1.msra.mxu0 %v1411
    %2148 = vmatprep.subr.mxu0 %v1416
    %2149 = vmatpush1.msra.mxu0 %v1415
    %2150 = vmatprep.subr.mxu0 %v1420
    %2151 = vmatpush1.msra.mxu0 %v1419
    %2152 = vmatprep.subr.mxu0 %v1424
    %2153 = vmatpush1.msra.mxu0 %v1423
    %2154 = vmatprep.subr.mxu0 %v1428
    %2155 = vmatpush1.msra.mxu0 %v1427
    %2156 = vmatprep.subr.mxu0 %v1432
    %2157 = vmatpush1.msra.mxu0 %v1431
    %2158 = vmatprep.subr.mxu0 %v1436
    %2159 = vmatpush1.msra.mxu0 %v1435
    %2160 = vmatprep.subr.mxu0 %v1440
    %2161 = vmatpush1.msra.mxu0 %v1439
    %2162 = vmatprep.subr.mxu0 %v1444
    %2163 = vmatpush1.msra.mxu0 %v1443
    %2164 = vmatprep.subr.mxu0 %v1448
    %2165 = vmatpush1.msra.mxu0 %v1447
    %2166 = vmatprep.subr.mxu0 %v1452
    %2167 = vmatpush1.msra.mxu0 %v1451
    %2168 = vmatprep.subr.mxu0 %v1456
    %2169 = vmatpush1.msra.mxu0 %v1455
    %2170 = vmatprep.subr.mxu0 %v1460
    %2171 = vmatpush1.msra.mxu0 %v1459
    %2172 = vmatprep.subr.mxu0 %v1464
    %2173 = vmatpush1.msra.mxu0 %v1463
    %2174 = vmatprep.subr.mxu0 %v1468
    %2175 = vmatpush1.msra.mxu0 %v1467
    %2176 = vmatprep.subr.mxu0 %v1472
    %2177 = vmatpush1.msra.mxu0 %v1471
    %2178 = vmatprep.subr.mxu0 %v1476
    %2179 = vmatpush1.msra.mxu0 %v1475
    %2180 = vmatprep.subr.mxu0 %v1480
    %2181 = vmatpush1.msra.mxu0 %v1479
    %2182 = vmatprep.subr.mxu0 %v1484
    %2183 = vmatpush1.msra.mxu0 %v1483
    %2184 = vmatprep.subr.mxu0 %v1488
    %2185 = vmatpush1.msra.mxu0 %v1487
    %2186 = vmatprep.mubr.f32.mxu0 %v1228
    %2187 = vmatmul.mubr.f32.gmra.mrb[0].mxu0 %v1227
    %v2188 = vpop.f32.mrb[0].mxu0
    %v2189 = vadd.f32 %v2118, %v2188
    %v2190 = vpop.f32.mrb[0].mxu0
    %v2191 = vadd.f32 %v2120, %v2190
    %2192 = vdwg.mxu0
    %2193 = vmatprep.subr.mxu0 %v1492
    %2194 = vmatpush1.msra.mxu0 %v1491
    %2195 = vmatprep.subr.mxu0 %v1496
    %2196 = vmatpush1.msra.mxu0 %v1495
    %2197 = vmatprep.subr.mxu0 %v1500
    %2198 = vmatpush1.msra.mxu0 %v1499
    %2199 = vmatprep.subr.mxu0 %v1504
    %2200 = vmatpush1.msra.mxu0 %v1503
    %2201 = vmatprep.subr.mxu0 %v1508
    %2202 = vmatpush1.msra.mxu0 %v1507
    %2203 = vmatprep.subr.mxu0 %v1512
    %2204 = vmatpush1.msra.mxu0 %v1511
    %2205 = vmatprep.subr.mxu0 %v1516
    %2206 = vmatpush1.msra.mxu0 %v1515
    %2207 = vmatprep.subr.mxu0 %v1520
    %2208 = vmatpush1.msra.mxu0 %v1519
    %2209 = vmatprep.subr.mxu0 %v1524
    %2210 = vmatpush1.msra.mxu0 %v1523
    %2211 = vmatprep.subr.mxu0 %v1528
    %2212 = vmatpush1.msra.mxu0 %v1527
    %2213 = vmatprep.subr.mxu0 %v1532
    %2214 = vmatpush1.msra.mxu0 %v1531
    %2215 = vmatprep.subr.mxu0 %v1536
    %2216 = vmatpush1.msra.mxu0 %v1535
    %2217 = vmatprep.subr.mxu0 %v1540
    %2218 = vmatpush1.msra.mxu0 %v1539
    %2219 = vmatprep.subr.mxu0 %v1544
    %2220 = vmatpush1.msra.mxu0 %v1543
    %2221 = vmatprep.subr.mxu0 %v1548
    %2222 = vmatpush1.msra.mxu0 %v1547
    %2223 = vmatprep.subr.mxu0 %v1552
    %2224 = vmatpush1.msra.mxu0 %v1551
    %2225 = vmatprep.subr.mxu0 %v1556
    %2226 = vmatpush1.msra.mxu0 %v1555
    %2227 = vmatprep.subr.mxu0 %v1560
    %2228 = vmatpush1.msra.mxu0 %v1559
    %2229 = vmatprep.subr.mxu0 %v1564
    %2230 = vmatpush1.msra.mxu0 %v1563
    %2231 = vmatprep.subr.mxu0 %v1568
    %2232 = vmatpush1.msra.mxu0 %v1567
    %2233 = vmatprep.subr.mxu0 %v1572
    %2234 = vmatpush1.msra.mxu0 %v1571
    %2235 = vmatprep.subr.mxu0 %v1576
    %2236 = vmatpush1.msra.mxu0 %v1575
    %2237 = vmatprep.subr.mxu0 %v1580
    %2238 = vmatpush1.msra.mxu0 %v1579
    %2239 = vmatprep.subr.mxu0 %v1584
    %2240 = vmatpush1.msra.mxu0 %v1583
    %2241 = vmatprep.subr.mxu0 %v1588
    %2242 = vmatpush1.msra.mxu0 %v1587
    %2243 = vmatprep.subr.mxu0 %v1592
    %2244 = vmatpush1.msra.mxu0 %v1591
    %2245 = vmatprep.subr.mxu0 %v1596
    %2246 = vmatpush1.msra.mxu0 %v1595
    %2247 = vmatprep.subr.mxu0 %v1600
    %2248 = vmatpush1.msra.mxu0 %v1599
    %2249 = vmatprep.subr.mxu0 %v1604
    %2250 = vmatpush1.msra.mxu0 %v1603
    %2251 = vmatprep.subr.mxu0 %v1608
    %2252 = vmatpush1.msra.mxu0 %v1607
    %2253 = vmatprep.subr.mxu0 %v1612
    %2254 = vmatpush1.msra.mxu0 %v1611
    %2255 = vmatprep.subr.mxu0 %v1616
    %2256 = vmatpush1.msra.mxu0 %v1615
    %2257 = vmatprep.mubr.f32.mxu0 %v1230
    %2258 = vmatmul.mubr.f32.gmra.mrb[0].mxu0 %v1229
    %v2259 = vpop.f32.mrb[0].mxu0
    %v2260 = vadd.f32 %v2189, %v2259
    %v2261 = vpop.f32.mrb[0].mxu0
    %v2262 = vadd.f32 %v2191, %v2261
    %2263 = vdwg.mxu0
    %2264 = vmatprep.subr.mxu0 %v1620
    %2265 = vmatpush1.msra.mxu0 %v1619
    %2266 = vmatprep.subr.mxu0 %v1624
    %2267 = vmatpush1.msra.mxu0 %v1623
    %2268 = vmatprep.subr.mxu0 %v1628
    %2269 = vmatpush1.msra.mxu0 %v1627
    %2270 = vmatprep.subr.mxu0 %v1632
    %2271 = vmatpush1.msra.mxu0 %v1631
    %2272 = vmatprep.subr.mxu0 %v1636
    %2273 = vmatpush1.msra.mxu0 %v1635
    %2274 = vmatprep.subr.mxu0 %v1640
    %2275 = vmatpush1.msra.mxu0 %v1639
    %2276 = vmatprep.subr.mxu0 %v1644
    %2277 = vmatpush1.msra.mxu0 %v1643
    %2278 = vmatprep.subr.mxu0 %v1648
    %2279 = vmatpush1.msra.mxu0 %v1647
    %2280 = vmatprep.subr.mxu0 %v1652
    %2281 = vmatpush1.msra.mxu0 %v1651
    %2282 = vmatprep.subr.mxu0 %v1656
    %2283 = vmatpush1.msra.mxu0 %v1655
    %2284 = vmatprep.subr.mxu0 %v1660
    %2285 = vmatpush1.msra.mxu0 %v1659
    %2286 = vmatprep.subr.mxu0 %v1664
    %2287 = vmatpush1.msra.mxu0 %v1663
    %2288 = vmatprep.subr.mxu0 %v1668
    %2289 = vmatpush1.msra.mxu0 %v1667
    %2290 = vmatprep.subr.mxu0 %v1672
    %2291 = vmatpush1.msra.mxu0 %v1671
    %2292 = vmatprep.subr.mxu0 %v1676
    %2293 = vmatpush1.msra.mxu0 %v1675
    %2294 = vmatprep.subr.mxu0 %v1680
    %2295 = vmatpush1.msra.mxu0 %v1679
    %2296 = vmatprep.subr.mxu0 %v1684
    %2297 = vmatpush1.msra.mxu0 %v1683
    %2298 = vmatprep.subr.mxu0 %v1688
    %2299 = vmatpush1.msra.mxu0 %v1687
    %2300 = vmatprep.subr.mxu0 %v1692
    %2301 = vmatpush1.msra.mxu0 %v1691
    %2302 = vmatprep.subr.mxu0 %v1696
    %2303 = vmatpush1.msra.mxu0 %v1695
    %2304 = vmatprep.subr.mxu0 %v1700
    %2305 = vmatpush1.msra.mxu0 %v1699
    %2306 = vmatprep.subr.mxu0 %v1704
    %2307 = vmatpush1.msra.mxu0 %v1703
    %2308 = vmatprep.subr.mxu0 %v1708
    %2309 = vmatpush1.msra.mxu0 %v1707
    %2310 = vmatprep.subr.mxu0 %v1712
    %2311 = vmatpush1.msra.mxu0 %v1711
    %2312 = vmatprep.subr.mxu0 %v1716
    %2313 = vmatpush1.msra.mxu0 %v1715
    %2314 = vmatprep.subr.mxu0 %v1720
    %2315 = vmatpush1.msra.mxu0 %v1719
    %2316 = vmatprep.subr.mxu0 %v1724
    %2317 = vmatpush1.msra.mxu0 %v1723
    %2318 = vmatprep.subr.mxu0 %v1728
    %2319 = vmatpush1.msra.mxu0 %v1727
    %2320 = vmatprep.subr.mxu0 %v1732
    %2321 = vmatpush1.msra.mxu0 %v1731
    %2322 = vmatprep.subr.mxu0 %v1736
    %2323 = vmatpush1.msra.mxu0 %v1735
    %2324 = vmatprep.subr.mxu0 %v1740
    %2325 = vmatpush1.msra.mxu0 %v1739
    %2326 = vmatprep.subr.mxu0 %v1744
    %2327 = vmatpush1.msra.mxu0 %v1743
    %2328 = vmatprep.mubr.f32.mxu0 %v1232
    %2329 = vmatmul.mubr.f32.gmra.mrb[0].mxu0 %v1231
    %v2330 = vpop.f32.mrb[0].mxu0
    %v2331 = vadd.f32 %v2260, %v2330
    %v2332 = vpop.f32.mrb[0].mxu0
    %v2333 = vadd.f32 %v2262, %v2332
    %2334 = vdwg.mxu0
    %v2335 = vld [vmem:[#allocation22] sm:$0xf]
    %v2336 = vld [vmem:[#allocation23] sm:$0xf]
    %v2337 = vadd.f32 %v2047, %v2049
    %v2338 = vadd.f32 %v2337, %v2331
    %v2339 = vadd.f32 %v2338, %v2333
    %2340 = vadd.xlane.f32.xlu0 %v2339
    %v2341 = vpop.xlane.xlu0 %2340
    %v2342 = vrcp.pop 512.0
    %v2343 = vmul.f32 %v2341, %v2342
    %v2344 = vsub.f32 %v2047, %v2343
    %v2345 = vsub.f32 %v2049, %v2343
    %v2346 = vsub.f32 %v2331, %v2343
    %v2347 = vsub.f32 %v2333, %v2343
    %v2348 = vmul.f32 %v2344, %v2344
    %v2349 = vmul.f32 %v2345, %v2345
    %v2350 = vmul.f32 %v2346, %v2346
    %v2351 = vmul.f32 %v2347, %v2347
    %v2352 = vadd.f32 %v2348, %v2349
    %v2353 = vadd.f32 %v2352, %v2350
    %v2354 = vadd.f32 %v2353, %v2351
    %2355 = vadd.xlane.f32.xlu0 %v2354
    %v2356 = vpop.xlane.xlu0 %2355
    %v2357 = vmul.f32 %v2356, %v2342
    %v2358 = vadd.f32 %v2357, 1e-05
    %v2359 = vrsqrt.pop %v2358
    %v2360 = vmul.f32 %v2344, %v2359
    %v2361 = vmul.f32 %v2345, %v2359
    %v2362 = vmul.f32 %v2346, %v2359
    %v2363 = vmul.f32 %v2347, %v2359
    %v2365 = vlaneseq
    %v2366 = vshrl.u32 %v2365, 7
    %v2367 = vsub.s32 0, %v2366
    %v2368 = vrot.slane %v2335, %v2367
    %v2369 = vlaneseq
    %v2370 = vshrl.u32 %v2369, 7
    %v2371 = vsub.s32 1, %v2370
    %v2372 = vrot.slane %v2335, %v2371
    %v2373 = vlaneseq
    %v2374 = vshrl.u32 %v2373, 7
    %v2375 = vsub.s32 2, %v2374
    %v2376 = vrot.slane %v2335, %v2375
    %v2377 = vlaneseq
    %v2378 = vshrl.u32 %v2377, 7
    %v2379 = vsub.s32 3, %v2378
    %v2380 = vrot.slane %v2335, %v2379
    %v2385 = vmul.f32 %v2360, %v2368
    %v2386 = vmul.f32 %v2361, %v2372
    %v2387 = vmul.f32 %v2362, %v2376
    %v2388 = vmul.f32 %v2363, %v2380
    %v2390 = vlaneseq
    %v2391 = vshrl.u32 %v2390, 7
    %v2392 = vsub.s32 0, %v2391
    %v2393 = vrot.slane %v2336, %v2392
    %v2394 = vlaneseq
    %v2395 = vshrl.u32 %v2394, 7
    %v2396 = vsub.s32 1, %v2395
    %v2397 = vrot.slane %v2336, %v2396
    %v2398 = vlaneseq
    %v2399 = vshrl.u32 %v2398, 7
    %v2400 = vsub.s32 2, %v2399
    %v2401 = vrot.slane %v2336, %v2400
    %v2402 = vlaneseq
    %v2403 = vshrl.u32 %v2402, 7
    %v2404 = vsub.s32 3, %v2403
    %v2405 = vrot.slane %v2336, %v2404
    %v2410 = vadd.f32 %v2385, %v2393
    %v2411 = vadd.f32 %v2386, %v2397
    %v2412 = vadd.f32 %v2387, %v2401
    %v2413 = vadd.f32 %v2388, %v2405
    %v2414 = vmax.f32 %v2410, 0.0
    %v2415 = vmax.f32 %v2411, 0.0
    %v2416 = vmax.f32 %v2412, 0.0
    %v2417 = vmax.f32 %v2413, 0.0
    %2418 = vst [vmem:[#allocation28] sm:$0xff] %v2414
    %2419 = vst [vmem:[#allocation28 + $0x8] sm:$0xff] %v2415
    %2420 = vst [vmem:[#allocation28 + $0x10] sm:$0xff] %v2416
    %2421 = vst [vmem:[#allocation28 + $0x18] sm:$0xff] %v2417
    %v2422 = vld [vmem:[%s18] sm:$0xff]
    %v2423 = vld [vmem:[%s18 + $0x8] sm:$0xff]
    %v2424 = vld [vmem:[%s18 + $0x10] sm:$0xff]
    %v2425 = vld [vmem:[%s18 + $0x18] sm:$0xff]
    %v2426 = vld [vmem:[%s18 + $0x20] sm:$0xff]
    %v2427 = vld [vmem:[%s18 + $0x28] sm:$0xff]
    %v2428 = vld [vmem:[%s18 + $0x30] sm:$0xff]
    %v2429 = vld [vmem:[%s18 + $0x38] sm:$0xff]
    %v2430 = vld [vmem:[%s18 + $0x40] sm:$0xff]
    %v2431 = vld [vmem:[%s18 + $0x48] sm:$0xff]
    %v2432 = vld [vmem:[%s18 + $0x50] sm:$0xff]
    %v2433 = vld [vmem:[%s18 + $0x58] sm:$0xff]
    %v2434 = vld [vmem:[%s18 + $0x60] sm:$0xff]
    %v2435 = vld [vmem:[%s18 + $0x68] sm:$0xff]
    %v2436 = vld [vmem:[%s18 + $0x70] sm:$0xff]
    %v2437 = vld [vmem:[%s18 + $0x78] sm:$0xff]
    %v2438 = vld [vmem:[%s18 + $0x80] sm:$0xff]
    %v2439 = vld [vmem:[%s18 + $0x88] sm:$0xff]
    %v2440 = vld [vmem:[%s18 + $0x90] sm:$0xff]
    %v2441 = vld [vmem:[%s18 + $0x98] sm:$0xff]
    %v2442 = vld [vmem:[%s18 + $0xa0] sm:$0xff]
    %v2443 = vld [vmem:[%s18 + $0xa8] sm:$0xff]
    %v2444 = vld [vmem:[%s18 + $0xb0] sm:$0xff]
    %v2445 = vld [vmem:[%s18 + $0xb8] sm:$0xff]
    %v2446 = vld [vmem:[%s18 + $0xc0] sm:$0xff]
    %v2447 = vld [vmem:[%s18 + $0xc8] sm:$0xff]
    %v2448 = vld [vmem:[%s18 + $0xd0] sm:$0xff]
    %v2449 = vld [vmem:[%s18 + $0xd8] sm:$0xff]
    %v2450 = vld [vmem:[%s18 + $0xe0] sm:$0xff]
    %v2451 = vld [vmem:[%s18 + $0xe8] sm:$0xff]
    %v2452 = vld [vmem:[%s18 + $0xf0] sm:$0xff]
    %v2453 = vld [vmem:[%s18 + $0xf8] sm:$0xff]
    %v2454 = vld [vmem:[%s18 + $0x100] sm:$0xff]
    %v2455 = vld [vmem:[%s18 + $0x108] sm:$0xff]
    %v2456 = vld [vmem:[%s18 + $0x110] sm:$0xff]
    %v2457 = vld [vmem:[%s18 + $0x118] sm:$0xff]
    %v2458 = vld [vmem:[%s18 + $0x120] sm:$0xff]
    %v2459 = vld [vmem:[%s18 + $0x128] sm:$0xff]
    %v2460 = vld [vmem:[%s18 + $0x130] sm:$0xff]
    %v2461 = vld [vmem:[%s18 + $0x138] sm:$0xff]
    %v2462 = vld [vmem:[%s18 + $0x140] sm:$0xff]
    %v2463 = vld [vmem:[%s18 + $0x148] sm:$0xff]
    %v2464 = vld [vmem:[%s18 + $0x150] sm:$0xff]
    %v2465 = vld [vmem:[%s18 + $0x158] sm:$0xff]
    %v2466 = vld [vmem:[%s18 + $0x160] sm:$0xff]
    %v2467 = vld [vmem:[%s18 + $0x168] sm:$0xff]
    %v2468 = vld [vmem:[%s18 + $0x170] sm:$0xff]
    %v2469 = vld [vmem:[%s18 + $0x178] sm:$0xff]
    %v2470 = vld [vmem:[%s18 + $0x180] sm:$0xff]
    %v2471 = vld [vmem:[%s18 + $0x188] sm:$0xff]
    %v2472 = vld [vmem:[%s18 + $0x190] sm:$0xff]
    %v2473 = vld [vmem:[%s18 + $0x198] sm:$0xff]
    %v2474 = vld [vmem:[%s18 + $0x1a0] sm:$0xff]
    %v2475 = vld [vmem:[%s18 + $0x1a8] sm:$0xff]
    %v2476 = vld [vmem:[%s18 + $0x1b0] sm:$0xff]
    %v2477 = vld [vmem:[%s18 + $0x1b8] sm:$0xff]
    %v2478 = vld [vmem:[%s18 + $0x1c0] sm:$0xff]
    %v2479 = vld [vmem:[%s18 + $0x1c8] sm:$0xff]
    %v2480 = vld [vmem:[%s18 + $0x1d0] sm:$0xff]
    %v2481 = vld [vmem:[%s18 + $0x1d8] sm:$0xff]
    %v2482 = vld [vmem:[%s18 + $0x1e0] sm:$0xff]
    %v2483 = vld [vmem:[%s18 + $0x1e8] sm:$0xff]
    %v2484 = vld [vmem:[%s18 + $0x1f0] sm:$0xff]
    %v2485 = vld [vmem:[%s18 + $0x1f8] sm:$0xff]
    %v2486 = vld [vmem:[%s19] sm:$0x1]
    %v2488 = vlaneseq
    %v2489 = vshrl.u32 %v2488, 7
    %v2490 = vsub.s32 0, %v2489
    %v2491 = vrot.slane %v2486, %v2490
    %2493 = vmatprep.subr.mxu0 0.0
    %2494 = vmatpush1.msra.mxu0 %v2422
    %2495 = vmatprep.subr.mxu0 0.0
    %2496 = vmatpush1.msra.mxu0 %v2423
    %2497 = vmatprep.subr.mxu0 0.0
    %2498 = vmatpush1.msra.mxu0 %v2424
    %2499 = vmatprep.subr.mxu0 0.0
    %2500 = vmatpush1.msra.mxu0 %v2425
    %2501 = vmatprep.subr.mxu0 0.0
    %2502 = vmatpush1.msra.mxu0 %v2426
    %2503 = vmatprep.subr.mxu0 0.0
    %2504 = vmatpush1.msra.mxu0 %v2427
    %2505 = vmatprep.subr.mxu0 0.0
    %2506 = vmatpush1.msra.mxu0 %v2428
    %2507 = vmatprep.subr.mxu0 0.0
    %2508 = vmatpush1.msra.mxu0 %v2429
    %2509 = vmatprep.subr.mxu0 0.0
    %2510 = vmatpush1.msra.mxu0 %v2430
    %2511 = vmatprep.subr.mxu0 0.0
    %2512 = vmatpush1.msra.mxu0 %v2431
    %2513 = vmatprep.subr.mxu0 0.0
    %2514 = vmatpush1.msra.mxu0 %v2432
    %2515 = vmatprep.subr.mxu0 0.0
    %2516 = vmatpush1.msra.mxu0 %v2433
    %2517 = vmatprep.subr.mxu0 0.0
    %2518 = vmatpush1.msra.mxu0 %v2434
    %2519 = vmatprep.subr.mxu0 0.0
    %2520 = vmatpush1.msra.mxu0 %v2435
    %2521 = vmatprep.subr.mxu0 0.0
    %2522 = vmatpush1.msra.mxu0 %v2436
    %2523 = vmatprep.subr.mxu0 0.0
    %2524 = vmatpush1.msra.mxu0 %v2437
    %2525 = vmatprep.subr.mxu0 0.0
    %2526 = vmatpush1.msra.mxu0 %v2438
    %2527 = vmatprep.subr.mxu0 0.0
    %2528 = vmatpush1.msra.mxu0 %v2439
    %2529 = vmatprep.subr.mxu0 0.0
    %2530 = vmatpush1.msra.mxu0 %v2440
    %2531 = vmatprep.subr.mxu0 0.0
    %2532 = vmatpush1.msra.mxu0 %v2441
    %2533 = vmatprep.subr.mxu0 0.0
    %2534 = vmatpush1.msra.mxu0 %v2442
    %2535 = vmatprep.subr.mxu0 0.0
    %2536 = vmatpush1.msra.mxu0 %v2443
    %2537 = vmatprep.subr.mxu0 0.0
    %2538 = vmatpush1.msra.mxu0 %v2444
    %2539 = vmatprep.subr.mxu0 0.0
    %2540 = vmatpush1.msra.mxu0 %v2445
    %2541 = vmatprep.subr.mxu0 0.0
    %2542 = vmatpush1.msra.mxu0 %v2446
    %2543 = vmatprep.subr.mxu0 0.0
    %2544 = vmatpush1.msra.mxu0 %v2447
    %2545 = vmatprep.subr.mxu0 0.0
    %2546 = vmatpush1.msra.mxu0 %v2448
    %2547 = vmatprep.subr.mxu0 0.0
    %2548 = vmatpush1.msra.mxu0 %v2449
    %2549 = vmatprep.subr.mxu0 0.0
    %2550 = vmatpush1.msra.mxu0 %v2450
    %2551 = vmatprep.subr.mxu0 0.0
    %2552 = vmatpush1.msra.mxu0 %v2451
    %2553 = vmatprep.subr.mxu0 0.0
    %2554 = vmatpush1.msra.mxu0 %v2452
    %2555 = vmatprep.subr.mxu0 0.0
    %2556 = vmatpush1.msra.mxu0 %v2453
    %2557 = vmatprep.mubr.f32.mxu0 %v2415
    %2558 = vmatmul.mubr.f32.gmra.mrb[0].mxu0 %v2414
    %v2559 = vpop.f32.mrb[0].mxu0
    %v2560 = vadd.f32 %v2491, %v2559
    %v2561 = vpop.f32.mrb[0].mxu0
    %2562 = vdwg.mxu0
    %2563 = vmatprep.subr.mxu0 0.0
    %2564 = vmatpush1.msra.mxu0 %v2454
    %2565 = vmatprep.subr.mxu0 0.0
    %2566 = vmatpush1.msra.mxu0 %v2455
    %2567 = vmatprep.subr.mxu0 0.0
    %2568 = vmatpush1.msra.mxu0 %v2456
    %2569 = vmatprep.subr.mxu0 0.0
    %2570 = vmatpush1.msra.mxu0 %v2457
    %2571 = vmatprep.subr.mxu0 0.0
    %2572 = vmatpush1.msra.mxu0 %v2458
    %2573 = vmatprep.subr.mxu0 0.0
    %2574 = vmatpush1.msra.mxu0 %v2459
    %2575 = vmatprep.subr.mxu0 0.0
    %2576 = vmatpush1.msra.mxu0 %v2460
    %2577 = vmatprep.subr.mxu0 0.0
    %2578 = vmatpush1.msra.mxu0 %v2461
    %2579 = vmatprep.subr.mxu0 0.0
    %2580 = vmatpush1.msra.mxu0 %v2462
    %2581 = vmatprep.subr.mxu0 0.0
    %2582 = vmatpush1.msra.mxu0 %v2463
    %2583 = vmatprep.subr.mxu0 0.0
    %2584 = vmatpush1.msra.mxu0 %v2464
    %2585 = vmatprep.subr.mxu0 0.0
    %2586 = vmatpush1.msra.mxu0 %v2465
    %2587 = vmatprep.subr.mxu0 0.0
    %2588 = vmatpush1.msra.mxu0 %v2466
    %2589 = vmatprep.subr.mxu0 0.0
    %2590 = vmatpush1.msra.mxu0 %v2467
    %2591 = vmatprep.subr.mxu0 0.0
    %2592 = vmatpush1.msra.mxu0 %v2468
    %2593 = vmatprep.subr.mxu0 0.0
    %2594 = vmatpush1.msra.mxu0 %v2469
    %2595 = vmatprep.subr.mxu0 0.0
    %2596 = vmatpush1.msra.mxu0 %v2470
    %2597 = vmatprep.subr.mxu0 0.0
    %2598 = vmatpush1.msra.mxu0 %v2471
    %2599 = vmatprep.subr.mxu0 0.0
    %2600 = vmatpush1.msra.mxu0 %v2472
    %2601 = vmatprep.subr.mxu0 0.0
    %2602 = vmatpush1.msra.mxu0 %v2473
    %2603 = vmatprep.subr.mxu0 0.0
    %2604 = vmatpush1.msra.mxu0 %v2474
    %2605 = vmatprep.subr.mxu0 0.0
    %2606 = vmatpush1.msra.mxu0 %v2475
    %2607 = vmatprep.subr.mxu0 0.0
    %2608 = vmatpush1.msra.mxu0 %v2476
    %2609 = vmatprep.subr.mxu0 0.0
    %2610 = vmatpush1.msra.mxu0 %v2477
    %2611 = vmatprep.subr.mxu0 0.0
    %2612 = vmatpush1.msra.mxu0 %v2478
    %2613 = vmatprep.subr.mxu0 0.0
    %2614 = vmatpush1.msra.mxu0 %v2479
    %2615 = vmatprep.subr.mxu0 0.0
    %2616 = vmatpush1.msra.mxu0 %v2480
    %2617 = vmatprep.subr.mxu0 0.0
    %2618 = vmatpush1.msra.mxu0 %v2481
    %2619 = vmatprep.subr.mxu0 0.0
    %2620 = vmatpush1.msra.mxu0 %v2482
    %2621 = vmatprep.subr.mxu0 0.0
    %2622 = vmatpush1.msra.mxu0 %v2483
    %2623 = vmatprep.subr.mxu0 0.0
    %2624 = vmatpush1.msra.mxu0 %v2484
    %2625 = vmatprep.subr.mxu0 0.0
    %2626 = vmatpush1.msra.mxu0 %v2485
    %2627 = vmatprep.mubr.f32.mxu0 %v2417
    %2628 = vmatmul.mubr.f32.gmra.mrb[0].mxu0 %v2416
    %v2629 = vpop.f32.mrb[0].mxu0
    %v2630 = vadd.f32 %v2560, %v2629
    %v2631 = vpop.f32.mrb[0].mxu0
    %2632 = vdwg.mxu0
    %2633 = vst [vmem:[%s25] sm:$0xff] %v2630
    // Predicated region
    $region138: #{clip_finetuner_forward.1} parent=1 // pred_check
      _
    $region139: #{clip_finetuner_forward.1} parent=1 // pred_check_branch
      %2635 = sbr.rel (0) target = $region141
    $region140: #{clip_finetuner_forward.1} parent=1 // pred_region
      %s2637 = ssub.s32 128, 128
      %2638 = vsyncadd [#allocation4], %s2637
      %s2640 = sshll.u32 [#allocation25], 4
      %s2641 = int_to_ptr.vmem [resolvable:$true] %s2640
      %2643 = dma.vmem_to_hbm [thread:$0]  %s2641, 128, %s20, [#allocation4]
    $region141: #{clip_finetuner_forward.1} parent=1 // pred_fallthru
      _
    // Predicated region
    $region142: #{clip_finetuner_forward.1} parent=1 // pred_check
      _
    $region143: #{clip_finetuner_forward.1} parent=1 // pred_check_branch
      %2645 = sbr.rel (0) target = $region145
    $region144: #{clip_finetuner_forward.1} parent=1 // pred_region
      %s2647 = ssub.s32 128, 128
      %2648 = vsyncadd [#allocation27], %s2647
      %s2650 = sshll.u32 [#allocation26], 4
      %s2651 = int_to_ptr.vmem [resolvable:$true] %s2650
      %2653 = dma.vmem_to_hbm [thread:$0]  %s2651, 128, %s21, [#allocation27]
    $region145: #{clip_finetuner_forward.1} parent=1 // pred_fallthru
      _
    // Predicated region
    $region146: #{clip_finetuner_forward.1} parent=1 // pred_check
      _
    $region147: #{clip_finetuner_forward.1} parent=1 // pred_check_branch
      %2655 = sbr.rel (0) target = $region149
    $region148: #{clip_finetuner_forward.1} parent=1 // pred_region
      %s2657 = ssub.s32 512, 512
      %2658 = vsyncadd [#allocation27], %s2657
      %s2660 = sshll.u32 [#allocation28], 4
      %s2661 = int_to_ptr.vmem [resolvable:$true] %s2660
      %2663 = dma.vmem_to_hbm [thread:$0]  %s2661, 512, %s22, [#allocation27]
    $region149: #{clip_finetuner_forward.1} parent=1 // pred_fallthru
      _
    // Predicated region
    $region150: #{clip_finetuner_forward.1} parent=1 // pred_check
      _
    $region151: #{clip_finetuner_forward.1} parent=1 // pred_check_branch
      %2665 = sbr.rel (0) target = $region153
    $region152: #{clip_finetuner_forward.1} parent=1 // pred_region
      _
    $region153: #{clip_finetuner_forward.1} parent=1 // pred_fallthru
      _
    // Predicated region
    $region154: #{clip_finetuner_forward.1} parent=1 // pred_check
      _
    $region155: #{clip_finetuner_forward.1} parent=1 // pred_check_branch
      %2667 = sbr.rel (0) target = $region157
    $region156: #{clip_finetuner_forward.1} parent=1 // pred_region
      _
    $region157: #{clip_finetuner_forward.1} parent=1 // pred_fallthru
      _
    // Predicated region
    $region158: #{clip_finetuner_forward.1} parent=1 // pred_check
      _
    $region159: #{clip_finetuner_forward.1} parent=1 // pred_check_branch
      %2669 = sbr.rel (0) target = $region161
    $region160: #{clip_finetuner_forward.1} parent=1 // pred_region
      _
    $region161: #{clip_finetuner_forward.1} parent=1 // pred_fallthru
      _
    // Predicated region
    $region162: #{clip_finetuner_forward.1} parent=1 // pred_check
      _
    $region163: #{clip_finetuner_forward.1} parent=1 // pred_check_branch
      %2671 = sbr.rel (0) target = $region165
    $region164: #{clip_finetuner_forward.1} parent=1 // pred_region
      %2672 = dma.done [#allocation4], 128
    $region165: #{clip_finetuner_forward.1} parent=1 // pred_fallthru
      _
    // Predicated region
    $region166: #{clip_finetuner_forward.1} parent=1 // pred_check
      _
    $region167: #{clip_finetuner_forward.1} parent=1 // pred_check_branch
      %2674 = sbr.rel (0) target = $region169
    $region168: #{clip_finetuner_forward.1} parent=1 // pred_region
      %2675 = dma.done [#allocation27], 128
    $region169: #{clip_finetuner_forward.1} parent=1 // pred_fallthru
      _
    // Predicated region
    $region170: #{clip_finetuner_forward.1} parent=1 // pred_check
      _
    $region171: #{clip_finetuner_forward.1} parent=1 // pred_check_branch
      %2677 = sbr.rel (0) target = $region173
    $region172: #{clip_finetuner_forward.1} parent=1 // pred_region
      %2678 = dma.done [#allocation27], 512
    $region173: #{clip_finetuner_forward.1} parent=1 // pred_fallthru
      _
    // Predicated region
    $region174: #{clip_finetuner_forward.1} parent=1 // pred_check
      _
    $region175: #{clip_finetuner_forward.1} parent=1 // pred_check_branch
      %2680 = sbr.rel (0) target = $region177
    $region176: #{clip_finetuner_forward.1} parent=1 // pred_region
      _
    $region177: #{clip_finetuner_forward.1} parent=1 // pred_fallthru
      _
    // Predicated region
    $region178: #{clip_finetuner_forward.1} parent=1 // pred_check
      _
    $region179: #{clip_finetuner_forward.1} parent=1 // pred_check_branch
      %2682 = sbr.rel (0) target = $region181
    $region180: #{clip_finetuner_forward.1} parent=1 // pred_region
      _
    $region181: #{clip_finetuner_forward.1} parent=1 // pred_fallthru
      _
    // Predicated region
    $region182: #{clip_finetuner_forward.1} parent=1 // pred_check
      _
    $region183: #{clip_finetuner_forward.1} parent=1 // pred_check_branch
      %2684 = sbr.rel (0) target = $region185
    $region184: #{clip_finetuner_forward.1} parent=1 // pred_region
      _
    $region185: #{clip_finetuner_forward.1} parent=1 // pred_fallthru
      _
    %2685 = vsyncpa [#allocation3], 1
    %2686 = vsyncpa [#allocation6], 1
    %2687 = vsyncpa [#allocation9], 1
    %2688 = vsyncpa [#allocation12], 1
    %2689 = vsyncpa [#allocation15], 1
    %2690 = vsyncpa [#allocation18], 1
    %2691 = vsyncpa [#allocation21], 1
    %2692 = vsyncpa [#allocation24], 1
    %2693 = vsyncpa [#allocation4], 1
    %2694 = vsyncpa [#allocation27], 1

</llo_original>
